<compile_context>
chip_gen: v7x
topology: tpu7x:2x2x1
jax: 0.10.0
libtpu: 0.0.40
codegen_flags: <defaults>
</compile_context>

<pallas_src>
import functools

import jax
import jax.numpy as jnp
import numpy as np
from jax import lax
from jax.experimental import pallas as pl
from jax.experimental.pallas import tpu as pltpu


def _mix32(u):
    """murmur3 fmix32 finalizer on uint32 (pure-jnp VPU ops; good avalanche)."""
    u = u ^ (u >> 16)
    u = u * jnp.uint32(0x85EBCA6B)
    u = u ^ (u >> 13)
    u = u * jnp.uint32(0xC2B2AE35)
    u = u ^ (u >> 16)
    return u


def _glu_layer_kernel(x_ref, wa_ref, wb_ref, ga_ref, ba_ref, gb_ref, bb_ref,
                      o_ref, *, output_dim, chunks_per_step,
                      virtual_batch_size, dropout_p, eps, seed):
    # x_ref : (block_cols, input_dim)  -- natural batch-major layout
    # wa/wb : (output_dim, input_dim)  -- GLU "a" / "b" halves of fc.weight
    # ga/ba/gb/bb : (1, output_dim)    -- BN affine params, split the same way
    # o_ref : (block_cols, output_dim)
    vbs = virtual_batch_size
    inv_n = jnp.float32(1.0 / vbs)
    eps_f = jnp.float32(eps)

    # Hoist small operands once (JAX does not CSE broadcast_in_dim / reloads).
    w_a = wa_ref[...]
    w_b = wb_ref[...]
    gamma_a, beta_a = ga_ref[...], ba_ref[...]
    gamma_b, beta_b = gb_ref[...], bb_ref[...]

    use_dropout = dropout_p > 0.0
    if use_dropout:
        keep_scale = jnp.float32(1.0 / (1.0 - dropout_p))
        # keep iff u >= thresh  ->  P(keep) = 1 - p (up to 2^-32)
        thresh = jnp.uint32(min(int(round(dropout_p * (1 << 32))), (1 << 32) - 1))
        seed_mix = jnp.uint32((int(seed) * 0x9E3779B9) & 0xFFFFFFFF)
        # Counter grid hoisted out of the chunk loop; only a scalar offset varies.
        rows = lax.broadcasted_iota(jnp.int32, (vbs, output_dim), 0)
        cols = lax.broadcasted_iota(jnp.int32, (vbs, output_dim), 1)
        pos = rows * output_dim + cols
        step_base = pl.program_id(0) * (chunks_per_step * vbs * output_dim)

    contract_last = (((1,), (1,)), ((), ()))  # X(row, in) . W(out, in)^T

    def batchnorm(h, gamma, beta):
        # Ghost-BN over one 128-row virtual batch: one-pass biased statistics
        # (matches BatchNorm1d train mode); gamma folded into the rsqrt scale.
        s1 = jnp.sum(h, axis=0, keepdims=True)
        s2 = jnp.sum(h * h, axis=0, keepdims=True)
        mean = s1 * inv_n
        var = jnp.maximum(s2 * inv_n - mean * mean, jnp.float32(0.0))
        scale = gamma * lax.rsqrt(var + eps_f)
        return h * scale + (beta - mean * scale)

    def chunk_body(c, carry=0):
        idx = c * vbs
        if not isinstance(idx, int):
            idx = pl.multiple_of(idx, vbs)
        xc = x_ref[pl.ds(idx, vbs), :]                         # (128, in)

        # Bias-free linear on the MXU, f32 accumulation, full f32 precision
        # (extra MXU passes hide entirely under the DMA; kernel is mem-bound).
        h_a = lax.dot_general(xc, w_a, contract_last,
                              preferred_element_type=jnp.float32,
                              precision=lax.Precision.HIGHEST)  # (128, out)
        h_b = lax.dot_general(xc, w_b, contract_last,
                              preferred_element_type=jnp.float32,
                              precision=lax.Precision.HIGHEST)

        a = batchnorm(h_a, gamma_a, beta_a)
        b = batchnorm(h_b, gamma_b, beta_b)
        # GLU: a * sigmoid(b); tanh form keeps it a single EUP transcendental.
        y = a * (jnp.float32(0.5) * jnp.tanh(jnp.float32(0.5) * b) + jnp.float32(0.5))

        if use_dropout:
            # Counter-based PRNG keyed on the global (row, feature) position.
            gid = pos + (step_base + c * (vbs * output_dim))
            u = _mix32(gid.astype(jnp.uint32) + seed_mix)
            y = jnp.where(u >= thresh, y * keep_scale, jnp.float32(0.0))

        o_ref[pl.ds(idx, vbs), :] = y.astype(o_ref.dtype)
        return carry

    if chunks_per_step <= 8:
        # Small, static trip count: full unroll (live set per chunk is tiny).
        for c in range(chunks_per_step):
            chunk_body(c)
    else:
        # Large chunk counts: bound vreg live ranges with a real loop.
        lax.fori_loop(0, chunks_per_step, chunk_body, 0, unroll=2)


def _pick_chunks_per_step(n_chunks, cap, min_grid_steps=2):
    """Virtual batches per grid step; returns (chunks_per_step, needs_pad)."""
    cap = max(1, min(cap, n_chunks))
    divisors = [d for d in range(1, cap + 1) if n_chunks % d == 0]
    good = [d for d in divisors if n_chunks // d >= min_grid_steps]
    best_div = max(good) if good else max(divisors)
    if 2 * best_div >= cap:
        # An exact divisor uses at least half the budget: no padding needed.
        return best_div, False
    # n_chunks factors badly (e.g. prime): pad the batch so tiles stay fat
    # instead of silently degrading to 128-lane tiles.
    steps = max(min_grid_steps, -(-n_chunks // cap))
    cps = -(-n_chunks // steps)
    return cps, (n_chunks % cps != 0)


def glu_layer_forward(x, w, gamma, beta, *, output_dim, dropout_p,
                      virtual_batch_size=128, eps=1e-5, seed=42,
                      max_chunks_per_step=32, min_grid_steps=2,
                      vmem_limit_bytes=32 * 1024 * 1024):
    """x: (B, input_dim); w: torch fc.weight layout (2*output_dim, input_dim);
    gamma/beta: (2*output_dim,). Returns (B, output_dim)."""
    B, input_dim = x.shape
    two_out, w_in = w.shape
    assert two_out == 2 * output_dim and w_in == input_dim
    # TODO(synk): ragged last virtual batch (B % 128 != 0) and the BN
    # running-stat (momentum) update are not reproduced; the train-mode forward
    # output does not depend on either.
    assert B % virtual_batch_size == 0, "B must be a multiple of virtual_batch_size"
    n_chunks = B // virtual_batch_size

    # Size the per-step tile from the VMEM budget (X tile + out tile are
    # double-buffered by the BlockSpec pipeline; W / affine params are tiny).
    itemsize = jnp.dtype(x.dtype).itemsize
    bytes_per_col = itemsize * 2 * (input_dim + output_dim)
    budget_cols = max(virtual_batch_size,
                      (vmem_limit_bytes // 2) // max(1, bytes_per_col))
    cap = max(1, min(max_chunks_per_step, budget_cols // virtual_batch_size))
    chunks_per_step, needs_pad = _pick_chunks_per_step(
        n_chunks, cap, min_grid_steps)
    block_cols = chunks_per_step * virtual_batch_size

    x_in = x
    padded_B = B
    if needs_pad:
        n_steps = -(-n_chunks // chunks_per_step)
        padded_B = n_steps * block_cols
        # One extra pass over X; only taken when n_chunks has no usable divisor.
        x_in = jnp.pad(x, ((0, padded_B - B), (0, 0)))
    n_steps = padded_B // block_cols

    # Split fc.weight / BN affine params into the GLU "a" and "b" halves so the
    # kernel never slices the feature axis (works for any output_dim).
    w_a = w[:output_dim]
    w_b = w[output_dim:]
    g_a = gamma[:output_dim].reshape(1, output_dim).astype(jnp.float32)
    b_a = beta[:output_dim].reshape(1, output_dim).astype(jnp.float32)
    g_b = gamma[output_dim:].reshape(1, output_dim).astype(jnp.float32)
    b_b = beta[output_dim:].reshape(1, output_dim).astype(jnp.float32)

    kernel = functools.partial(
        _glu_layer_kernel,
        output_dim=output_dim, chunks_per_step=chunks_per_step,
        virtual_batch_size=virtual_batch_size,
        dropout_p=float(dropout_p), eps=float(eps), seed=int(seed))

    def _const(shape):
        return pl.BlockSpec(shape, lambda i: (0, 0))

    y = pl.pallas_call(
        kernel,
        out_shape=jax.ShapeDtypeStruct((padded_B, output_dim), x.dtype),
        grid=(n_steps,),
        in_specs=[
            pl.BlockSpec((block_cols, input_dim), lambda i: (i, 0)),  # X tile
            _const((output_dim, input_dim)),                          # W_a
            _const((output_dim, input_dim)),                          # W_b
            _const((1, output_dim)),                                  # gamma_a
            _const((1, output_dim)),                                  # beta_a
            _const((1, output_dim)),                                  # gamma_b
            _const((1, output_dim)),                                  # beta_b
        ],
        out_specs=pl.BlockSpec((block_cols, output_dim), lambda i: (i, 0)),
        compiler_params=pltpu.CompilerParams(
            dimension_semantics=("parallel",),
            vmem_limit_bytes=int(vmem_limit_bytes)),
    )(x_in, w_a, w_b, g_a, b_a, g_b, b_b)

    return y[:B] if needs_pad else y


if __name__ == "__main__":
    key = jax.random.PRNGKey(0)
    k_x, k_w = jax.random.split(key)

    B = 512                  # 4 ghost-BN virtual batches -> 2 grid steps x 2 chunks
    input_dim = 32
    output_dim = 16
    dropout_p = 0.1
    virtual_batch_size = 128
    fan_in, fan_out = input_dim, 2 * output_dim

    # Deterministic xavier_normal init of fc.weight (torch layout: (2*out, in)).
    gain = np.sqrt((input_dim + fan_out) / np.sqrt(input_dim))
    std = gain * np.sqrt(2.0 / (fan_in + fan_out))
    w = jax.random.normal(k_w, (fan_out, input_dim), jnp.float32) * std

    # BatchNorm affine params at init.
    gamma = jnp.ones((fan_out,), jnp.float32)
    beta = jnp.zeros((fan_out,), jnp.float32)

    x = jax.random.normal(k_x, (B, input_dim), jnp.float32)

    # Deterministic reference (dropout off) for a numerical sanity check.
    def reference_no_dropout(x, w, gamma, beta):
        h = jnp.matmul(x, w.T, precision=lax.Precision.HIGHEST)
        h = h.reshape(B // virtual_batch_size, virtual_batch_size, fan_out)
        mean = h.mean(axis=1, keepdims=True)
        var = ((h - mean) ** 2).mean(axis=1, keepdims=True)
        h = (h - mean) / jnp.sqrt(var + 1e-5) * gamma + beta
        h = h.reshape(B, fan_out)
        a, b = h[:, :output_dim], h[:, output_dim:]
        return a * jax.nn.sigmoid(b)

    out_nodrop = glu_layer_forward(
        x, w, gamma, beta, output_dim=output_dim, dropout_p=0.0,
        virtual_batch_size=virtual_batch_size)
    ref = reference_no_dropout(x, w, gamma, beta)
    np.testing.assert_allclose(np.asarray(out_nodrop), np.asarray(ref),
                               rtol=1e-3, atol=1e-3)

    out = glu_layer_forward(
        x, w, gamma, beta, output_dim=output_dim, dropout_p=dropout_p,
        virtual_batch_size=virtual_batch_size)
    out = jax.block_until_ready(out)
    assert out.shape == (B, output_dim)
    assert bool(jnp.all(jnp.isfinite(out)))
    keep_frac = float(jnp.mean((out != 0).astype(jnp.float32)))
    assert (1.0 - dropout_p - 0.05) < keep_frac < (1.0 - dropout_p + 0.05)
    print("KERNEL_OK")
</pallas_src>

<mosaic_0001>
module attributes {stable_mosaic.version = 11 : i64} {
  func.func @_glu_layer_kernel(%arg0: i32, %arg1: memref<256x32xf32, #tpu.memory_space<vmem>>, %arg2: memref<16x32xf32, #tpu.memory_space<vmem>>, %arg3: memref<16x32xf32, #tpu.memory_space<vmem>>, %arg4: memref<1x16xf32, #tpu.memory_space<vmem>>, %arg5: memref<1x16xf32, #tpu.memory_space<vmem>>, %arg6: memref<1x16xf32, #tpu.memory_space<vmem>>, %arg7: memref<1x16xf32, #tpu.memory_space<vmem>>, %arg8: memref<256x16xf32, #tpu.memory_space<vmem>>) attributes {dimension_semantics = [#tpu.dimension_semantics<parallel>], iteration_bounds = array<i64: 2>, scalar_prefetch = 0 : i64, scratch_operands = 0 : i64, tpu.core_type = #tpu.core_type<tc>, window_params = [{transform_indices = @transform_0, window_bounds = array<i64: 256, 32>}, {pipeline_mode = #tpu.pipeline_mode<synchronous>, transform_indices = @transform_1, window_bounds = array<i64: 16, 32>}, {pipeline_mode = #tpu.pipeline_mode<synchronous>, transform_indices = @transform_2, window_bounds = array<i64: 16, 32>}, {pipeline_mode = #tpu.pipeline_mode<synchronous>, transform_indices = @transform_3, window_bounds = array<i64: 1, 16>}, {pipeline_mode = #tpu.pipeline_mode<synchronous>, transform_indices = @transform_4, window_bounds = array<i64: 1, 16>}, {pipeline_mode = #tpu.pipeline_mode<synchronous>, transform_indices = @transform_5, window_bounds = array<i64: 1, 16>}, {pipeline_mode = #tpu.pipeline_mode<synchronous>, transform_indices = @transform_6, window_bounds = array<i64: 1, 16>}, {transform_indices = @transform_7, window_bounds = array<i64: 256, 16>}]} {
    %c0 = arith.constant 0 : index
    %c0_0 = arith.constant 0 : index
    %0 = vector.load %arg2[%c0, %c0_0] : memref<16x32xf32, #tpu.memory_space<vmem>>, vector<16x32xf32>
    %c0_1 = arith.constant 0 : index
    %c0_2 = arith.constant 0 : index
    %1 = vector.load %arg3[%c0_1, %c0_2] : memref<16x32xf32, #tpu.memory_space<vmem>>, vector<16x32xf32>
    %c0_3 = arith.constant 0 : index
    %c0_4 = arith.constant 0 : index
    %2 = vector.load %arg4[%c0_3, %c0_4] : memref<1x16xf32, #tpu.memory_space<vmem>>, vector<1x16xf32>
    %c0_5 = arith.constant 0 : index
    %c0_6 = arith.constant 0 : index
    %3 = vector.load %arg5[%c0_5, %c0_6] : memref<1x16xf32, #tpu.memory_space<vmem>>, vector<1x16xf32>
    %c0_7 = arith.constant 0 : index
    %c0_8 = arith.constant 0 : index
    %4 = vector.load %arg6[%c0_7, %c0_8] : memref<1x16xf32, #tpu.memory_space<vmem>>, vector<1x16xf32>
    %c0_9 = arith.constant 0 : index
    %c0_10 = arith.constant 0 : index
    %5 = vector.load %arg7[%c0_9, %c0_10] : memref<1x16xf32, #tpu.memory_space<vmem>>, vector<1x16xf32>
    %c0_11 = arith.constant 0 : index
    %c0_12 = arith.constant 0 : index
    %6 = vector.load %arg1[%c0_11, %c0_12] : memref<256x32xf32, #tpu.memory_space<vmem>>, vector<128x32xf32>
    %cst = arith.constant dense<0.000000e+00> : vector<128x16xf32>
    %7 = tpu.matmul %6, %0, %cst {dimension_numbers = #tpu.dot_dimension_numbers<[1], [1], [0], [0], [0, 0, 1, 0], [], []>, precision = #tpu.contract_precision<fp32>} : vector<128x32xf32>, vector<16x32xf32>, vector<128x16xf32> -> vector<128x16xf32>
    %cst_13 = arith.constant dense<0.000000e+00> : vector<128x16xf32>
    %8 = tpu.matmul %6, %1, %cst_13 {dimension_numbers = #tpu.dot_dimension_numbers<[1], [1], [0], [0], [0, 0, 1, 0], [], []>, precision = #tpu.contract_precision<fp32>} : vector<128x32xf32>, vector<16x32xf32>, vector<128x16xf32> -> vector<128x16xf32>
    %cst_14 = arith.constant dense<0.000000e+00> : vector<16xf32>
    %9 = vector.multi_reduction <add>, %7, %cst_14 [0] : vector<128x16xf32> to vector<16xf32>
    %10 = vector.shape_cast %9 : vector<16xf32> to vector<1x16xf32>
    %11 = arith.mulf %7, %7 : vector<128x16xf32>
    %cst_15 = arith.constant dense<0.000000e+00> : vector<16xf32>
    %12 = vector.multi_reduction <add>, %11, %cst_15 [0] : vector<128x16xf32> to vector<16xf32>
    %13 = vector.shape_cast %12 : vector<16xf32> to vector<1x16xf32>
    %cst_16 = arith.constant 7.812500e-03 : f32
    %14 = vector.broadcast %cst_16 : f32 to vector<1x16xf32>
    %15 = arith.mulf %10, %14 : vector<1x16xf32>
    %cst_17 = arith.constant 7.812500e-03 : f32
    %16 = vector.broadcast %cst_17 : f32 to vector<1x16xf32>
    %17 = arith.mulf %13, %16 : vector<1x16xf32>
    %18 = arith.mulf %15, %15 : vector<1x16xf32>
    %19 = arith.subf %17, %18 : vector<1x16xf32>
    %cst_18 = arith.constant 0.000000e+00 : f32
    %20 = vector.broadcast %cst_18 : f32 to vector<1x16xf32>
    %21 = arith.maximumf %19, %20 : vector<1x16xf32>
    %cst_19 = arith.constant 9.99999974E-6 : f32
    %22 = vector.broadcast %cst_19 : f32 to vector<1x16xf32>
    %23 = arith.addf %21, %22 : vector<1x16xf32>
    %24 = math.rsqrt %23 : vector<1x16xf32>
    %25 = arith.mulf %2, %24 : vector<1x16xf32>
    %26 = vector.broadcast %25 : vector<1x16xf32> to vector<128x16xf32>
    %27 = arith.mulf %7, %26 : vector<128x16xf32>
    %28 = arith.mulf %15, %25 : vector<1x16xf32>
    %29 = arith.subf %3, %28 : vector<1x16xf32>
    %30 = vector.broadcast %29 : vector<1x16xf32> to vector<128x16xf32>
    %31 = arith.addf %27, %30 : vector<128x16xf32>
    %cst_20 = arith.constant dense<0.000000e+00> : vector<16xf32>
    %32 = vector.multi_reduction <add>, %8, %cst_20 [0] : vector<128x16xf32> to vector<16xf32>
    %33 = vector.shape_cast %32 : vector<16xf32> to vector<1x16xf32>
    %34 = arith.mulf %8, %8 : vector<128x16xf32>
    %cst_21 = arith.constant dense<0.000000e+00> : vector<16xf32>
    %35 = vector.multi_reduction <add>, %34, %cst_21 [0] : vector<128x16xf32> to vector<16xf32>
    %36 = vector.shape_cast %35 : vector<16xf32> to vector<1x16xf32>
    %cst_22 = arith.constant 7.812500e-03 : f32
    %37 = vector.broadcast %cst_22 : f32 to vector<1x16xf32>
    %38 = arith.mulf %33, %37 : vector<1x16xf32>
    %cst_23 = arith.constant 7.812500e-03 : f32
    %39 = vector.broadcast %cst_23 : f32 to vector<1x16xf32>
    %40 = arith.mulf %36, %39 : vector<1x16xf32>
    %41 = arith.mulf %38, %38 : vector<1x16xf32>
    %42 = arith.subf %40, %41 : vector<1x16xf32>
    %cst_24 = arith.constant 0.000000e+00 : f32
    %43 = vector.broadcast %cst_24 : f32 to vector<1x16xf32>
    %44 = arith.maximumf %42, %43 : vector<1x16xf32>
    %cst_25 = arith.constant 9.99999974E-6 : f32
    %45 = vector.broadcast %cst_25 : f32 to vector<1x16xf32>
    %46 = arith.addf %44, %45 : vector<1x16xf32>
    %47 = math.rsqrt %46 : vector<1x16xf32>
    %48 = arith.mulf %4, %47 : vector<1x16xf32>
    %49 = vector.broadcast %48 : vector<1x16xf32> to vector<128x16xf32>
    %50 = arith.mulf %8, %49 : vector<128x16xf32>
    %51 = arith.mulf %38, %48 : vector<1x16xf32>
    %52 = arith.subf %5, %51 : vector<1x16xf32>
    %53 = vector.broadcast %52 : vector<1x16xf32> to vector<128x16xf32>
    %54 = arith.addf %50, %53 : vector<128x16xf32>
    %cst_26 = arith.constant 5.000000e-01 : f32
    %55 = vector.broadcast %cst_26 : f32 to vector<128x16xf32>
    %56 = arith.mulf %55, %54 : vector<128x16xf32>
    %57 = math.tanh %56 : vector<128x16xf32>
    %cst_27 = arith.constant 5.000000e-01 : f32
    %58 = vector.broadcast %cst_27 : f32 to vector<128x16xf32>
    %59 = arith.mulf %58, %57 : vector<128x16xf32>
    %cst_28 = arith.constant 5.000000e-01 : f32
    %60 = vector.broadcast %cst_28 : f32 to vector<128x16xf32>
    %61 = arith.addf %59, %60 : vector<128x16xf32>
    %62 = arith.mulf %31, %61 : vector<128x16xf32>
    %c0_29 = arith.constant 0 : index
    %c0_30 = arith.constant 0 : index
    %63 = vector.load %arg8[%c0_29, %c0_30] : memref<256x16xf32, #tpu.memory_space<vmem>>, vector<128x16xf32>
    tpu.vector_store %arg8[%c0_29, %c0_30], %62 {strides = array<i32>} : memref<256x16xf32, #tpu.memory_space<vmem>>, vector<128x16xf32>,
    %c128 = arith.constant 128 : index
    %c0_31 = arith.constant 0 : index
    %64 = vector.load %arg1[%c128, %c0_31] : memref<256x32xf32, #tpu.memory_space<vmem>>, vector<128x32xf32>
    %cst_32 = arith.constant dense<0.000000e+00> : vector<128x16xf32>
    %65 = tpu.matmul %64, %0, %cst_32 {dimension_numbers = #tpu.dot_dimension_numbers<[1], [1], [0], [0], [0, 0, 1, 0], [], []>, precision = #tpu.contract_precision<fp32>} : vector<128x32xf32>, vector<16x32xf32>, vector<128x16xf32> -> vector<128x16xf32>
    %cst_33 = arith.constant dense<0.000000e+00> : vector<128x16xf32>
    %66 = tpu.matmul %64, %1, %cst_33 {dimension_numbers = #tpu.dot_dimension_numbers<[1], [1], [0], [0], [0, 0, 1, 0], [], []>, precision = #tpu.contract_precision<fp32>} : vector<128x32xf32>, vector<16x32xf32>, vector<128x16xf32> -> vector<128x16xf32>
    %cst_34 = arith.constant dense<0.000000e+00> : vector<16xf32>
    %67 = vector.multi_reduction <add>, %65, %cst_34 [0] : vector<128x16xf32> to vector<16xf32>
    %68 = vector.shape_cast %67 : vector<16xf32> to vector<1x16xf32>
    %69 = arith.mulf %65, %65 : vector<128x16xf32>
    %cst_35 = arith.constant dense<0.000000e+00> : vector<16xf32>
    %70 = vector.multi_reduction <add>, %69, %cst_35 [0] : vector<128x16xf32> to vector<16xf32>
    %71 = vector.shape_cast %70 : vector<16xf32> to vector<1x16xf32>
    %cst_36 = arith.constant 7.812500e-03 : f32
    %72 = vector.broadcast %cst_36 : f32 to vector<1x16xf32>
    %73 = arith.mulf %68, %72 : vector<1x16xf32>
    %cst_37 = arith.constant 7.812500e-03 : f32
    %74 = vector.broadcast %cst_37 : f32 to vector<1x16xf32>
    %75 = arith.mulf %71, %74 : vector<1x16xf32>
    %76 = arith.mulf %73, %73 : vector<1x16xf32>
    %77 = arith.subf %75, %76 : vector<1x16xf32>
    %cst_38 = arith.constant 0.000000e+00 : f32
    %78 = vector.broadcast %cst_38 : f32 to vector<1x16xf32>
    %79 = arith.maximumf %77, %78 : vector<1x16xf32>
    %cst_39 = arith.constant 9.99999974E-6 : f32
    %80 = vector.broadcast %cst_39 : f32 to vector<1x16xf32>
    %81 = arith.addf %79, %80 : vector<1x16xf32>
    %82 = math.rsqrt %81 : vector<1x16xf32>
    %83 = arith.mulf %2, %82 : vector<1x16xf32>
    %84 = vector.broadcast %83 : vector<1x16xf32> to vector<128x16xf32>
    %85 = arith.mulf %65, %84 : vector<128x16xf32>
    %86 = arith.mulf %73, %83 : vector<1x16xf32>
    %87 = arith.subf %3, %86 : vector<1x16xf32>
    %88 = vector.broadcast %87 : vector<1x16xf32> to vector<128x16xf32>
    %89 = arith.addf %85, %88 : vector<128x16xf32>
    %cst_40 = arith.constant dense<0.000000e+00> : vector<16xf32>
    %90 = vector.multi_reduction <add>, %66, %cst_40 [0] : vector<128x16xf32> to vector<16xf32>
    %91 = vector.shape_cast %90 : vector<16xf32> to vector<1x16xf32>
    %92 = arith.mulf %66, %66 : vector<128x16xf32>
    %cst_41 = arith.constant dense<0.000000e+00> : vector<16xf32>
    %93 = vector.multi_reduction <add>, %92, %cst_41 [0] : vector<128x16xf32> to vector<16xf32>
    %94 = vector.shape_cast %93 : vector<16xf32> to vector<1x16xf32>
    %cst_42 = arith.constant 7.812500e-03 : f32
    %95 = vector.broadcast %cst_42 : f32 to vector<1x16xf32>
    %96 = arith.mulf %91, %95 : vector<1x16xf32>
    %cst_43 = arith.constant 7.812500e-03 : f32
    %97 = vector.broadcast %cst_43 : f32 to vector<1x16xf32>
    %98 = arith.mulf %94, %97 : vector<1x16xf32>
    %99 = arith.mulf %96, %96 : vector<1x16xf32>
    %100 = arith.subf %98, %99 : vector<1x16xf32>
    %cst_44 = arith.constant 0.000000e+00 : f32
    %101 = vector.broadcast %cst_44 : f32 to vector<1x16xf32>
    %102 = arith.maximumf %100, %101 : vector<1x16xf32>
    %cst_45 = arith.constant 9.99999974E-6 : f32
    %103 = vector.broadcast %cst_45 : f32 to vector<1x16xf32>
    %104 = arith.addf %102, %103 : vector<1x16xf32>
    %105 = math.rsqrt %104 : vector<1x16xf32>
    %106 = arith.mulf %4, %105 : vector<1x16xf32>
    %107 = vector.broadcast %106 : vector<1x16xf32> to vector<128x16xf32>
    %108 = arith.mulf %66, %107 : vector<128x16xf32>
    %109 = arith.mulf %96, %106 : vector<1x16xf32>
    %110 = arith.subf %5, %109 : vector<1x16xf32>
    %111 = vector.broadcast %110 : vector<1x16xf32> to vector<128x16xf32>
    %112 = arith.addf %108, %111 : vector<128x16xf32>
    %cst_46 = arith.constant 5.000000e-01 : f32
    %113 = vector.broadcast %cst_46 : f32 to vector<128x16xf32>
    %114 = arith.mulf %113, %112 : vector<128x16xf32>
    %115 = math.tanh %114 : vector<128x16xf32>
    %cst_47 = arith.constant 5.000000e-01 : f32
    %116 = vector.broadcast %cst_47 : f32 to vector<128x16xf32>
    %117 = arith.mulf %116, %115 : vector<128x16xf32>
    %cst_48 = arith.constant 5.000000e-01 : f32
    %118 = vector.broadcast %cst_48 : f32 to vector<128x16xf32>
    %119 = arith.addf %117, %118 : vector<128x16xf32>
    %120 = arith.mulf %89, %119 : vector<128x16xf32>
    %c128_49 = arith.constant 128 : index
    %c0_50 = arith.constant 0 : index
    %121 = vector.load %arg8[%c128_49, %c0_50] : memref<256x16xf32, #tpu.memory_space<vmem>>, vector<128x16xf32>
    tpu.vector_store %arg8[%c128_49, %c0_50], %120 {strides = array<i32>} : memref<256x16xf32, #tpu.memory_space<vmem>>, vector<128x16xf32>,
    return
  }
  func.func @transform_0(%arg0: i32) -> (i32, i32) {
    %c0_i32 = arith.constant 0 : i32
    %c0_i32_0 = arith.constant 0 : i32
    return %arg0, %c0_i32 : i32, i32
  }
  func.func @transform_1(%arg0: i32) -> (i32, i32) {
    %c0_i32 = arith.constant 0 : i32
    %c0_i32_0 = arith.constant 0 : i32
    %c0_i32_1 = arith.constant 0 : i32
    return %c0_i32, %c0_i32_0 : i32, i32
  }
  func.func @transform_2(%arg0: i32) -> (i32, i32) {
    %c0_i32 = arith.constant 0 : i32
    %c0_i32_0 = arith.constant 0 : i32
    %c0_i32_1 = arith.constant 0 : i32
    return %c0_i32, %c0_i32_0 : i32, i32
  }
  func.func @transform_3(%arg0: i32) -> (i32, i32) {
    %c0_i32 = arith.constant 0 : i32
    %c0_i32_0 = arith.constant 0 : i32
    %c0_i32_1 = arith.constant 0 : i32
    return %c0_i32, %c0_i32_0 : i32, i32
  }
  func.func @transform_4(%arg0: i32) -> (i32, i32) {
    %c0_i32 = arith.constant 0 : i32
    %c0_i32_0 = arith.constant 0 : i32
    %c0_i32_1 = arith.constant 0 : i32
    return %c0_i32, %c0_i32_0 : i32, i32
  }
  func.func @transform_5(%arg0: i32) -> (i32, i32) {
    %c0_i32 = arith.constant 0 : i32
    %c0_i32_0 = arith.constant 0 : i32
    %c0_i32_1 = arith.constant 0 : i32
    return %c0_i32, %c0_i32_0 : i32, i32
  }
  func.func @transform_6(%arg0: i32) -> (i32, i32) {
    %c0_i32 = arith.constant 0 : i32
    %c0_i32_0 = arith.constant 0 : i32
    %c0_i32_1 = arith.constant 0 : i32
    return %c0_i32, %c0_i32_0 : i32, i32
  }
  func.func @transform_7(%arg0: i32) -> (i32, i32) {
    %c0_i32 = arith.constant 0 : i32
    %c0_i32_0 = arith.constant 0 : i32
    return %arg0, %c0_i32 : i32, i32
  }
}

</mosaic_0001>

<llo_original>
// kernel: tpu_custom_call.1
$region0: #{tpu_custom_call.1}
  #allocation0 [shape = 'u32[]', space=smem, size = 0x4, offset = 0x4, fixed_abs, tag = 'smem constant byte address 0x4 - core index']
  #allocation1 [shape = 'u32[144,128]{1,0:T(1,128)}', space=vmem, size = 0x12000, scoped, tag = 'internal scratch']
  %s0 = inlined_call_operand.vmem [shape: f32[512,32], index: 0, kind: input, shape index: {}]
  %s1 = inlined_call_operand.vmem [shape: f32[16,32], index: 1, kind: input, shape index: {}]
  %s2 = inlined_call_operand.vmem [shape: f32[16,32], index: 2, kind: input, shape index: {}]
  %s3 = inlined_call_operand.vmem [shape: f32[1,16], index: 3, kind: input, shape index: {}]
  %s4 = inlined_call_operand.vmem [shape: f32[1,16], index: 4, kind: input, shape index: {}]
  %s5 = inlined_call_operand.vmem [shape: f32[1,16], index: 5, kind: input, shape index: {}]
  %s6 = inlined_call_operand.vmem [shape: f32[1,16], index: 6, kind: input, shape index: {}]
  %s7 = inlined_call_operand.vmem [shape: f32[512,16], index: 7, kind: output, shape index: {}]
  %s8 = sld [smem:[#allocation0]]
  $region61: #{tpu_custom_call.1} parent=0
    _
  %s10 = ssub.s32 1, %s8
  %s11 = scalar_select 0, %s10, %s8
  loop: start=0, step=1, limit=4
  $region2: #{tpu_custom_call.1} parent=0 // loop_pre_header
    _
  $region3: #{tpu_custom_call.1} parent=0 // loop_header
    %s13 = sphi 0, %s17
    %p14 = scmp.ge.s32.totalorder %s13, 4
    %s23 = sphi 0, %s25
    %s26 = sphi 0, %s23
    %s27 = sphi 0, %s26
    %s43 = sphi 0, %s27
    %s47 = sphi 0, %s47
    %s49 = sphi 0, %s47
    %s50 = sphi 0, %s49
    %s64 = sphi 0, %s50
    %s68 = sphi 0, %s68
    %s70 = sphi 0, %s68
    %s71 = sphi 0, %s70
    %s85 = sphi 0, %s71
    %s89 = sphi 0, %s89
    %s91 = sphi 0, %s89
    %s92 = sphi 0, %s91
    %s106 = sphi 0, %s92
    %s110 = sphi 0, %s110
    %s112 = sphi 0, %s110
    %s113 = sphi 0, %s112
    %s127 = sphi 0, %s113
    %s131 = sphi 0, %s131
    %s133 = sphi 0, %s131
    %s134 = sphi 0, %s133
    %s148 = sphi 0, %s134
    %s152 = sphi 0, %s152
    %s154 = sphi 0, %s152
    %s155 = sphi 0, %s154
    %s169 = sphi 0, %s155
    %s175 = sphi 0, %s177
    %s178 = sphi 0, %s175
    %s179 = sphi 0, %s178
    %s195 = sphi 0, %s179
  $region4: #{tpu_custom_call.1} parent=0 // loop_header_branch
    %16 = sbr.rel (%p14) target = $region8
  $region5: #{tpu_custom_call.1} parent=0 // loop_body
    %s18 = ssub.s32 %s13, 1
    %s19 = ssub.s32 %s13, 2
    %s20 = sadd.s32 %s13, 1
    %s21 = ssub.s32 %s13, %s20
    %p22 = scmp.eq.s32.totalorder %s21, 0
    %s24 = sadd.s32 %s23, 1
    %s25 = scalar_select %p22, %s23, %s24
    %p28 = pneg %p22
    %p29 = scmp.eq.s32.totalorder %s13, 1
    %p30 = por %p28, %p29
    %p31 = scmp.ne.s32.totalorder %s23, %s26
    %p32 = scmp.eq.s32.totalorder %s13, 0
    %p33 = por %p31, %p32
    %p34 = scmp.ne.s32.totalorder %s23, %s26
    %p35 = scmp.eq.s32.totalorder %s18, 1
    %p36 = por %p34, %p35
    %p37 = scmp.ne.s32.totalorder %s26, %s27
    %p38 = scmp.eq.s32.totalorder %s18, 0
    %p39 = por %p37, %p38
    %p40 = scmp.ne.s32.totalorder %s26, %s27
    %p41 = scmp.eq.s32.totalorder %s19, 1
    %p42 = por %p40, %p41
    %p44 = scmp.ne.s32.totalorder %s27, %s43
    %p45 = scmp.eq.s32.totalorder %s19, 0
    %p46 = por %p44, %p45
    %s48 = sadd.s32 %s47, 1
    %p51 = scmp.eq.s32.totalorder %s13, 1
    %p52 = scmp.ne.s32.totalorder %s47, %s49
    %p53 = scmp.eq.s32.totalorder %s13, 0
    %p54 = por %p52, %p53
    %p55 = scmp.ne.s32.totalorder %s47, %s49
    %p56 = scmp.eq.s32.totalorder %s18, 1
    %p57 = por %p55, %p56
    %p58 = scmp.ne.s32.totalorder %s49, %s50
    %p59 = scmp.eq.s32.totalorder %s18, 0
    %p60 = por %p58, %p59
    %p61 = scmp.ne.s32.totalorder %s49, %s50
    %p62 = scmp.eq.s32.totalorder %s19, 1
    %p63 = por %p61, %p62
    %p65 = scmp.ne.s32.totalorder %s50, %s64
    %p66 = scmp.eq.s32.totalorder %s19, 0
    %p67 = por %p65, %p66
    %s69 = sadd.s32 %s68, 1
    %p72 = scmp.eq.s32.totalorder %s13, 1
    %p73 = scmp.ne.s32.totalorder %s68, %s70
    %p74 = scmp.eq.s32.totalorder %s13, 0
    %p75 = por %p73, %p74
    %p76 = scmp.ne.s32.totalorder %s68, %s70
    %p77 = scmp.eq.s32.totalorder %s18, 1
    %p78 = por %p76, %p77
    %p79 = scmp.ne.s32.totalorder %s70, %s71
    %p80 = scmp.eq.s32.totalorder %s18, 0
    %p81 = por %p79, %p80
    %p82 = scmp.ne.s32.totalorder %s70, %s71
    %p83 = scmp.eq.s32.totalorder %s19, 1
    %p84 = por %p82, %p83
    %p86 = scmp.ne.s32.totalorder %s71, %s85
    %p87 = scmp.eq.s32.totalorder %s19, 0
    %p88 = por %p86, %p87
    %s90 = sadd.s32 %s89, 1
    %p93 = scmp.eq.s32.totalorder %s13, 1
    %p94 = scmp.ne.s32.totalorder %s89, %s91
    %p95 = scmp.eq.s32.totalorder %s13, 0
    %p96 = por %p94, %p95
    %p97 = scmp.ne.s32.totalorder %s89, %s91
    %p98 = scmp.eq.s32.totalorder %s18, 1
    %p99 = por %p97, %p98
    %p100 = scmp.ne.s32.totalorder %s91, %s92
    %p101 = scmp.eq.s32.totalorder %s18, 0
    %p102 = por %p100, %p101
    %p103 = scmp.ne.s32.totalorder %s91, %s92
    %p104 = scmp.eq.s32.totalorder %s19, 1
    %p105 = por %p103, %p104
    %p107 = scmp.ne.s32.totalorder %s92, %s106
    %p108 = scmp.eq.s32.totalorder %s19, 0
    %p109 = por %p107, %p108
    %s111 = sadd.s32 %s110, 1
    %p114 = scmp.eq.s32.totalorder %s13, 1
    %p115 = scmp.ne.s32.totalorder %s110, %s112
    %p116 = scmp.eq.s32.totalorder %s13, 0
    %p117 = por %p115, %p116
    %p118 = scmp.ne.s32.totalorder %s110, %s112
    %p119 = scmp.eq.s32.totalorder %s18, 1
    %p120 = por %p118, %p119
    %p121 = scmp.ne.s32.totalorder %s112, %s113
    %p122 = scmp.eq.s32.totalorder %s18, 0
    %p123 = por %p121, %p122
    %p124 = scmp.ne.s32.totalorder %s112, %s113
    %p125 = scmp.eq.s32.totalorder %s19, 1
    %p126 = por %p124, %p125
    %p128 = scmp.ne.s32.totalorder %s113, %s127
    %p129 = scmp.eq.s32.totalorder %s19, 0
    %p130 = por %p128, %p129
    %s132 = sadd.s32 %s131, 1
    %p135 = scmp.eq.s32.totalorder %s13, 1
    %p136 = scmp.ne.s32.totalorder %s131, %s133
    %p137 = scmp.eq.s32.totalorder %s13, 0
    %p138 = por %p136, %p137
    %p139 = scmp.ne.s32.totalorder %s131, %s133
    %p140 = scmp.eq.s32.totalorder %s18, 1
    %p141 = por %p139, %p140
    %p142 = scmp.ne.s32.totalorder %s133, %s134
    %p143 = scmp.eq.s32.totalorder %s18, 0
    %p144 = por %p142, %p143
    %p145 = scmp.ne.s32.totalorder %s133, %s134
    %p146 = scmp.eq.s32.totalorder %s19, 1
    %p147 = por %p145, %p146
    %p149 = scmp.ne.s32.totalorder %s134, %s148
    %p150 = scmp.eq.s32.totalorder %s19, 0
    %p151 = por %p149, %p150
    %s153 = sadd.s32 %s152, 1
    %p156 = scmp.eq.s32.totalorder %s13, 1
    %p157 = scmp.ne.s32.totalorder %s152, %s154
    %p158 = scmp.eq.s32.totalorder %s13, 0
    %p159 = por %p157, %p158
    %p160 = scmp.ne.s32.totalorder %s152, %s154
    %p161 = scmp.eq.s32.totalorder %s18, 1
    %p162 = por %p160, %p161
    %p163 = scmp.ne.s32.totalorder %s154, %s155
    %p164 = scmp.eq.s32.totalorder %s18, 0
    %p165 = por %p163, %p164
    %p166 = scmp.ne.s32.totalorder %s154, %s155
    %p167 = scmp.eq.s32.totalorder %s19, 1
    %p168 = por %p166, %p167
    %p170 = scmp.ne.s32.totalorder %s155, %s169
    %p171 = scmp.eq.s32.totalorder %s19, 0
    %p172 = por %p170, %p171
    %s173 = ssub.s32 %s13, %s20
    %p174 = scmp.eq.s32.totalorder %s173, 0
    %s176 = sadd.s32 %s175, 1
    %s177 = scalar_select %p174, %s175, %s176
    %p180 = pneg %p174
    %p181 = scmp.eq.s32.totalorder %s13, 1
    %p182 = por %p180, %p181
    %p183 = scmp.ne.s32.totalorder %s175, %s178
    %p184 = scmp.eq.s32.totalorder %s13, 0
    %p185 = por %p183, %p184
    %p186 = scmp.ne.s32.totalorder %s175, %s178
    %p187 = scmp.eq.s32.totalorder %s18, 1
    %p188 = por %p186, %p187
    %p189 = scmp.ne.s32.totalorder %s178, %s179
    %p190 = scmp.eq.s32.totalorder %s18, 0
    %p191 = por %p189, %p190
    %p192 = scmp.ne.s32.totalorder %s178, %s179
    %p193 = scmp.eq.s32.totalorder %s19, 1
    %p194 = por %p192, %p193
    %p196 = scmp.ne.s32.totalorder %s179, %s195
    %p197 = scmp.eq.s32.totalorder %s19, 0
    %p198 = por %p196, %p197
    %p199 = scmp.le.s32.totalorder 1, %s13
    %p200 = scmp.lt.s32.totalorder %s13, 3
    %p201 = pnand %p199, %p200
    %p202 = pneg %p201
    // Predicated region
    $region9: #{tpu_custom_call.1} parent=5 // pred_check
      _
    $region10: #{tpu_custom_call.1} parent=5 // pred_check_branch
      %204 = sbr.rel (%p201) target = $region12
    $region11: #{tpu_custom_call.1} parent=5 // pred_region
      %s205 = ssub.s32 %s13, 1
      // Predicated region
      $region13: #{tpu_custom_call.1} parent=11 // pred_check
        %p206 = pneg %p60
      $region14: #{tpu_custom_call.1} parent=11 // pred_check_branch
        %208 = sbr.rel (%p206) target = $region16
      $region15: #{tpu_custom_call.1} parent=11 // pred_region
        _
      $region16: #{tpu_custom_call.1} parent=11 // pred_fallthru
        _
      // Predicated region
      $region17: #{tpu_custom_call.1} parent=11 // pred_check
        %p209 = pneg %p81
      $region18: #{tpu_custom_call.1} parent=11 // pred_check_branch
        %211 = sbr.rel (%p209) target = $region20
      $region19: #{tpu_custom_call.1} parent=11 // pred_region
        _
      $region20: #{tpu_custom_call.1} parent=11 // pred_fallthru
        _
      // Predicated region
      $region21: #{tpu_custom_call.1} parent=11 // pred_check
        %p212 = pneg %p102
      $region22: #{tpu_custom_call.1} parent=11 // pred_check_branch
        %214 = sbr.rel (%p212) target = $region24
      $region23: #{tpu_custom_call.1} parent=11 // pred_region
        _
      $region24: #{tpu_custom_call.1} parent=11 // pred_fallthru
        _
      // Predicated region
      $region25: #{tpu_custom_call.1} parent=11 // pred_check
        %p215 = pneg %p123
      $region26: #{tpu_custom_call.1} parent=11 // pred_check_branch
        %217 = sbr.rel (%p215) target = $region28
      $region27: #{tpu_custom_call.1} parent=11 // pred_region
        _
      $region28: #{tpu_custom_call.1} parent=11 // pred_fallthru
        _
      // Predicated region
      $region29: #{tpu_custom_call.1} parent=11 // pred_check
        %p218 = pneg %p144
      $region30: #{tpu_custom_call.1} parent=11 // pred_check_branch
        %220 = sbr.rel (%p218) target = $region32
      $region31: #{tpu_custom_call.1} parent=11 // pred_region
        _
      $region32: #{tpu_custom_call.1} parent=11 // pred_fallthru
        _
      // Predicated region
      $region33: #{tpu_custom_call.1} parent=11 // pred_check
        %p221 = pneg %p165
      $region34: #{tpu_custom_call.1} parent=11 // pred_check_branch
        %223 = sbr.rel (%p221) target = $region36
      $region35: #{tpu_custom_call.1} parent=11 // pred_region
        _
      $region36: #{tpu_custom_call.1} parent=11 // pred_fallthru
        _
    $region12: #{tpu_custom_call.1} parent=5 // pred_fallthru
      _
    %p224 = scmp.lt.s32.totalorder %s13, 2
    // Predicated region
    $region37: #{tpu_custom_call.1} parent=5 // pred_check
      %p225 = pneg %p224
    $region38: #{tpu_custom_call.1} parent=5 // pred_check_branch
      %227 = sbr.rel (%p225) target = $region40
    $region39: #{tpu_custom_call.1} parent=5 // pred_region
      // Predicated region
      $region41: #{tpu_custom_call.1} parent=39 // pred_check
        %p228 = pneg %p33
      $region42: #{tpu_custom_call.1} parent=39 // pred_check_branch
        %230 = sbr.rel (%p228) target = $region44
      $region43: #{tpu_custom_call.1} parent=39 // pred_region
        %s231 = smul.u32 32, %s13
        %p232 = scmp.lt.s32.totalorder %s231, 63
        %s233 = scalar_select %p232, %s231, 63
        %s234 = smul.addr %s233, 8
        %s235 = scalar_lea.vmem %s0, %s234
        %s236 = smul.u32 32, %s13
      $region44: #{tpu_custom_call.1} parent=39 // pred_fallthru
        _
    $region40: #{tpu_custom_call.1} parent=5 // pred_fallthru
      _
    %p237 = scmp.le.s32.totalorder 1, %s13
    %p238 = scmp.lt.s32.totalorder %s13, 3
    %p239 = pnand %p237, %p238
    %p240 = pneg %p239
    // Predicated region
    $region45: #{tpu_custom_call.1} parent=5 // pred_check
      _
    $region46: #{tpu_custom_call.1} parent=5 // pred_check_branch
      %242 = sbr.rel (%p239) target = $region48
    $region47: #{tpu_custom_call.1} parent=5 // pred_region
      %s243 = ssub.s32 %s13, 1
      %s244 = smul.u32 32, %s18
      %p245 = scmp.lt.s32.totalorder %s244, 63
      %s246 = scalar_select %p245, %s244, 63
      %s247 = smul.addr %s246, 8
      %s248 = scalar_lea.vmem %s0, %s247
      %p249 = pneg %p39
      %p250 = pneg %p36
      %p251 = pneg %p60
      %p252 = pneg %p57
      %p253 = pneg %p81
      %p254 = pneg %p78
      %p255 = pneg %p102
      %p256 = pneg %p99
      %p257 = pneg %p123
      %p258 = pneg %p120
      %p259 = pneg %p144
      %p260 = pneg %p141
      %p261 = pneg %p165
      %p262 = pneg %p162
      %p263 = pneg %p191
      %p264 = pneg %p188
      %s265 = smul.u32 32, %s18
      %p266 = scmp.lt.s32.totalorder %s265, 63
      %s267 = scalar_select %p266, %s265, 63
      %s268 = smul.addr %s267, 8
      %s269 = scalar_lea.vmem %s7, %s268
      %s270 = smul.u32 32, %s18
      %p271 = scmp.lt.s32.totalorder %s270, 63
      %s272 = scalar_select %p271, %s270, 63
      %s273 = smul.addr %s272, 8
      %s274 = scalar_lea.vmem %s0, %s273
      %s275 = smul.u32 32, %s18
      %s276 = smul.u32 32, %s18
      %p277 = scmp.lt.s32.totalorder %s276, 63
      %s278 = scalar_select %p277, %s276, 63
      %s279 = smul.addr %s278, 8
      %s280 = scalar_lea.vmem %s7, %s279
      %s281 = smul.u32 32, %s18
      %v282 = vld [vmem:[%s1] sm:$0xff]
      %v283 = vld [vmem:[%s1 + $0x8] sm:$0xff]
      %v284 = vld [vmem:[%s2] sm:$0xff]
      %v285 = vld [vmem:[%s2 + $0x8] sm:$0xff]
      %v286 = vld [vmem:[%s3] sm:$0x1]
      %v287 = vld [vmem:[%s4] sm:$0x1]
      %v288 = vld [vmem:[%s5] sm:$0x1]
      %v289 = vld [vmem:[%s6] sm:$0x1]
      %v290 = vld [vmem:[%s274] sm:$0xff]
      %v291 = vld [vmem:[%s274 + $0x8] sm:$0xff]
      %v292 = vld [vmem:[%s274 + $0x10] sm:$0xff]
      %v293 = vld [vmem:[%s274 + $0x18] sm:$0xff]
      %v294 = vld [vmem:[%s274 + $0x20] sm:$0xff]
      %v295 = vld [vmem:[%s274 + $0x28] sm:$0xff]
      %v296 = vld [vmem:[%s274 + $0x30] sm:$0xff]
      %v297 = vld [vmem:[%s274 + $0x38] sm:$0xff]
      %v298 = vld [vmem:[%s274 + $0x40] sm:$0xff]
      %v299 = vld [vmem:[%s274 + $0x48] sm:$0xff]
      %v300 = vld [vmem:[%s274 + $0x50] sm:$0xff]
      %v301 = vld [vmem:[%s274 + $0x58] sm:$0xff]
      %v302 = vld [vmem:[%s274 + $0x60] sm:$0xff]
      %v303 = vld [vmem:[%s274 + $0x68] sm:$0xff]
      %v304 = vld [vmem:[%s274 + $0x70] sm:$0xff]
      %v305 = vld [vmem:[%s274 + $0x78] sm:$0xff]
      %vm306 = vcmask 261120
      %v308 = vsel %vm306, %v290, 0
      %v311 = vsel %vm306, %v291, 0
      %v314 = vsel %vm306, %v292, 0
      %v317 = vsel %vm306, %v293, 0
      %v320 = vsel %vm306, %v294, 0
      %v323 = vsel %vm306, %v295, 0
      %v326 = vsel %vm306, %v296, 0
      %v329 = vsel %vm306, %v297, 0
      %v332 = vsel %vm306, %v298, 0
      %v335 = vsel %vm306, %v299, 0
      %v338 = vsel %vm306, %v300, 0
      %v341 = vsel %vm306, %v301, 0
      %v344 = vsel %vm306, %v302, 0
      %v347 = vsel %vm306, %v303, 0
      %v350 = vsel %vm306, %v304, 0
      %v353 = vsel %vm306, %v305, 0
      %v356 = vsel %vm306, %v282, 0
      %v359 = vsel %vm306, %v283, 0
      %361 = vmatprep.subr.mxu0 0.0
      %v362 = vand.u32 %v356, 4294901760
      %363 = vmatpush1.xpose.msra.mxu0 %v362
      %364 = vmatprep.subr.mxu0 0.0
      %v365 = vand.u32 %v359, 4294901760
      %366 = vmatpush1.xpose.msra.mxu0 %v365
      %367 = vmatprep.subr.mxu0 0.0
      %368 = vmatpush1.xpose.msra.mxu0 0.0
      %369 = vmatprep.subr.mxu0 0.0
      %370 = vmatpush1.xpose.msra.mxu0 0.0
      %371 = vmatprep.subr.mxu0 0.0
      %372 = vmatpush1.xpose.msra.mxu0 0.0
      %373 = vmatprep.subr.mxu0 0.0
      %374 = vmatpush1.xpose.msra.mxu0 0.0
      %375 = vmatprep.subr.mxu0 0.0
      %376 = vmatpush1.xpose.msra.mxu0 0.0
      %377 = vmatprep.subr.mxu0 0.0
      %378 = vmatpush1.xpose.msra.mxu0 0.0
      %379 = vmatprep.subr.mxu0 0.0
      %380 = vmatpush1.xpose.msra.mxu0 0.0
      %381 = vmatprep.subr.mxu0 0.0
      %382 = vmatpush1.xpose.msra.mxu0 0.0
      %383 = vmatprep.subr.mxu0 0.0
      %384 = vmatpush1.xpose.msra.mxu0 0.0
      %385 = vmatprep.subr.mxu0 0.0
      %386 = vmatpush1.xpose.msra.mxu0 0.0
      %387 = vmatprep.subr.mxu0 0.0
      %388 = vmatpush1.xpose.msra.mxu0 0.0
      %389 = vmatprep.subr.mxu0 0.0
      %390 = vmatpush1.xpose.msra.mxu0 0.0
      %391 = vmatprep.subr.mxu0 0.0
      %392 = vmatpush1.xpose.msra.mxu0 0.0
      %393 = vmatprep.subr.mxu0 0.0
      %394 = vmatpush1.xpose.msra.mxu0 0.0
      %395 = vmatprep.subr.mxu0 0.0
      %396 = vmatpush1.xpose.msra.mxu0 0.0
      %397 = vmatprep.subr.mxu0 0.0
      %398 = vmatpush1.xpose.msra.mxu0 0.0
      %399 = vmatprep.subr.mxu0 0.0
      %400 = vmatpush1.xpose.msra.mxu0 0.0
      %401 = vmatprep.subr.mxu0 0.0
      %402 = vmatpush1.xpose.msra.mxu0 0.0
      %403 = vmatprep.subr.mxu0 0.0
      %404 = vmatpush1.xpose.msra.mxu0 0.0
      %405 = vmatprep.subr.mxu0 0.0
      %406 = vmatpush1.xpose.msra.mxu0 0.0
      %407 = vmatprep.subr.mxu0 0.0
      %408 = vmatpush1.xpose.msra.mxu0 0.0
      %409 = vmatprep.subr.mxu0 0.0
      %410 = vmatpush1.xpose.msra.mxu0 0.0
      %411 = vmatprep.subr.mxu0 0.0
      %412 = vmatpush1.xpose.msra.mxu0 0.0
      %413 = vmatprep.subr.mxu0 0.0
      %414 = vmatpush1.xpose.msra.mxu0 0.0
      %415 = vmatprep.subr.mxu0 0.0
      %416 = vmatpush1.xpose.msra.mxu0 0.0
      %417 = vmatprep.subr.mxu0 0.0
      %418 = vmatpush1.xpose.msra.mxu0 0.0
      %419 = vmatprep.subr.mxu0 0.0
      %420 = vmatpush1.xpose.msra.mxu0 0.0
      %421 = vmatprep.subr.mxu0 0.0
      %422 = vmatpush1.xpose.msra.mxu0 0.0
      %423 = vmatprep.subr.mxu0 0.0
      %424 = vmatpush1.xpose.msra.mxu0 0.0
      %425 = vmatprep.subr.mxu0 0.0
      %426 = vmatpush1.xpose.msra.mxu0 0.0
      %427 = vmatprep.mubr.f32.mxu0 0.0
      %v428 = vand.u32 %v308, 4294901760
      %v429 = vsub.f32 %v308, %v428
      %v430 = vand.u32 %v429, 4294901760
      %v431 = vsub.f32 %v429, %v430
      %v432 = vand.u32 %v431, 4294901760
      %433 = vmatmul.mubr.f32.gmra.mrb[0].mxu0 %v432
      %v434 = vpop.f32.mrb[0].mxu0
      %v435 = vadd.f32 0.0, %v434
      %v436 = vpop.f32.mrb[0].mxu0
      %437 = vmatprep.mubr.f32.mxu0 0.0
      %v438 = vand.u32 %v311, 4294901760
      %v439 = vsub.f32 %v311, %v438
      %v440 = vand.u32 %v439, 4294901760
      %v441 = vsub.f32 %v439, %v440
      %v442 = vand.u32 %v441, 4294901760
      %443 = vmatmul.mubr.f32.gmra.mrb[0].mxu0 %v442
      %v444 = vpop.f32.mrb[0].mxu0
      %v445 = vadd.f32 0.0, %v444
      %v446 = vpop.f32.mrb[0].mxu0
      %447 = vmatprep.mubr.f32.mxu0 0.0
      %v448 = vand.u32 %v314, 4294901760
      %v449 = vsub.f32 %v314, %v448
      %v450 = vand.u32 %v449, 4294901760
      %v451 = vsub.f32 %v449, %v450
      %v452 = vand.u32 %v451, 4294901760
      %453 = vmatmul.mubr.f32.gmra.mrb[0].mxu0 %v452
      %v454 = vpop.f32.mrb[0].mxu0
      %v455 = vadd.f32 0.0, %v454
      %v456 = vpop.f32.mrb[0].mxu0
      %457 = vmatprep.mubr.f32.mxu0 0.0
      %v458 = vand.u32 %v317, 4294901760
      %v459 = vsub.f32 %v317, %v458
      %v460 = vand.u32 %v459, 4294901760
      %v461 = vsub.f32 %v459, %v460
      %v462 = vand.u32 %v461, 4294901760
      %463 = vmatmul.mubr.f32.gmra.mrb[0].mxu0 %v462
      %v464 = vpop.f32.mrb[0].mxu0
      %v465 = vadd.f32 0.0, %v464
      %v466 = vpop.f32.mrb[0].mxu0
      %467 = vmatprep.mubr.f32.mxu0 0.0
      %v468 = vand.u32 %v320, 4294901760
      %v469 = vsub.f32 %v320, %v468
      %v470 = vand.u32 %v469, 4294901760
      %v471 = vsub.f32 %v469, %v470
      %v472 = vand.u32 %v471, 4294901760
      %473 = vmatmul.mubr.f32.gmra.mrb[0].mxu0 %v472
      %v474 = vpop.f32.mrb[0].mxu0
      %v475 = vadd.f32 0.0, %v474
      %v476 = vpop.f32.mrb[0].mxu0
      %477 = vmatprep.mubr.f32.mxu0 0.0
      %v478 = vand.u32 %v323, 4294901760
      %v479 = vsub.f32 %v323, %v478
      %v480 = vand.u32 %v479, 4294901760
      %v481 = vsub.f32 %v479, %v480
      %v482 = vand.u32 %v481, 4294901760
      %483 = vmatmul.mubr.f32.gmra.mrb[0].mxu0 %v482
      %v484 = vpop.f32.mrb[0].mxu0
      %v485 = vadd.f32 0.0, %v484
      %v486 = vpop.f32.mrb[0].mxu0
      %487 = vmatprep.mubr.f32.mxu0 0.0
      %v488 = vand.u32 %v326, 4294901760
      %v489 = vsub.f32 %v326, %v488
      %v490 = vand.u32 %v489, 4294901760
      %v491 = vsub.f32 %v489, %v490
      %v492 = vand.u32 %v491, 4294901760
      %493 = vmatmul.mubr.f32.gmra.mrb[0].mxu0 %v492
      %v494 = vpop.f32.mrb[0].mxu0
      %v495 = vadd.f32 0.0, %v494
      %v496 = vpop.f32.mrb[0].mxu0
      %497 = vmatprep.mubr.f32.mxu0 0.0
      %v498 = vand.u32 %v329, 4294901760
      %v499 = vsub.f32 %v329, %v498
      %v500 = vand.u32 %v499, 4294901760
      %v501 = vsub.f32 %v499, %v500
      %v502 = vand.u32 %v501, 4294901760
      %503 = vmatmul.mubr.f32.gmra.mrb[0].mxu0 %v502
      %v504 = vpop.f32.mrb[0].mxu0
      %v505 = vadd.f32 0.0, %v504
      %v506 = vpop.f32.mrb[0].mxu0
      %507 = vmatprep.mubr.f32.mxu0 0.0
      %v508 = vand.u32 %v332, 4294901760
      %v509 = vsub.f32 %v332, %v508
      %v510 = vand.u32 %v509, 4294901760
      %v511 = vsub.f32 %v509, %v510
      %v512 = vand.u32 %v511, 4294901760
      %513 = vmatmul.mubr.f32.gmra.mrb[0].mxu0 %v512
      %v514 = vpop.f32.mrb[0].mxu0
      %v515 = vadd.f32 0.0, %v514
      %v516 = vpop.f32.mrb[0].mxu0
      %517 = vmatprep.mubr.f32.mxu0 0.0
      %v518 = vand.u32 %v335, 4294901760
      %v519 = vsub.f32 %v335, %v518
      %v520 = vand.u32 %v519, 4294901760
      %v521 = vsub.f32 %v519, %v520
      %v522 = vand.u32 %v521, 4294901760
      %523 = vmatmul.mubr.f32.gmra.mrb[0].mxu0 %v522
      %v524 = vpop.f32.mrb[0].mxu0
      %v525 = vadd.f32 0.0, %v524
      %v526 = vpop.f32.mrb[0].mxu0
      %527 = vmatprep.mubr.f32.mxu0 0.0
      %v528 = vand.u32 %v338, 4294901760
      %v529 = vsub.f32 %v338, %v528
      %v530 = vand.u32 %v529, 4294901760
      %v531 = vsub.f32 %v529, %v530
      %v532 = vand.u32 %v531, 4294901760
      %533 = vmatmul.mubr.f32.gmra.mrb[0].mxu0 %v532
      %v534 = vpop.f32.mrb[0].mxu0
      %v535 = vadd.f32 0.0, %v534
      %v536 = vpop.f32.mrb[0].mxu0
      %537 = vmatprep.mubr.f32.mxu0 0.0
      %v538 = vand.u32 %v341, 4294901760
      %v539 = vsub.f32 %v341, %v538
      %v540 = vand.u32 %v539, 4294901760
      %v541 = vsub.f32 %v539, %v540
      %v542 = vand.u32 %v541, 4294901760
      %543 = vmatmul.mubr.f32.gmra.mrb[0].mxu0 %v542
      %v544 = vpop.f32.mrb[0].mxu0
      %v545 = vadd.f32 0.0, %v544
      %v546 = vpop.f32.mrb[0].mxu0
      %547 = vmatprep.mubr.f32.mxu0 0.0
      %v548 = vand.u32 %v344, 4294901760
      %v549 = vsub.f32 %v344, %v548
      %v550 = vand.u32 %v549, 4294901760
      %v551 = vsub.f32 %v549, %v550
      %v552 = vand.u32 %v551, 4294901760
      %553 = vmatmul.mubr.f32.gmra.mrb[0].mxu0 %v552
      %v554 = vpop.f32.mrb[0].mxu0
      %v555 = vadd.f32 0.0, %v554
      %v556 = vpop.f32.mrb[0].mxu0
      %557 = vmatprep.mubr.f32.mxu0 0.0
      %v558 = vand.u32 %v347, 4294901760
      %v559 = vsub.f32 %v347, %v558
      %v560 = vand.u32 %v559, 4294901760
      %v561 = vsub.f32 %v559, %v560
      %v562 = vand.u32 %v561, 4294901760
      %563 = vmatmul.mubr.f32.gmra.mrb[0].mxu0 %v562
      %v564 = vpop.f32.mrb[0].mxu0
      %v565 = vadd.f32 0.0, %v564
      %v566 = vpop.f32.mrb[0].mxu0
      %567 = vmatprep.mubr.f32.mxu0 0.0
      %v568 = vand.u32 %v350, 4294901760
      %v569 = vsub.f32 %v350, %v568
      %v570 = vand.u32 %v569, 4294901760
      %v571 = vsub.f32 %v569, %v570
      %v572 = vand.u32 %v571, 4294901760
      %573 = vmatmul.mubr.f32.gmra.mrb[0].mxu0 %v572
      %v574 = vpop.f32.mrb[0].mxu0
      %v575 = vadd.f32 0.0, %v574
      %v576 = vpop.f32.mrb[0].mxu0
      %577 = vmatprep.mubr.f32.mxu0 0.0
      %v578 = vand.u32 %v353, 4294901760
      %v579 = vsub.f32 %v353, %v578
      %v580 = vand.u32 %v579, 4294901760
      %v581 = vsub.f32 %v579, %v580
      %v582 = vand.u32 %v581, 4294901760
      %583 = vmatmul.mubr.f32.gmra.mrb[0].mxu0 %v582
      %v584 = vpop.f32.mrb[0].mxu0
      %v585 = vadd.f32 0.0, %v584
      %v586 = vpop.f32.mrb[0].mxu0
      %587 = vdwg.mxu0
      %588 = vmatprep.subr.mxu0 0.0
      %v589 = vand.u32 %v356, 4294901760
      %v590 = vsub.f32 %v356, %v589
      %v591 = vand.u32 %v590, 4294901760
      %v592 = vsub.f32 %v590, %v591
      %v593 = vand.u32 %v592, 4294901760
      %594 = vmatpush1.xpose.msra.mxu0 %v593
      %595 = vmatprep.subr.mxu0 0.0
      %v596 = vand.u32 %v359, 4294901760
      %v597 = vsub.f32 %v359, %v596
      %v598 = vand.u32 %v597, 4294901760
      %v599 = vsub.f32 %v597, %v598
      %v600 = vand.u32 %v599, 4294901760
      %601 = vmatpush1.xpose.msra.mxu0 %v600
      %602 = vmatprep.subr.mxu0 0.0
      %603 = vmatpush1.xpose.msra.mxu0 0.0
      %604 = vmatprep.subr.mxu0 0.0
      %605 = vmatpush1.xpose.msra.mxu0 0.0
      %606 = vmatprep.subr.mxu0 0.0
      %607 = vmatpush1.xpose.msra.mxu0 0.0
      %608 = vmatprep.subr.mxu0 0.0
      %609 = vmatpush1.xpose.msra.mxu0 0.0
      %610 = vmatprep.subr.mxu0 0.0
      %611 = vmatpush1.xpose.msra.mxu0 0.0
      %612 = vmatprep.subr.mxu0 0.0
      %613 = vmatpush1.xpose.msra.mxu0 0.0
      %614 = vmatprep.subr.mxu0 0.0
      %615 = vmatpush1.xpose.msra.mxu0 0.0
      %616 = vmatprep.subr.mxu0 0.0
      %617 = vmatpush1.xpose.msra.mxu0 0.0
      %618 = vmatprep.subr.mxu0 0.0
      %619 = vmatpush1.xpose.msra.mxu0 0.0
      %620 = vmatprep.subr.mxu0 0.0
      %621 = vmatpush1.xpose.msra.mxu0 0.0
      %622 = vmatprep.subr.mxu0 0.0
      %623 = vmatpush1.xpose.msra.mxu0 0.0
      %624 = vmatprep.subr.mxu0 0.0
      %625 = vmatpush1.xpose.msra.mxu0 0.0
      %626 = vmatprep.subr.mxu0 0.0
      %627 = vmatpush1.xpose.msra.mxu0 0.0
      %628 = vmatprep.subr.mxu0 0.0
      %629 = vmatpush1.xpose.msra.mxu0 0.0
      %630 = vmatprep.subr.mxu0 0.0
      %631 = vmatpush1.xpose.msra.mxu0 0.0
      %632 = vmatprep.subr.mxu0 0.0
      %633 = vmatpush1.xpose.msra.mxu0 0.0
      %634 = vmatprep.subr.mxu0 0.0
      %635 = vmatpush1.xpose.msra.mxu0 0.0
      %636 = vmatprep.subr.mxu0 0.0
      %637 = vmatpush1.xpose.msra.mxu0 0.0
      %638 = vmatprep.subr.mxu0 0.0
      %639 = vmatpush1.xpose.msra.mxu0 0.0
      %640 = vmatprep.subr.mxu0 0.0
      %641 = vmatpush1.xpose.msra.mxu0 0.0
      %642 = vmatprep.subr.mxu0 0.0
      %643 = vmatpush1.xpose.msra.mxu0 0.0
      %644 = vmatprep.subr.mxu0 0.0
      %645 = vmatpush1.xpose.msra.mxu0 0.0
      %646 = vmatprep.subr.mxu0 0.0
      %647 = vmatpush1.xpose.msra.mxu0 0.0
      %648 = vmatprep.subr.mxu0 0.0
      %649 = vmatpush1.xpose.msra.mxu0 0.0
      %650 = vmatprep.subr.mxu0 0.0
      %651 = vmatpush1.xpose.msra.mxu0 0.0
      %652 = vmatprep.subr.mxu0 0.0
      %653 = vmatpush1.xpose.msra.mxu0 0.0
      %654 = vmatprep.subr.mxu0 0.0
      %655 = vmatpush1.xpose.msra.mxu0 0.0
      %656 = vmatprep.subr.mxu0 0.0
      %657 = vmatpush1.xpose.msra.mxu0 0.0
      %658 = vmatprep.subr.mxu0 0.0
      %659 = vmatpush1.xpose.msra.mxu0 0.0
      %660 = vmatprep.subr.mxu0 0.0
      %661 = vmatpush1.xpose.msra.mxu0 0.0
      %662 = vmatprep.mubr.f32.mxu0 0.0
      %v663 = vand.u32 %v308, 4294901760
      %664 = vmatmul.mubr.f32.gmra.mrb[0].mxu0 %v663
      %v665 = vpop.f32.mrb[0].mxu0
      %v666 = vadd.f32 %v435, %v665
      %v667 = vpop.f32.mrb[0].mxu0
      %668 = vmatprep.mubr.f32.mxu0 0.0
      %v669 = vand.u32 %v311, 4294901760
      %670 = vmatmul.mubr.f32.gmra.mrb[0].mxu0 %v669
      %v671 = vpop.f32.mrb[0].mxu0
      %v672 = vadd.f32 %v445, %v671
      %v673 = vpop.f32.mrb[0].mxu0
      %674 = vmatprep.mubr.f32.mxu0 0.0
      %v675 = vand.u32 %v314, 4294901760
      %676 = vmatmul.mubr.f32.gmra.mrb[0].mxu0 %v675
      %v677 = vpop.f32.mrb[0].mxu0
      %v678 = vadd.f32 %v455, %v677
      %v679 = vpop.f32.mrb[0].mxu0
      %680 = vmatprep.mubr.f32.mxu0 0.0
      %v681 = vand.u32 %v317, 4294901760
      %682 = vmatmul.mubr.f32.gmra.mrb[0].mxu0 %v681
      %v683 = vpop.f32.mrb[0].mxu0
      %v684 = vadd.f32 %v465, %v683
      %v685 = vpop.f32.mrb[0].mxu0
      %686 = vmatprep.mubr.f32.mxu0 0.0
      %v687 = vand.u32 %v320, 4294901760
      %688 = vmatmul.mubr.f32.gmra.mrb[0].mxu0 %v687
      %v689 = vpop.f32.mrb[0].mxu0
      %v690 = vadd.f32 %v475, %v689
      %v691 = vpop.f32.mrb[0].mxu0
      %692 = vmatprep.mubr.f32.mxu0 0.0
      %v693 = vand.u32 %v323, 4294901760
      %694 = vmatmul.mubr.f32.gmra.mrb[0].mxu0 %v693
      %v695 = vpop.f32.mrb[0].mxu0
      %v696 = vadd.f32 %v485, %v695
      %v697 = vpop.f32.mrb[0].mxu0
      %698 = vmatprep.mubr.f32.mxu0 0.0
      %v699 = vand.u32 %v326, 4294901760
      %700 = vmatmul.mubr.f32.gmra.mrb[0].mxu0 %v699
      %v701 = vpop.f32.mrb[0].mxu0
      %v702 = vadd.f32 %v495, %v701
      %v703 = vpop.f32.mrb[0].mxu0
      %704 = vmatprep.mubr.f32.mxu0 0.0
      %v705 = vand.u32 %v329, 4294901760
      %706 = vmatmul.mubr.f32.gmra.mrb[0].mxu0 %v705
      %v707 = vpop.f32.mrb[0].mxu0
      %v708 = vadd.f32 %v505, %v707
      %v709 = vpop.f32.mrb[0].mxu0
      %710 = vmatprep.mubr.f32.mxu0 0.0
      %v711 = vand.u32 %v332, 4294901760
      %712 = vmatmul.mubr.f32.gmra.mrb[0].mxu0 %v711
      %v713 = vpop.f32.mrb[0].mxu0
      %v714 = vadd.f32 %v515, %v713
      %v715 = vpop.f32.mrb[0].mxu0
      %716 = vmatprep.mubr.f32.mxu0 0.0
      %v717 = vand.u32 %v335, 4294901760
      %718 = vmatmul.mubr.f32.gmra.mrb[0].mxu0 %v717
      %v719 = vpop.f32.mrb[0].mxu0
      %v720 = vadd.f32 %v525, %v719
      %v721 = vpop.f32.mrb[0].mxu0
      %722 = vmatprep.mubr.f32.mxu0 0.0
      %v723 = vand.u32 %v338, 4294901760
      %724 = vmatmul.mubr.f32.gmra.mrb[0].mxu0 %v723
      %v725 = vpop.f32.mrb[0].mxu0
      %v726 = vadd.f32 %v535, %v725
      %v727 = vpop.f32.mrb[0].mxu0
      %728 = vmatprep.mubr.f32.mxu0 0.0
      %v729 = vand.u32 %v341, 4294901760
      %730 = vmatmul.mubr.f32.gmra.mrb[0].mxu0 %v729
      %v731 = vpop.f32.mrb[0].mxu0
      %v732 = vadd.f32 %v545, %v731
      %v733 = vpop.f32.mrb[0].mxu0
      %734 = vmatprep.mubr.f32.mxu0 0.0
      %v735 = vand.u32 %v344, 4294901760
      %736 = vmatmul.mubr.f32.gmra.mrb[0].mxu0 %v735
      %v737 = vpop.f32.mrb[0].mxu0
      %v738 = vadd.f32 %v555, %v737
      %v739 = vpop.f32.mrb[0].mxu0
      %740 = vmatprep.mubr.f32.mxu0 0.0
      %v741 = vand.u32 %v347, 4294901760
      %742 = vmatmul.mubr.f32.gmra.mrb[0].mxu0 %v741
      %v743 = vpop.f32.mrb[0].mxu0
      %v744 = vadd.f32 %v565, %v743
      %v745 = vpop.f32.mrb[0].mxu0
      %746 = vmatprep.mubr.f32.mxu0 0.0
      %v747 = vand.u32 %v350, 4294901760
      %748 = vmatmul.mubr.f32.gmra.mrb[0].mxu0 %v747
      %v749 = vpop.f32.mrb[0].mxu0
      %v750 = vadd.f32 %v575, %v749
      %v751 = vpop.f32.mrb[0].mxu0
      %752 = vmatprep.mubr.f32.mxu0 0.0
      %v753 = vand.u32 %v353, 4294901760
      %754 = vmatmul.mubr.f32.gmra.mrb[0].mxu0 %v753
      %v755 = vpop.f32.mrb[0].mxu0
      %v756 = vadd.f32 %v585, %v755
      %v757 = vpop.f32.mrb[0].mxu0
      %758 = vdwg.mxu0
      %759 = vmatprep.subr.mxu0 0.0
      %v760 = vand.u32 %v356, 4294901760
      %v761 = vsub.f32 %v356, %v760
      %762 = vmatpush1.xpose.msra.mxu0 %v761
      %763 = vmatprep.subr.mxu0 0.0
      %v764 = vand.u32 %v359, 4294901760
      %v765 = vsub.f32 %v359, %v764
      %766 = vmatpush1.xpose.msra.mxu0 %v765
      %767 = vmatprep.subr.mxu0 0.0
      %768 = vmatpush1.xpose.msra.mxu0 0.0
      %769 = vmatprep.subr.mxu0 0.0
      %770 = vmatpush1.xpose.msra.mxu0 0.0
      %771 = vmatprep.subr.mxu0 0.0
      %772 = vmatpush1.xpose.msra.mxu0 0.0
      %773 = vmatprep.subr.mxu0 0.0
      %774 = vmatpush1.xpose.msra.mxu0 0.0
      %775 = vmatprep.subr.mxu0 0.0
      %776 = vmatpush1.xpose.msra.mxu0 0.0
      %777 = vmatprep.subr.mxu0 0.0
      %778 = vmatpush1.xpose.msra.mxu0 0.0
      %779 = vmatprep.subr.mxu0 0.0
      %780 = vmatpush1.xpose.msra.mxu0 0.0
      %781 = vmatprep.subr.mxu0 0.0
      %782 = vmatpush1.xpose.msra.mxu0 0.0
      %783 = vmatprep.subr.mxu0 0.0
      %784 = vmatpush1.xpose.msra.mxu0 0.0
      %785 = vmatprep.subr.mxu0 0.0
      %786 = vmatpush1.xpose.msra.mxu0 0.0
      %787 = vmatprep.subr.mxu0 0.0
      %788 = vmatpush1.xpose.msra.mxu0 0.0
      %789 = vmatprep.subr.mxu0 0.0
      %790 = vmatpush1.xpose.msra.mxu0 0.0
      %791 = vmatprep.subr.mxu0 0.0
      %792 = vmatpush1.xpose.msra.mxu0 0.0
      %793 = vmatprep.subr.mxu0 0.0
      %794 = vmatpush1.xpose.msra.mxu0 0.0
      %795 = vmatprep.subr.mxu0 0.0
      %796 = vmatpush1.xpose.msra.mxu0 0.0
      %797 = vmatprep.subr.mxu0 0.0
      %798 = vmatpush1.xpose.msra.mxu0 0.0
      %799 = vmatprep.subr.mxu0 0.0
      %800 = vmatpush1.xpose.msra.mxu0 0.0
      %801 = vmatprep.subr.mxu0 0.0
      %802 = vmatpush1.xpose.msra.mxu0 0.0
      %803 = vmatprep.subr.mxu0 0.0
      %804 = vmatpush1.xpose.msra.mxu0 0.0
      %805 = vmatprep.subr.mxu0 0.0
      %806 = vmatpush1.xpose.msra.mxu0 0.0
      %807 = vmatprep.subr.mxu0 0.0
      %808 = vmatpush1.xpose.msra.mxu0 0.0
      %809 = vmatprep.subr.mxu0 0.0
      %810 = vmatpush1.xpose.msra.mxu0 0.0
      %811 = vmatprep.subr.mxu0 0.0
      %812 = vmatpush1.xpose.msra.mxu0 0.0
      %813 = vmatprep.subr.mxu0 0.0
      %814 = vmatpush1.xpose.msra.mxu0 0.0
      %815 = vmatprep.subr.mxu0 0.0
      %816 = vmatpush1.xpose.msra.mxu0 0.0
      %817 = vmatprep.subr.mxu0 0.0
      %818 = vmatpush1.xpose.msra.mxu0 0.0
      %819 = vmatprep.subr.mxu0 0.0
      %820 = vmatpush1.xpose.msra.mxu0 0.0
      %821 = vmatprep.subr.mxu0 0.0
      %822 = vmatpush1.xpose.msra.mxu0 0.0
      %823 = vmatprep.subr.mxu0 0.0
      %824 = vmatpush1.xpose.msra.mxu0 0.0
      %825 = vmatprep.subr.mxu0 0.0
      %826 = vmatpush1.xpose.msra.mxu0 0.0
      %827 = vmatprep.mubr.f32.mxu0 0.0
      %v828 = vand.u32 %v308, 4294901760
      %v829 = vsub.f32 %v308, %v828
      %830 = vmatmul.mubr.f32.gmra.mrb[0].mxu0 %v829
      %v831 = vpop.f32.mrb[0].mxu0
      %v832 = vadd.f32 %v666, %v831
      %v833 = vpop.f32.mrb[0].mxu0
      %834 = vmatprep.mubr.f32.mxu0 0.0
      %v835 = vand.u32 %v311, 4294901760
      %v836 = vsub.f32 %v311, %v835
      %837 = vmatmul.mubr.f32.gmra.mrb[0].mxu0 %v836
      %v838 = vpop.f32.mrb[0].mxu0
      %v839 = vadd.f32 %v672, %v838
      %v840 = vpop.f32.mrb[0].mxu0
      %841 = vmatprep.mubr.f32.mxu0 0.0
      %v842 = vand.u32 %v314, 4294901760
      %v843 = vsub.f32 %v314, %v842
      %844 = vmatmul.mubr.f32.gmra.mrb[0].mxu0 %v843
      %v845 = vpop.f32.mrb[0].mxu0
      %v846 = vadd.f32 %v678, %v845
      %v847 = vpop.f32.mrb[0].mxu0
      %848 = vmatprep.mubr.f32.mxu0 0.0
      %v849 = vand.u32 %v317, 4294901760
      %v850 = vsub.f32 %v317, %v849
      %851 = vmatmul.mubr.f32.gmra.mrb[0].mxu0 %v850
      %v852 = vpop.f32.mrb[0].mxu0
      %v853 = vadd.f32 %v684, %v852
      %v854 = vpop.f32.mrb[0].mxu0
      %855 = vmatprep.mubr.f32.mxu0 0.0
      %v856 = vand.u32 %v320, 4294901760
      %v857 = vsub.f32 %v320, %v856
      %858 = vmatmul.mubr.f32.gmra.mrb[0].mxu0 %v857
      %v859 = vpop.f32.mrb[0].mxu0
      %v860 = vadd.f32 %v690, %v859
      %v861 = vpop.f32.mrb[0].mxu0
      %862 = vmatprep.mubr.f32.mxu0 0.0
      %v863 = vand.u32 %v323, 4294901760
      %v864 = vsub.f32 %v323, %v863
      %865 = vmatmul.mubr.f32.gmra.mrb[0].mxu0 %v864
      %v866 = vpop.f32.mrb[0].mxu0
      %v867 = vadd.f32 %v696, %v866
      %v868 = vpop.f32.mrb[0].mxu0
      %869 = vmatprep.mubr.f32.mxu0 0.0
      %v870 = vand.u32 %v326, 4294901760
      %v871 = vsub.f32 %v326, %v870
      %872 = vmatmul.mubr.f32.gmra.mrb[0].mxu0 %v871
      %v873 = vpop.f32.mrb[0].mxu0
      %v874 = vadd.f32 %v702, %v873
      %v875 = vpop.f32.mrb[0].mxu0
      %876 = vmatprep.mubr.f32.mxu0 0.0
      %v877 = vand.u32 %v329, 4294901760
      %v878 = vsub.f32 %v329, %v877
      %879 = vmatmul.mubr.f32.gmra.mrb[0].mxu0 %v878
      %v880 = vpop.f32.mrb[0].mxu0
      %v881 = vadd.f32 %v708, %v880
      %v882 = vpop.f32.mrb[0].mxu0
      %883 = vmatprep.mubr.f32.mxu0 0.0
      %v884 = vand.u32 %v332, 4294901760
      %v885 = vsub.f32 %v332, %v884
      %886 = vmatmul.mubr.f32.gmra.mrb[0].mxu0 %v885
      %v887 = vpop.f32.mrb[0].mxu0
      %v888 = vadd.f32 %v714, %v887
      %v889 = vpop.f32.mrb[0].mxu0
      %890 = vmatprep.mubr.f32.mxu0 0.0
      %v891 = vand.u32 %v335, 4294901760
      %v892 = vsub.f32 %v335, %v891
      %893 = vmatmul.mubr.f32.gmra.mrb[0].mxu0 %v892
      %v894 = vpop.f32.mrb[0].mxu0
      %v895 = vadd.f32 %v720, %v894
      %v896 = vpop.f32.mrb[0].mxu0
      %897 = vmatprep.mubr.f32.mxu0 0.0
      %v898 = vand.u32 %v338, 4294901760
      %v899 = vsub.f32 %v338, %v898
      %900 = vmatmul.mubr.f32.gmra.mrb[0].mxu0 %v899
      %v901 = vpop.f32.mrb[0].mxu0
      %v902 = vadd.f32 %v726, %v901
      %v903 = vpop.f32.mrb[0].mxu0
      %904 = vmatprep.mubr.f32.mxu0 0.0
      %v905 = vand.u32 %v341, 4294901760
      %v906 = vsub.f32 %v341, %v905
      %907 = vmatmul.mubr.f32.gmra.mrb[0].mxu0 %v906
      %v908 = vpop.f32.mrb[0].mxu0
      %v909 = vadd.f32 %v732, %v908
      %v910 = vpop.f32.mrb[0].mxu0
      %911 = vmatprep.mubr.f32.mxu0 0.0
      %v912 = vand.u32 %v344, 4294901760
      %v913 = vsub.f32 %v344, %v912
      %914 = vmatmul.mubr.f32.gmra.mrb[0].mxu0 %v913
      %v915 = vpop.f32.mrb[0].mxu0
      %v916 = vadd.f32 %v738, %v915
      %v917 = vpop.f32.mrb[0].mxu0
      %918 = vmatprep.mubr.f32.mxu0 0.0
      %v919 = vand.u32 %v347, 4294901760
      %v920 = vsub.f32 %v347, %v919
      %921 = vmatmul.mubr.f32.gmra.mrb[0].mxu0 %v920
      %v922 = vpop.f32.mrb[0].mxu0
      %v923 = vadd.f32 %v744, %v922
      %v924 = vpop.f32.mrb[0].mxu0
      %925 = vmatprep.mubr.f32.mxu0 0.0
      %v926 = vand.u32 %v350, 4294901760
      %v927 = vsub.f32 %v350, %v926
      %928 = vmatmul.mubr.f32.gmra.mrb[0].mxu0 %v927
      %v929 = vpop.f32.mrb[0].mxu0
      %v930 = vadd.f32 %v750, %v929
      %v931 = vpop.f32.mrb[0].mxu0
      %932 = vmatprep.mubr.f32.mxu0 0.0
      %v933 = vand.u32 %v353, 4294901760
      %v934 = vsub.f32 %v353, %v933
      %935 = vmatmul.mubr.f32.gmra.mrb[0].mxu0 %v934
      %v936 = vpop.f32.mrb[0].mxu0
      %v937 = vadd.f32 %v756, %v936
      %v938 = vpop.f32.mrb[0].mxu0
      %939 = vdwg.mxu0
      %940 = vmatprep.subr.mxu0 0.0
      %v941 = vand.u32 %v356, 4294901760
      %942 = vmatpush1.xpose.msra.mxu0 %v941
      %943 = vmatprep.subr.mxu0 0.0
      %v944 = vand.u32 %v359, 4294901760
      %945 = vmatpush1.xpose.msra.mxu0 %v944
      %946 = vmatprep.subr.mxu0 0.0
      %947 = vmatpush1.xpose.msra.mxu0 0.0
      %948 = vmatprep.subr.mxu0 0.0
      %949 = vmatpush1.xpose.msra.mxu0 0.0
      %950 = vmatprep.subr.mxu0 0.0
      %951 = vmatpush1.xpose.msra.mxu0 0.0
      %952 = vmatprep.subr.mxu0 0.0
      %953 = vmatpush1.xpose.msra.mxu0 0.0
      %954 = vmatprep.subr.mxu0 0.0
      %955 = vmatpush1.xpose.msra.mxu0 0.0
      %956 = vmatprep.subr.mxu0 0.0
      %957 = vmatpush1.xpose.msra.mxu0 0.0
      %958 = vmatprep.subr.mxu0 0.0
      %959 = vmatpush1.xpose.msra.mxu0 0.0
      %960 = vmatprep.subr.mxu0 0.0
      %961 = vmatpush1.xpose.msra.mxu0 0.0
      %962 = vmatprep.subr.mxu0 0.0
      %963 = vmatpush1.xpose.msra.mxu0 0.0
      %964 = vmatprep.subr.mxu0 0.0
      %965 = vmatpush1.xpose.msra.mxu0 0.0
      %966 = vmatprep.subr.mxu0 0.0
      %967 = vmatpush1.xpose.msra.mxu0 0.0
      %968 = vmatprep.subr.mxu0 0.0
      %969 = vmatpush1.xpose.msra.mxu0 0.0
      %970 = vmatprep.subr.mxu0 0.0
      %971 = vmatpush1.xpose.msra.mxu0 0.0
      %972 = vmatprep.subr.mxu0 0.0
      %973 = vmatpush1.xpose.msra.mxu0 0.0
      %974 = vmatprep.subr.mxu0 0.0
      %975 = vmatpush1.xpose.msra.mxu0 0.0
      %976 = vmatprep.subr.mxu0 0.0
      %977 = vmatpush1.xpose.msra.mxu0 0.0
      %978 = vmatprep.subr.mxu0 0.0
      %979 = vmatpush1.xpose.msra.mxu0 0.0
      %980 = vmatprep.subr.mxu0 0.0
      %981 = vmatpush1.xpose.msra.mxu0 0.0
      %982 = vmatprep.subr.mxu0 0.0
      %983 = vmatpush1.xpose.msra.mxu0 0.0
      %984 = vmatprep.subr.mxu0 0.0
      %985 = vmatpush1.xpose.msra.mxu0 0.0
      %986 = vmatprep.subr.mxu0 0.0
      %987 = vmatpush1.xpose.msra.mxu0 0.0
      %988 = vmatprep.subr.mxu0 0.0
      %989 = vmatpush1.xpose.msra.mxu0 0.0
      %990 = vmatprep.subr.mxu0 0.0
      %991 = vmatpush1.xpose.msra.mxu0 0.0
      %992 = vmatprep.subr.mxu0 0.0
      %993 = vmatpush1.xpose.msra.mxu0 0.0
      %994 = vmatprep.subr.mxu0 0.0
      %995 = vmatpush1.xpose.msra.mxu0 0.0
      %996 = vmatprep.subr.mxu0 0.0
      %997 = vmatpush1.xpose.msra.mxu0 0.0
      %998 = vmatprep.subr.mxu0 0.0
      %999 = vmatpush1.xpose.msra.mxu0 0.0
      %1000 = vmatprep.subr.mxu0 0.0
      %1001 = vmatpush1.xpose.msra.mxu0 0.0
      %1002 = vmatprep.subr.mxu0 0.0
      %1003 = vmatpush1.xpose.msra.mxu0 0.0
      %1004 = vmatprep.subr.mxu0 0.0
      %1005 = vmatpush1.xpose.msra.mxu0 0.0
      %1006 = vmatprep.mubr.f32.mxu0 0.0
      %v1007 = vand.u32 %v308, 4294901760
      %v1008 = vsub.f32 %v308, %v1007
      %v1009 = vand.u32 %v1008, 4294901760
      %1010 = vmatmul.mubr.f32.gmra.mrb[0].mxu0 %v1009
      %v1011 = vpop.f32.mrb[0].mxu0
      %v1012 = vadd.f32 %v832, %v1011
      %v1013 = vpop.f32.mrb[0].mxu0
      %1014 = vmatprep.mubr.f32.mxu0 0.0
      %v1015 = vand.u32 %v311, 4294901760
      %v1016 = vsub.f32 %v311, %v1015
      %v1017 = vand.u32 %v1016, 4294901760
      %1018 = vmatmul.mubr.f32.gmra.mrb[0].mxu0 %v1017
      %v1019 = vpop.f32.mrb[0].mxu0
      %v1020 = vadd.f32 %v839, %v1019
      %v1021 = vpop.f32.mrb[0].mxu0
      %1022 = vmatprep.mubr.f32.mxu0 0.0
      %v1023 = vand.u32 %v314, 4294901760
      %v1024 = vsub.f32 %v314, %v1023
      %v1025 = vand.u32 %v1024, 4294901760
      %1026 = vmatmul.mubr.f32.gmra.mrb[0].mxu0 %v1025
      %v1027 = vpop.f32.mrb[0].mxu0
      %v1028 = vadd.f32 %v846, %v1027
      %v1029 = vpop.f32.mrb[0].mxu0
      %1030 = vmatprep.mubr.f32.mxu0 0.0
      %v1031 = vand.u32 %v317, 4294901760
      %v1032 = vsub.f32 %v317, %v1031
      %v1033 = vand.u32 %v1032, 4294901760
      %1034 = vmatmul.mubr.f32.gmra.mrb[0].mxu0 %v1033
      %v1035 = vpop.f32.mrb[0].mxu0
      %v1036 = vadd.f32 %v853, %v1035
      %v1037 = vpop.f32.mrb[0].mxu0
      %1038 = vmatprep.mubr.f32.mxu0 0.0
      %v1039 = vand.u32 %v320, 4294901760
      %v1040 = vsub.f32 %v320, %v1039
      %v1041 = vand.u32 %v1040, 4294901760
      %1042 = vmatmul.mubr.f32.gmra.mrb[0].mxu0 %v1041
      %v1043 = vpop.f32.mrb[0].mxu0
      %v1044 = vadd.f32 %v860, %v1043
      %v1045 = vpop.f32.mrb[0].mxu0
      %1046 = vmatprep.mubr.f32.mxu0 0.0
      %v1047 = vand.u32 %v323, 4294901760
      %v1048 = vsub.f32 %v323, %v1047
      %v1049 = vand.u32 %v1048, 4294901760
      %1050 = vmatmul.mubr.f32.gmra.mrb[0].mxu0 %v1049
      %v1051 = vpop.f32.mrb[0].mxu0
      %v1052 = vadd.f32 %v867, %v1051
      %v1053 = vpop.f32.mrb[0].mxu0
      %1054 = vmatprep.mubr.f32.mxu0 0.0
      %v1055 = vand.u32 %v326, 4294901760
      %v1056 = vsub.f32 %v326, %v1055
      %v1057 = vand.u32 %v1056, 4294901760
      %1058 = vmatmul.mubr.f32.gmra.mrb[0].mxu0 %v1057
      %v1059 = vpop.f32.mrb[0].mxu0
      %v1060 = vadd.f32 %v874, %v1059
      %v1061 = vpop.f32.mrb[0].mxu0
      %1062 = vmatprep.mubr.f32.mxu0 0.0
      %v1063 = vand.u32 %v329, 4294901760
      %v1064 = vsub.f32 %v329, %v1063
      %v1065 = vand.u32 %v1064, 4294901760
      %1066 = vmatmul.mubr.f32.gmra.mrb[0].mxu0 %v1065
      %v1067 = vpop.f32.mrb[0].mxu0
      %v1068 = vadd.f32 %v881, %v1067
      %v1069 = vpop.f32.mrb[0].mxu0
      %1070 = vmatprep.mubr.f32.mxu0 0.0
      %v1071 = vand.u32 %v332, 4294901760
      %v1072 = vsub.f32 %v332, %v1071
      %v1073 = vand.u32 %v1072, 4294901760
      %1074 = vmatmul.mubr.f32.gmra.mrb[0].mxu0 %v1073
      %v1075 = vpop.f32.mrb[0].mxu0
      %v1076 = vadd.f32 %v888, %v1075
      %v1077 = vpop.f32.mrb[0].mxu0
      %1078 = vmatprep.mubr.f32.mxu0 0.0
      %v1079 = vand.u32 %v335, 4294901760
      %v1080 = vsub.f32 %v335, %v1079
      %v1081 = vand.u32 %v1080, 4294901760
      %1082 = vmatmul.mubr.f32.gmra.mrb[0].mxu0 %v1081
      %v1083 = vpop.f32.mrb[0].mxu0
      %v1084 = vadd.f32 %v895, %v1083
      %v1085 = vpop.f32.mrb[0].mxu0
      %1086 = vmatprep.mubr.f32.mxu0 0.0
      %v1087 = vand.u32 %v338, 4294901760
      %v1088 = vsub.f32 %v338, %v1087
      %v1089 = vand.u32 %v1088, 4294901760
      %1090 = vmatmul.mubr.f32.gmra.mrb[0].mxu0 %v1089
      %v1091 = vpop.f32.mrb[0].mxu0
      %v1092 = vadd.f32 %v902, %v1091
      %v1093 = vpop.f32.mrb[0].mxu0
      %1094 = vmatprep.mubr.f32.mxu0 0.0
      %v1095 = vand.u32 %v341, 4294901760
      %v1096 = vsub.f32 %v341, %v1095
      %v1097 = vand.u32 %v1096, 4294901760
      %1098 = vmatmul.mubr.f32.gmra.mrb[0].mxu0 %v1097
      %v1099 = vpop.f32.mrb[0].mxu0
      %v1100 = vadd.f32 %v909, %v1099
      %v1101 = vpop.f32.mrb[0].mxu0
      %1102 = vmatprep.mubr.f32.mxu0 0.0
      %v1103 = vand.u32 %v344, 4294901760
      %v1104 = vsub.f32 %v344, %v1103
      %v1105 = vand.u32 %v1104, 4294901760
      %1106 = vmatmul.mubr.f32.gmra.mrb[0].mxu0 %v1105
      %v1107 = vpop.f32.mrb[0].mxu0
      %v1108 = vadd.f32 %v916, %v1107
      %v1109 = vpop.f32.mrb[0].mxu0
      %1110 = vmatprep.mubr.f32.mxu0 0.0
      %v1111 = vand.u32 %v347, 4294901760
      %v1112 = vsub.f32 %v347, %v1111
      %v1113 = vand.u32 %v1112, 4294901760
      %1114 = vmatmul.mubr.f32.gmra.mrb[0].mxu0 %v1113
      %v1115 = vpop.f32.mrb[0].mxu0
      %v1116 = vadd.f32 %v923, %v1115
      %v1117 = vpop.f32.mrb[0].mxu0
      %1118 = vmatprep.mubr.f32.mxu0 0.0
      %v1119 = vand.u32 %v350, 4294901760
      %v1120 = vsub.f32 %v350, %v1119
      %v1121 = vand.u32 %v1120, 4294901760
      %1122 = vmatmul.mubr.f32.gmra.mrb[0].mxu0 %v1121
      %v1123 = vpop.f32.mrb[0].mxu0
      %v1124 = vadd.f32 %v930, %v1123
      %v1125 = vpop.f32.mrb[0].mxu0
      %1126 = vmatprep.mubr.f32.mxu0 0.0
      %v1127 = vand.u32 %v353, 4294901760
      %v1128 = vsub.f32 %v353, %v1127
      %v1129 = vand.u32 %v1128, 4294901760
      %1130 = vmatmul.mubr.f32.gmra.mrb[0].mxu0 %v1129
      %v1131 = vpop.f32.mrb[0].mxu0
      %v1132 = vadd.f32 %v937, %v1131
      %v1133 = vpop.f32.mrb[0].mxu0
      %1134 = vdwg.mxu0
      %1135 = vmatprep.subr.mxu0 0.0
      %v1136 = vand.u32 %v356, 4294901760
      %v1137 = vsub.f32 %v356, %v1136
      %v1138 = vand.u32 %v1137, 4294901760
      %1139 = vmatpush1.xpose.msra.mxu0 %v1138
      %1140 = vmatprep.subr.mxu0 0.0
      %v1141 = vand.u32 %v359, 4294901760
      %v1142 = vsub.f32 %v359, %v1141
      %v1143 = vand.u32 %v1142, 4294901760
      %1144 = vmatpush1.xpose.msra.mxu0 %v1143
      %1145 = vmatprep.subr.mxu0 0.0
      %1146 = vmatpush1.xpose.msra.mxu0 0.0
      %1147 = vmatprep.subr.mxu0 0.0
      %1148 = vmatpush1.xpose.msra.mxu0 0.0
      %1149 = vmatprep.subr.mxu0 0.0
      %1150 = vmatpush1.xpose.msra.mxu0 0.0
      %1151 = vmatprep.subr.mxu0 0.0
      %1152 = vmatpush1.xpose.msra.mxu0 0.0
      %1153 = vmatprep.subr.mxu0 0.0
      %1154 = vmatpush1.xpose.msra.mxu0 0.0
      %1155 = vmatprep.subr.mxu0 0.0
      %1156 = vmatpush1.xpose.msra.mxu0 0.0
      %1157 = vmatprep.subr.mxu0 0.0
      %1158 = vmatpush1.xpose.msra.mxu0 0.0
      %1159 = vmatprep.subr.mxu0 0.0
      %1160 = vmatpush1.xpose.msra.mxu0 0.0
      %1161 = vmatprep.subr.mxu0 0.0
      %1162 = vmatpush1.xpose.msra.mxu0 0.0
      %1163 = vmatprep.subr.mxu0 0.0
      %1164 = vmatpush1.xpose.msra.mxu0 0.0
      %1165 = vmatprep.subr.mxu0 0.0
      %1166 = vmatpush1.xpose.msra.mxu0 0.0
      %1167 = vmatprep.subr.mxu0 0.0
      %1168 = vmatpush1.xpose.msra.mxu0 0.0
      %1169 = vmatprep.subr.mxu0 0.0
      %1170 = vmatpush1.xpose.msra.mxu0 0.0
      %1171 = vmatprep.subr.mxu0 0.0
      %1172 = vmatpush1.xpose.msra.mxu0 0.0
      %1173 = vmatprep.subr.mxu0 0.0
      %1174 = vmatpush1.xpose.msra.mxu0 0.0
      %1175 = vmatprep.subr.mxu0 0.0
      %1176 = vmatpush1.xpose.msra.mxu0 0.0
      %1177 = vmatprep.subr.mxu0 0.0
      %1178 = vmatpush1.xpose.msra.mxu0 0.0
      %1179 = vmatprep.subr.mxu0 0.0
      %1180 = vmatpush1.xpose.msra.mxu0 0.0
      %1181 = vmatprep.subr.mxu0 0.0
      %1182 = vmatpush1.xpose.msra.mxu0 0.0
      %1183 = vmatprep.subr.mxu0 0.0
      %1184 = vmatpush1.xpose.msra.mxu0 0.0
      %1185 = vmatprep.subr.mxu0 0.0
      %1186 = vmatpush1.xpose.msra.mxu0 0.0
      %1187 = vmatprep.subr.mxu0 0.0
      %1188 = vmatpush1.xpose.msra.mxu0 0.0
      %1189 = vmatprep.subr.mxu0 0.0
      %1190 = vmatpush1.xpose.msra.mxu0 0.0
      %1191 = vmatprep.subr.mxu0 0.0
      %1192 = vmatpush1.xpose.msra.mxu0 0.0
      %1193 = vmatprep.subr.mxu0 0.0
      %1194 = vmatpush1.xpose.msra.mxu0 0.0
      %1195 = vmatprep.subr.mxu0 0.0
      %1196 = vmatpush1.xpose.msra.mxu0 0.0
      %1197 = vmatprep.subr.mxu0 0.0
      %1198 = vmatpush1.xpose.msra.mxu0 0.0
      %1199 = vmatprep.subr.mxu0 0.0
      %1200 = vmatpush1.xpose.msra.mxu0 0.0
      %1201 = vmatprep.subr.mxu0 0.0
      %1202 = vmatpush1.xpose.msra.mxu0 0.0
      %1203 = vmatprep.subr.mxu0 0.0
      %1204 = vmatpush1.xpose.msra.mxu0 0.0
      %1205 = vmatprep.mubr.f32.mxu0 0.0
      %v1206 = vand.u32 %v308, 4294901760
      %1207 = vmatmul.mubr.f32.gmra.mrb[0].mxu0 %v1206
      %v1208 = vpop.f32.mrb[0].mxu0
      %v1209 = vadd.f32 %v1012, %v1208
      %v1210 = vpop.f32.mrb[0].mxu0
      %1211 = vmatprep.mubr.f32.mxu0 0.0
      %v1212 = vand.u32 %v311, 4294901760
      %1213 = vmatmul.mubr.f32.gmra.mrb[0].mxu0 %v1212
      %v1214 = vpop.f32.mrb[0].mxu0
      %v1215 = vadd.f32 %v1020, %v1214
      %v1216 = vpop.f32.mrb[0].mxu0
      %1217 = vmatprep.mubr.f32.mxu0 0.0
      %v1218 = vand.u32 %v314, 4294901760
      %1219 = vmatmul.mubr.f32.gmra.mrb[0].mxu0 %v1218
      %v1220 = vpop.f32.mrb[0].mxu0
      %v1221 = vadd.f32 %v1028, %v1220
      %v1222 = vpop.f32.mrb[0].mxu0
      %1223 = vmatprep.mubr.f32.mxu0 0.0
      %v1224 = vand.u32 %v317, 4294901760
      %1225 = vmatmul.mubr.f32.gmra.mrb[0].mxu0 %v1224
      %v1226 = vpop.f32.mrb[0].mxu0
      %v1227 = vadd.f32 %v1036, %v1226
      %v1228 = vpop.f32.mrb[0].mxu0
      %1229 = vmatprep.mubr.f32.mxu0 0.0
      %v1230 = vand.u32 %v320, 4294901760
      %1231 = vmatmul.mubr.f32.gmra.mrb[0].mxu0 %v1230
      %v1232 = vpop.f32.mrb[0].mxu0
      %v1233 = vadd.f32 %v1044, %v1232
      %v1234 = vpop.f32.mrb[0].mxu0
      %1235 = vmatprep.mubr.f32.mxu0 0.0
      %v1236 = vand.u32 %v323, 4294901760
      %1237 = vmatmul.mubr.f32.gmra.mrb[0].mxu0 %v1236
      %v1238 = vpop.f32.mrb[0].mxu0
      %v1239 = vadd.f32 %v1052, %v1238
      %v1240 = vpop.f32.mrb[0].mxu0
      %1241 = vmatprep.mubr.f32.mxu0 0.0
      %v1242 = vand.u32 %v326, 4294901760
      %1243 = vmatmul.mubr.f32.gmra.mrb[0].mxu0 %v1242
      %v1244 = vpop.f32.mrb[0].mxu0
      %v1245 = vadd.f32 %v1060, %v1244
      %v1246 = vpop.f32.mrb[0].mxu0
      %1247 = vmatprep.mubr.f32.mxu0 0.0
      %v1248 = vand.u32 %v329, 4294901760
      %1249 = vmatmul.mubr.f32.gmra.mrb[0].mxu0 %v1248
      %v1250 = vpop.f32.mrb[0].mxu0
      %v1251 = vadd.f32 %v1068, %v1250
      %v1252 = vpop.f32.mrb[0].mxu0
      %1253 = vmatprep.mubr.f32.mxu0 0.0
      %v1254 = vand.u32 %v332, 4294901760
      %1255 = vmatmul.mubr.f32.gmra.mrb[0].mxu0 %v1254
      %v1256 = vpop.f32.mrb[0].mxu0
      %v1257 = vadd.f32 %v1076, %v1256
      %v1258 = vpop.f32.mrb[0].mxu0
      %1259 = vmatprep.mubr.f32.mxu0 0.0
      %v1260 = vand.u32 %v335, 4294901760
      %1261 = vmatmul.mubr.f32.gmra.mrb[0].mxu0 %v1260
      %v1262 = vpop.f32.mrb[0].mxu0
      %v1263 = vadd.f32 %v1084, %v1262
      %v1264 = vpop.f32.mrb[0].mxu0
      %1265 = vmatprep.mubr.f32.mxu0 0.0
      %v1266 = vand.u32 %v338, 4294901760
      %1267 = vmatmul.mubr.f32.gmra.mrb[0].mxu0 %v1266
      %v1268 = vpop.f32.mrb[0].mxu0
      %v1269 = vadd.f32 %v1092, %v1268
      %v1270 = vpop.f32.mrb[0].mxu0
      %1271 = vmatprep.mubr.f32.mxu0 0.0
      %v1272 = vand.u32 %v341, 4294901760
      %1273 = vmatmul.mubr.f32.gmra.mrb[0].mxu0 %v1272
      %v1274 = vpop.f32.mrb[0].mxu0
      %v1275 = vadd.f32 %v1100, %v1274
      %v1276 = vpop.f32.mrb[0].mxu0
      %1277 = vmatprep.mubr.f32.mxu0 0.0
      %v1278 = vand.u32 %v344, 4294901760
      %1279 = vmatmul.mubr.f32.gmra.mrb[0].mxu0 %v1278
      %v1280 = vpop.f32.mrb[0].mxu0
      %v1281 = vadd.f32 %v1108, %v1280
      %v1282 = vpop.f32.mrb[0].mxu0
      %1283 = vmatprep.mubr.f32.mxu0 0.0
      %v1284 = vand.u32 %v347, 4294901760
      %1285 = vmatmul.mubr.f32.gmra.mrb[0].mxu0 %v1284
      %v1286 = vpop.f32.mrb[0].mxu0
      %v1287 = vadd.f32 %v1116, %v1286
      %v1288 = vpop.f32.mrb[0].mxu0
      %1289 = vmatprep.mubr.f32.mxu0 0.0
      %v1290 = vand.u32 %v350, 4294901760
      %1291 = vmatmul.mubr.f32.gmra.mrb[0].mxu0 %v1290
      %v1292 = vpop.f32.mrb[0].mxu0
      %v1293 = vadd.f32 %v1124, %v1292
      %v1294 = vpop.f32.mrb[0].mxu0
      %1295 = vmatprep.mubr.f32.mxu0 0.0
      %v1296 = vand.u32 %v353, 4294901760
      %1297 = vmatmul.mubr.f32.gmra.mrb[0].mxu0 %v1296
      %v1298 = vpop.f32.mrb[0].mxu0
      %v1299 = vadd.f32 %v1132, %v1298
      %v1300 = vpop.f32.mrb[0].mxu0
      %1301 = vdwg.mxu0
      %1302 = vmatprep.subr.mxu0 0.0
      %v1303 = vand.u32 %v356, 4294901760
      %1304 = vmatpush1.xpose.msra.mxu0 %v1303
      %1305 = vmatprep.subr.mxu0 0.0
      %v1306 = vand.u32 %v359, 4294901760
      %1307 = vmatpush1.xpose.msra.mxu0 %v1306
      %1308 = vmatprep.subr.mxu0 0.0
      %1309 = vmatpush1.xpose.msra.mxu0 0.0
      %1310 = vmatprep.subr.mxu0 0.0
      %1311 = vmatpush1.xpose.msra.mxu0 0.0
      %1312 = vmatprep.subr.mxu0 0.0
      %1313 = vmatpush1.xpose.msra.mxu0 0.0
      %1314 = vmatprep.subr.mxu0 0.0
      %1315 = vmatpush1.xpose.msra.mxu0 0.0
      %1316 = vmatprep.subr.mxu0 0.0
      %1317 = vmatpush1.xpose.msra.mxu0 0.0
      %1318 = vmatprep.subr.mxu0 0.0
      %1319 = vmatpush1.xpose.msra.mxu0 0.0
      %1320 = vmatprep.subr.mxu0 0.0
      %1321 = vmatpush1.xpose.msra.mxu0 0.0
      %1322 = vmatprep.subr.mxu0 0.0
      %1323 = vmatpush1.xpose.msra.mxu0 0.0
      %1324 = vmatprep.subr.mxu0 0.0
      %1325 = vmatpush1.xpose.msra.mxu0 0.0
      %1326 = vmatprep.subr.mxu0 0.0
      %1327 = vmatpush1.xpose.msra.mxu0 0.0
      %1328 = vmatprep.subr.mxu0 0.0
      %1329 = vmatpush1.xpose.msra.mxu0 0.0
      %1330 = vmatprep.subr.mxu0 0.0
      %1331 = vmatpush1.xpose.msra.mxu0 0.0
      %1332 = vmatprep.subr.mxu0 0.0
      %1333 = vmatpush1.xpose.msra.mxu0 0.0
      %1334 = vmatprep.subr.mxu0 0.0
      %1335 = vmatpush1.xpose.msra.mxu0 0.0
      %1336 = vmatprep.subr.mxu0 0.0
      %1337 = vmatpush1.xpose.msra.mxu0 0.0
      %1338 = vmatprep.subr.mxu0 0.0
      %1339 = vmatpush1.xpose.msra.mxu0 0.0
      %1340 = vmatprep.subr.mxu0 0.0
      %1341 = vmatpush1.xpose.msra.mxu0 0.0
      %1342 = vmatprep.subr.mxu0 0.0
      %1343 = vmatpush1.xpose.msra.mxu0 0.0
      %1344 = vmatprep.subr.mxu0 0.0
      %1345 = vmatpush1.xpose.msra.mxu0 0.0
      %1346 = vmatprep.subr.mxu0 0.0
      %1347 = vmatpush1.xpose.msra.mxu0 0.0
      %1348 = vmatprep.subr.mxu0 0.0
      %1349 = vmatpush1.xpose.msra.mxu0 0.0
      %1350 = vmatprep.subr.mxu0 0.0
      %1351 = vmatpush1.xpose.msra.mxu0 0.0
      %1352 = vmatprep.subr.mxu0 0.0
      %1353 = vmatpush1.xpose.msra.mxu0 0.0
      %1354 = vmatprep.subr.mxu0 0.0
      %1355 = vmatpush1.xpose.msra.mxu0 0.0
      %1356 = vmatprep.subr.mxu0 0.0
      %1357 = vmatpush1.xpose.msra.mxu0 0.0
      %1358 = vmatprep.subr.mxu0 0.0
      %1359 = vmatpush1.xpose.msra.mxu0 0.0
      %1360 = vmatprep.subr.mxu0 0.0
      %1361 = vmatpush1.xpose.msra.mxu0 0.0
      %1362 = vmatprep.subr.mxu0 0.0
      %1363 = vmatpush1.xpose.msra.mxu0 0.0
      %1364 = vmatprep.subr.mxu0 0.0
      %1365 = vmatpush1.xpose.msra.mxu0 0.0
      %1366 = vmatprep.subr.mxu0 0.0
      %1367 = vmatpush1.xpose.msra.mxu0 0.0
      %1368 = vmatprep.mubr.f32.mxu0 0.0
      %v1369 = vand.u32 %v308, 4294901760
      %1370 = vmatmul.mubr.f32.gmra.mrb[0].mxu0 %v1369
      %v1371 = vpop.f32.mrb[0].mxu0
      %v1372 = vadd.f32 %v1209, %v1371
      %v1373 = vpop.f32.mrb[0].mxu0
      %1374 = vmatprep.mubr.f32.mxu0 0.0
      %v1375 = vand.u32 %v311, 4294901760
      %1376 = vmatmul.mubr.f32.gmra.mrb[0].mxu0 %v1375
      %v1377 = vpop.f32.mrb[0].mxu0
      %v1378 = vadd.f32 %v1215, %v1377
      %v1379 = vpop.f32.mrb[0].mxu0
      %1380 = vmatprep.mubr.f32.mxu0 0.0
      %v1381 = vand.u32 %v314, 4294901760
      %1382 = vmatmul.mubr.f32.gmra.mrb[0].mxu0 %v1381
      %v1383 = vpop.f32.mrb[0].mxu0
      %v1384 = vadd.f32 %v1221, %v1383
      %v1385 = vpop.f32.mrb[0].mxu0
      %1386 = vmatprep.mubr.f32.mxu0 0.0
      %v1387 = vand.u32 %v317, 4294901760
      %1388 = vmatmul.mubr.f32.gmra.mrb[0].mxu0 %v1387
      %v1389 = vpop.f32.mrb[0].mxu0
      %v1390 = vadd.f32 %v1227, %v1389
      %v1391 = vpop.f32.mrb[0].mxu0
      %1392 = vmatprep.mubr.f32.mxu0 0.0
      %v1393 = vand.u32 %v320, 4294901760
      %1394 = vmatmul.mubr.f32.gmra.mrb[0].mxu0 %v1393
      %v1395 = vpop.f32.mrb[0].mxu0
      %v1396 = vadd.f32 %v1233, %v1395
      %v1397 = vpop.f32.mrb[0].mxu0
      %1398 = vmatprep.mubr.f32.mxu0 0.0
      %v1399 = vand.u32 %v323, 4294901760
      %1400 = vmatmul.mubr.f32.gmra.mrb[0].mxu0 %v1399
      %v1401 = vpop.f32.mrb[0].mxu0
      %v1402 = vadd.f32 %v1239, %v1401
      %v1403 = vpop.f32.mrb[0].mxu0
      %1404 = vmatprep.mubr.f32.mxu0 0.0
      %v1405 = vand.u32 %v326, 4294901760
      %1406 = vmatmul.mubr.f32.gmra.mrb[0].mxu0 %v1405
      %v1407 = vpop.f32.mrb[0].mxu0
      %v1408 = vadd.f32 %v1245, %v1407
      %v1409 = vpop.f32.mrb[0].mxu0
      %1410 = vmatprep.mubr.f32.mxu0 0.0
      %v1411 = vand.u32 %v329, 4294901760
      %1412 = vmatmul.mubr.f32.gmra.mrb[0].mxu0 %v1411
      %v1413 = vpop.f32.mrb[0].mxu0
      %v1414 = vadd.f32 %v1251, %v1413
      %v1415 = vpop.f32.mrb[0].mxu0
      %1416 = vmatprep.mubr.f32.mxu0 0.0
      %v1417 = vand.u32 %v332, 4294901760
      %1418 = vmatmul.mubr.f32.gmra.mrb[0].mxu0 %v1417
      %v1419 = vpop.f32.mrb[0].mxu0
      %v1420 = vadd.f32 %v1257, %v1419
      %v1421 = vpop.f32.mrb[0].mxu0
      %1422 = vmatprep.mubr.f32.mxu0 0.0
      %v1423 = vand.u32 %v335, 4294901760
      %1424 = vmatmul.mubr.f32.gmra.mrb[0].mxu0 %v1423
      %v1425 = vpop.f32.mrb[0].mxu0
      %v1426 = vadd.f32 %v1263, %v1425
      %v1427 = vpop.f32.mrb[0].mxu0
      %1428 = vmatprep.mubr.f32.mxu0 0.0
      %v1429 = vand.u32 %v338, 4294901760
      %1430 = vmatmul.mubr.f32.gmra.mrb[0].mxu0 %v1429
      %v1431 = vpop.f32.mrb[0].mxu0
      %v1432 = vadd.f32 %v1269, %v1431
      %v1433 = vpop.f32.mrb[0].mxu0
      %1434 = vmatprep.mubr.f32.mxu0 0.0
      %v1435 = vand.u32 %v341, 4294901760
      %1436 = vmatmul.mubr.f32.gmra.mrb[0].mxu0 %v1435
      %v1437 = vpop.f32.mrb[0].mxu0
      %v1438 = vadd.f32 %v1275, %v1437
      %v1439 = vpop.f32.mrb[0].mxu0
      %1440 = vmatprep.mubr.f32.mxu0 0.0
      %v1441 = vand.u32 %v344, 4294901760
      %1442 = vmatmul.mubr.f32.gmra.mrb[0].mxu0 %v1441
      %v1443 = vpop.f32.mrb[0].mxu0
      %v1444 = vadd.f32 %v1281, %v1443
      %v1445 = vpop.f32.mrb[0].mxu0
      %1446 = vmatprep.mubr.f32.mxu0 0.0
      %v1447 = vand.u32 %v347, 4294901760
      %1448 = vmatmul.mubr.f32.gmra.mrb[0].mxu0 %v1447
      %v1449 = vpop.f32.mrb[0].mxu0
      %v1450 = vadd.f32 %v1287, %v1449
      %v1451 = vpop.f32.mrb[0].mxu0
      %1452 = vmatprep.mubr.f32.mxu0 0.0
      %v1453 = vand.u32 %v350, 4294901760
      %1454 = vmatmul.mubr.f32.gmra.mrb[0].mxu0 %v1453
      %v1455 = vpop.f32.mrb[0].mxu0
      %v1456 = vadd.f32 %v1293, %v1455
      %v1457 = vpop.f32.mrb[0].mxu0
      %1458 = vmatprep.mubr.f32.mxu0 0.0
      %v1459 = vand.u32 %v353, 4294901760
      %1460 = vmatmul.mubr.f32.gmra.mrb[0].mxu0 %v1459
      %v1461 = vpop.f32.mrb[0].mxu0
      %v1462 = vadd.f32 %v1299, %v1461
      %v1463 = vpop.f32.mrb[0].mxu0
      %1464 = vdwg.mxu0
      %v1466 = vsel %vm306, %v284, 0
      %v1469 = vsel %vm306, %v285, 0
      %1471 = vmatprep.subr.mxu0 0.0
      %v1472 = vand.u32 %v1466, 4294901760
      %1473 = vmatpush1.xpose.msra.mxu0 %v1472
      %1474 = vmatprep.subr.mxu0 0.0
      %v1475 = vand.u32 %v1469, 4294901760
      %1476 = vmatpush1.xpose.msra.mxu0 %v1475
      %1477 = vmatprep.subr.mxu0 0.0
      %1478 = vmatpush1.xpose.msra.mxu0 0.0
      %1479 = vmatprep.subr.mxu0 0.0
      %1480 = vmatpush1.xpose.msra.mxu0 0.0
      %1481 = vmatprep.subr.mxu0 0.0
      %1482 = vmatpush1.xpose.msra.mxu0 0.0
      %1483 = vmatprep.subr.mxu0 0.0
      %1484 = vmatpush1.xpose.msra.mxu0 0.0
      %1485 = vmatprep.subr.mxu0 0.0
      %1486 = vmatpush1.xpose.msra.mxu0 0.0
      %1487 = vmatprep.subr.mxu0 0.0
      %1488 = vmatpush1.xpose.msra.mxu0 0.0
      %1489 = vmatprep.subr.mxu0 0.0
      %1490 = vmatpush1.xpose.msra.mxu0 0.0
      %1491 = vmatprep.subr.mxu0 0.0
      %1492 = vmatpush1.xpose.msra.mxu0 0.0
      %1493 = vmatprep.subr.mxu0 0.0
      %1494 = vmatpush1.xpose.msra.mxu0 0.0
      %1495 = vmatprep.subr.mxu0 0.0
      %1496 = vmatpush1.xpose.msra.mxu0 0.0
      %1497 = vmatprep.subr.mxu0 0.0
      %1498 = vmatpush1.xpose.msra.mxu0 0.0
      %1499 = vmatprep.subr.mxu0 0.0
      %1500 = vmatpush1.xpose.msra.mxu0 0.0
      %1501 = vmatprep.subr.mxu0 0.0
      %1502 = vmatpush1.xpose.msra.mxu0 0.0
      %1503 = vmatprep.subr.mxu0 0.0
      %1504 = vmatpush1.xpose.msra.mxu0 0.0
      %1505 = vmatprep.subr.mxu0 0.0
      %1506 = vmatpush1.xpose.msra.mxu0 0.0
      %1507 = vmatprep.subr.mxu0 0.0
      %1508 = vmatpush1.xpose.msra.mxu0 0.0
      %1509 = vmatprep.subr.mxu0 0.0
      %1510 = vmatpush1.xpose.msra.mxu0 0.0
      %1511 = vmatprep.subr.mxu0 0.0
      %1512 = vmatpush1.xpose.msra.mxu0 0.0
      %1513 = vmatprep.subr.mxu0 0.0
      %1514 = vmatpush1.xpose.msra.mxu0 0.0
      %1515 = vmatprep.subr.mxu0 0.0
      %1516 = vmatpush1.xpose.msra.mxu0 0.0
      %1517 = vmatprep.subr.mxu0 0.0
      %1518 = vmatpush1.xpose.msra.mxu0 0.0
      %1519 = vmatprep.subr.mxu0 0.0
      %1520 = vmatpush1.xpose.msra.mxu0 0.0
      %1521 = vmatprep.subr.mxu0 0.0
      %1522 = vmatpush1.xpose.msra.mxu0 0.0
      %1523 = vmatprep.subr.mxu0 0.0
      %1524 = vmatpush1.xpose.msra.mxu0 0.0
      %1525 = vmatprep.subr.mxu0 0.0
      %1526 = vmatpush1.xpose.msra.mxu0 0.0
      %1527 = vmatprep.subr.mxu0 0.0
      %1528 = vmatpush1.xpose.msra.mxu0 0.0
      %1529 = vmatprep.subr.mxu0 0.0
      %1530 = vmatpush1.xpose.msra.mxu0 0.0
      %1531 = vmatprep.subr.mxu0 0.0
      %1532 = vmatpush1.xpose.msra.mxu0 0.0
      %1533 = vmatprep.subr.mxu0 0.0
      %1534 = vmatpush1.xpose.msra.mxu0 0.0
      %1535 = vmatprep.subr.mxu0 0.0
      %1536 = vmatpush1.xpose.msra.mxu0 0.0
      %1537 = vmatprep.mubr.f32.mxu0 0.0
      %v1538 = vand.u32 %v308, 4294901760
      %v1539 = vsub.f32 %v308, %v1538
      %v1540 = vand.u32 %v1539, 4294901760
      %v1541 = vsub.f32 %v1539, %v1540
      %v1542 = vand.u32 %v1541, 4294901760
      %1543 = vmatmul.mubr.f32.gmra.mrb[0].mxu0 %v1542
      %v1544 = vpop.f32.mrb[0].mxu0
      %v1545 = vadd.f32 0.0, %v1544
      %v1546 = vpop.f32.mrb[0].mxu0
      %1547 = vmatprep.mubr.f32.mxu0 0.0
      %v1548 = vand.u32 %v311, 4294901760
      %v1549 = vsub.f32 %v311, %v1548
      %v1550 = vand.u32 %v1549, 4294901760
      %v1551 = vsub.f32 %v1549, %v1550
      %v1552 = vand.u32 %v1551, 4294901760
      %1553 = vmatmul.mubr.f32.gmra.mrb[0].mxu0 %v1552
      %v1554 = vpop.f32.mrb[0].mxu0
      %v1555 = vadd.f32 0.0, %v1554
      %v1556 = vpop.f32.mrb[0].mxu0
      %1557 = vmatprep.mubr.f32.mxu0 0.0
      %v1558 = vand.u32 %v314, 4294901760
      %v1559 = vsub.f32 %v314, %v1558
      %v1560 = vand.u32 %v1559, 4294901760
      %v1561 = vsub.f32 %v1559, %v1560
      %v1562 = vand.u32 %v1561, 4294901760
      %1563 = vmatmul.mubr.f32.gmra.mrb[0].mxu0 %v1562
      %v1564 = vpop.f32.mrb[0].mxu0
      %v1565 = vadd.f32 0.0, %v1564
      %v1566 = vpop.f32.mrb[0].mxu0
      %1567 = vmatprep.mubr.f32.mxu0 0.0
      %v1568 = vand.u32 %v317, 4294901760
      %v1569 = vsub.f32 %v317, %v1568
      %v1570 = vand.u32 %v1569, 4294901760
      %v1571 = vsub.f32 %v1569, %v1570
      %v1572 = vand.u32 %v1571, 4294901760
      %1573 = vmatmul.mubr.f32.gmra.mrb[0].mxu0 %v1572
      %v1574 = vpop.f32.mrb[0].mxu0
      %v1575 = vadd.f32 0.0, %v1574
      %v1576 = vpop.f32.mrb[0].mxu0
      %1577 = vmatprep.mubr.f32.mxu0 0.0
      %v1578 = vand.u32 %v320, 4294901760
      %v1579 = vsub.f32 %v320, %v1578
      %v1580 = vand.u32 %v1579, 4294901760
      %v1581 = vsub.f32 %v1579, %v1580
      %v1582 = vand.u32 %v1581, 4294901760
      %1583 = vmatmul.mubr.f32.gmra.mrb[0].mxu0 %v1582
      %v1584 = vpop.f32.mrb[0].mxu0
      %v1585 = vadd.f32 0.0, %v1584
      %v1586 = vpop.f32.mrb[0].mxu0
      %1587 = vmatprep.mubr.f32.mxu0 0.0
      %v1588 = vand.u32 %v323, 4294901760
      %v1589 = vsub.f32 %v323, %v1588
      %v1590 = vand.u32 %v1589, 4294901760
      %v1591 = vsub.f32 %v1589, %v1590
      %v1592 = vand.u32 %v1591, 4294901760
      %1593 = vmatmul.mubr.f32.gmra.mrb[0].mxu0 %v1592
      %v1594 = vpop.f32.mrb[0].mxu0
      %v1595 = vadd.f32 0.0, %v1594
      %v1596 = vpop.f32.mrb[0].mxu0
      %1597 = vmatprep.mubr.f32.mxu0 0.0
      %v1598 = vand.u32 %v326, 4294901760
      %v1599 = vsub.f32 %v326, %v1598
      %v1600 = vand.u32 %v1599, 4294901760
      %v1601 = vsub.f32 %v1599, %v1600
      %v1602 = vand.u32 %v1601, 4294901760
      %1603 = vmatmul.mubr.f32.gmra.mrb[0].mxu0 %v1602
      %v1604 = vpop.f32.mrb[0].mxu0
      %v1605 = vadd.f32 0.0, %v1604
      %v1606 = vpop.f32.mrb[0].mxu0
      %1607 = vmatprep.mubr.f32.mxu0 0.0
      %v1608 = vand.u32 %v329, 4294901760
      %v1609 = vsub.f32 %v329, %v1608
      %v1610 = vand.u32 %v1609, 4294901760
      %v1611 = vsub.f32 %v1609, %v1610
      %v1612 = vand.u32 %v1611, 4294901760
      %1613 = vmatmul.mubr.f32.gmra.mrb[0].mxu0 %v1612
      %v1614 = vpop.f32.mrb[0].mxu0
      %v1615 = vadd.f32 0.0, %v1614
      %v1616 = vpop.f32.mrb[0].mxu0
      %1617 = vmatprep.mubr.f32.mxu0 0.0
      %v1618 = vand.u32 %v332, 4294901760
      %v1619 = vsub.f32 %v332, %v1618
      %v1620 = vand.u32 %v1619, 4294901760
      %v1621 = vsub.f32 %v1619, %v1620
      %v1622 = vand.u32 %v1621, 4294901760
      %1623 = vmatmul.mubr.f32.gmra.mrb[0].mxu0 %v1622
      %v1624 = vpop.f32.mrb[0].mxu0
      %v1625 = vadd.f32 0.0, %v1624
      %v1626 = vpop.f32.mrb[0].mxu0
      %1627 = vmatprep.mubr.f32.mxu0 0.0
      %v1628 = vand.u32 %v335, 4294901760
      %v1629 = vsub.f32 %v335, %v1628
      %v1630 = vand.u32 %v1629, 4294901760
      %v1631 = vsub.f32 %v1629, %v1630
      %v1632 = vand.u32 %v1631, 4294901760
      %1633 = vmatmul.mubr.f32.gmra.mrb[0].mxu0 %v1632
      %v1634 = vpop.f32.mrb[0].mxu0
      %v1635 = vadd.f32 0.0, %v1634
      %v1636 = vpop.f32.mrb[0].mxu0
      %1637 = vmatprep.mubr.f32.mxu0 0.0
      %v1638 = vand.u32 %v338, 4294901760
      %v1639 = vsub.f32 %v338, %v1638
      %v1640 = vand.u32 %v1639, 4294901760
      %v1641 = vsub.f32 %v1639, %v1640
      %v1642 = vand.u32 %v1641, 4294901760
      %1643 = vmatmul.mubr.f32.gmra.mrb[0].mxu0 %v1642
      %v1644 = vpop.f32.mrb[0].mxu0
      %v1645 = vadd.f32 0.0, %v1644
      %v1646 = vpop.f32.mrb[0].mxu0
      %1647 = vmatprep.mubr.f32.mxu0 0.0
      %v1648 = vand.u32 %v341, 4294901760
      %v1649 = vsub.f32 %v341, %v1648
      %v1650 = vand.u32 %v1649, 4294901760
      %v1651 = vsub.f32 %v1649, %v1650
      %v1652 = vand.u32 %v1651, 4294901760
      %1653 = vmatmul.mubr.f32.gmra.mrb[0].mxu0 %v1652
      %v1654 = vpop.f32.mrb[0].mxu0
      %v1655 = vadd.f32 0.0, %v1654
      %v1656 = vpop.f32.mrb[0].mxu0
      %1657 = vmatprep.mubr.f32.mxu0 0.0
      %v1658 = vand.u32 %v344, 4294901760
      %v1659 = vsub.f32 %v344, %v1658
      %v1660 = vand.u32 %v1659, 4294901760
      %v1661 = vsub.f32 %v1659, %v1660
      %v1662 = vand.u32 %v1661, 4294901760
      %1663 = vmatmul.mubr.f32.gmra.mrb[0].mxu0 %v1662
      %v1664 = vpop.f32.mrb[0].mxu0
      %v1665 = vadd.f32 0.0, %v1664
      %v1666 = vpop.f32.mrb[0].mxu0
      %1667 = vmatprep.mubr.f32.mxu0 0.0
      %v1668 = vand.u32 %v347, 4294901760
      %v1669 = vsub.f32 %v347, %v1668
      %v1670 = vand.u32 %v1669, 4294901760
      %v1671 = vsub.f32 %v1669, %v1670
      %v1672 = vand.u32 %v1671, 4294901760
      %1673 = vmatmul.mubr.f32.gmra.mrb[0].mxu0 %v1672
      %v1674 = vpop.f32.mrb[0].mxu0
      %v1675 = vadd.f32 0.0, %v1674
      %v1676 = vpop.f32.mrb[0].mxu0
      %1677 = vmatprep.mubr.f32.mxu0 0.0
      %v1678 = vand.u32 %v350, 4294901760
      %v1679 = vsub.f32 %v350, %v1678
      %v1680 = vand.u32 %v1679, 4294901760
      %v1681 = vsub.f32 %v1679, %v1680
      %v1682 = vand.u32 %v1681, 4294901760
      %1683 = vmatmul.mubr.f32.gmra.mrb[0].mxu0 %v1682
      %v1684 = vpop.f32.mrb[0].mxu0
      %v1685 = vadd.f32 0.0, %v1684
      %v1686 = vpop.f32.mrb[0].mxu0
      %1687 = vmatprep.mubr.f32.mxu0 0.0
      %v1688 = vand.u32 %v353, 4294901760
      %v1689 = vsub.f32 %v353, %v1688
      %v1690 = vand.u32 %v1689, 4294901760
      %v1691 = vsub.f32 %v1689, %v1690
      %v1692 = vand.u32 %v1691, 4294901760
      %1693 = vmatmul.mubr.f32.gmra.mrb[0].mxu0 %v1692
      %v1694 = vpop.f32.mrb[0].mxu0
      %v1695 = vadd.f32 0.0, %v1694
      %v1696 = vpop.f32.mrb[0].mxu0
      %1697 = vdwg.mxu0
      %1698 = vmatprep.subr.mxu0 0.0
      %v1699 = vand.u32 %v1466, 4294901760
      %v1700 = vsub.f32 %v1466, %v1699
      %v1701 = vand.u32 %v1700, 4294901760
      %v1702 = vsub.f32 %v1700, %v1701
      %v1703 = vand.u32 %v1702, 4294901760
      %1704 = vmatpush1.xpose.msra.mxu0 %v1703
      %1705 = vmatprep.subr.mxu0 0.0
      %v1706 = vand.u32 %v1469, 4294901760
      %v1707 = vsub.f32 %v1469, %v1706
      %v1708 = vand.u32 %v1707, 4294901760
      %v1709 = vsub.f32 %v1707, %v1708
      %v1710 = vand.u32 %v1709, 4294901760
      %1711 = vmatpush1.xpose.msra.mxu0 %v1710
      %1712 = vmatprep.subr.mxu0 0.0
      %1713 = vmatpush1.xpose.msra.mxu0 0.0
      %1714 = vmatprep.subr.mxu0 0.0
      %1715 = vmatpush1.xpose.msra.mxu0 0.0
      %1716 = vmatprep.subr.mxu0 0.0
      %1717 = vmatpush1.xpose.msra.mxu0 0.0
      %1718 = vmatprep.subr.mxu0 0.0
      %1719 = vmatpush1.xpose.msra.mxu0 0.0
      %1720 = vmatprep.subr.mxu0 0.0
      %1721 = vmatpush1.xpose.msra.mxu0 0.0
      %1722 = vmatprep.subr.mxu0 0.0
      %1723 = vmatpush1.xpose.msra.mxu0 0.0
      %1724 = vmatprep.subr.mxu0 0.0
      %1725 = vmatpush1.xpose.msra.mxu0 0.0
      %1726 = vmatprep.subr.mxu0 0.0
      %1727 = vmatpush1.xpose.msra.mxu0 0.0
      %1728 = vmatprep.subr.mxu0 0.0
      %1729 = vmatpush1.xpose.msra.mxu0 0.0
      %1730 = vmatprep.subr.mxu0 0.0
      %1731 = vmatpush1.xpose.msra.mxu0 0.0
      %1732 = vmatprep.subr.mxu0 0.0
      %1733 = vmatpush1.xpose.msra.mxu0 0.0
      %1734 = vmatprep.subr.mxu0 0.0
      %1735 = vmatpush1.xpose.msra.mxu0 0.0
      %1736 = vmatprep.subr.mxu0 0.0
      %1737 = vmatpush1.xpose.msra.mxu0 0.0
      %1738 = vmatprep.subr.mxu0 0.0
      %1739 = vmatpush1.xpose.msra.mxu0 0.0
      %1740 = vmatprep.subr.mxu0 0.0
      %1741 = vmatpush1.xpose.msra.mxu0 0.0
      %1742 = vmatprep.subr.mxu0 0.0
      %1743 = vmatpush1.xpose.msra.mxu0 0.0
      %1744 = vmatprep.subr.mxu0 0.0
      %1745 = vmatpush1.xpose.msra.mxu0 0.0
      %1746 = vmatprep.subr.mxu0 0.0
      %1747 = vmatpush1.xpose.msra.mxu0 0.0
      %1748 = vmatprep.subr.mxu0 0.0
      %1749 = vmatpush1.xpose.msra.mxu0 0.0
      %1750 = vmatprep.subr.mxu0 0.0
      %1751 = vmatpush1.xpose.msra.mxu0 0.0
      %1752 = vmatprep.subr.mxu0 0.0
      %1753 = vmatpush1.xpose.msra.mxu0 0.0
      %1754 = vmatprep.subr.mxu0 0.0
      %1755 = vmatpush1.xpose.msra.mxu0 0.0
      %1756 = vmatprep.subr.mxu0 0.0
      %1757 = vmatpush1.xpose.msra.mxu0 0.0
      %1758 = vmatprep.subr.mxu0 0.0
      %1759 = vmatpush1.xpose.msra.mxu0 0.0
      %1760 = vmatprep.subr.mxu0 0.0
      %1761 = vmatpush1.xpose.msra.mxu0 0.0
      %1762 = vmatprep.subr.mxu0 0.0
      %1763 = vmatpush1.xpose.msra.mxu0 0.0
      %1764 = vmatprep.subr.mxu0 0.0
      %1765 = vmatpush1.xpose.msra.mxu0 0.0
      %1766 = vmatprep.subr.mxu0 0.0
      %1767 = vmatpush1.xpose.msra.mxu0 0.0
      %1768 = vmatprep.subr.mxu0 0.0
      %1769 = vmatpush1.xpose.msra.mxu0 0.0
      %1770 = vmatprep.subr.mxu0 0.0
      %1771 = vmatpush1.xpose.msra.mxu0 0.0
      %1772 = vmatprep.mubr.f32.mxu0 0.0
      %v1773 = vand.u32 %v308, 4294901760
      %1774 = vmatmul.mubr.f32.gmra.mrb[0].mxu0 %v1773
      %v1775 = vpop.f32.mrb[0].mxu0
      %v1776 = vadd.f32 %v1545, %v1775
      %v1777 = vpop.f32.mrb[0].mxu0
      %1778 = vmatprep.mubr.f32.mxu0 0.0
      %v1779 = vand.u32 %v311, 4294901760
      %1780 = vmatmul.mubr.f32.gmra.mrb[0].mxu0 %v1779
      %v1781 = vpop.f32.mrb[0].mxu0
      %v1782 = vadd.f32 %v1555, %v1781
      %v1783 = vpop.f32.mrb[0].mxu0
      %1784 = vmatprep.mubr.f32.mxu0 0.0
      %v1785 = vand.u32 %v314, 4294901760
      %1786 = vmatmul.mubr.f32.gmra.mrb[0].mxu0 %v1785
      %v1787 = vpop.f32.mrb[0].mxu0
      %v1788 = vadd.f32 %v1565, %v1787
      %v1789 = vpop.f32.mrb[0].mxu0
      %1790 = vmatprep.mubr.f32.mxu0 0.0
      %v1791 = vand.u32 %v317, 4294901760
      %1792 = vmatmul.mubr.f32.gmra.mrb[0].mxu0 %v1791
      %v1793 = vpop.f32.mrb[0].mxu0
      %v1794 = vadd.f32 %v1575, %v1793
      %v1795 = vpop.f32.mrb[0].mxu0
      %1796 = vmatprep.mubr.f32.mxu0 0.0
      %v1797 = vand.u32 %v320, 4294901760
      %1798 = vmatmul.mubr.f32.gmra.mrb[0].mxu0 %v1797
      %v1799 = vpop.f32.mrb[0].mxu0
      %v1800 = vadd.f32 %v1585, %v1799
      %v1801 = vpop.f32.mrb[0].mxu0
      %1802 = vmatprep.mubr.f32.mxu0 0.0
      %v1803 = vand.u32 %v323, 4294901760
      %1804 = vmatmul.mubr.f32.gmra.mrb[0].mxu0 %v1803
      %v1805 = vpop.f32.mrb[0].mxu0
      %v1806 = vadd.f32 %v1595, %v1805
      %v1807 = vpop.f32.mrb[0].mxu0
      %1808 = vmatprep.mubr.f32.mxu0 0.0
      %v1809 = vand.u32 %v326, 4294901760
      %1810 = vmatmul.mubr.f32.gmra.mrb[0].mxu0 %v1809
      %v1811 = vpop.f32.mrb[0].mxu0
      %v1812 = vadd.f32 %v1605, %v1811
      %v1813 = vpop.f32.mrb[0].mxu0
      %1814 = vmatprep.mubr.f32.mxu0 0.0
      %v1815 = vand.u32 %v329, 4294901760
      %1816 = vmatmul.mubr.f32.gmra.mrb[0].mxu0 %v1815
      %v1817 = vpop.f32.mrb[0].mxu0
      %v1818 = vadd.f32 %v1615, %v1817
      %v1819 = vpop.f32.mrb[0].mxu0
      %1820 = vmatprep.mubr.f32.mxu0 0.0
      %v1821 = vand.u32 %v332, 4294901760
      %1822 = vmatmul.mubr.f32.gmra.mrb[0].mxu0 %v1821
      %v1823 = vpop.f32.mrb[0].mxu0
      %v1824 = vadd.f32 %v1625, %v1823
      %v1825 = vpop.f32.mrb[0].mxu0
      %1826 = vmatprep.mubr.f32.mxu0 0.0
      %v1827 = vand.u32 %v335, 4294901760
      %1828 = vmatmul.mubr.f32.gmra.mrb[0].mxu0 %v1827
      %v1829 = vpop.f32.mrb[0].mxu0
      %v1830 = vadd.f32 %v1635, %v1829
      %v1831 = vpop.f32.mrb[0].mxu0
      %1832 = vmatprep.mubr.f32.mxu0 0.0
      %v1833 = vand.u32 %v338, 4294901760
      %1834 = vmatmul.mubr.f32.gmra.mrb[0].mxu0 %v1833
      %v1835 = vpop.f32.mrb[0].mxu0
      %v1836 = vadd.f32 %v1645, %v1835
      %v1837 = vpop.f32.mrb[0].mxu0
      %1838 = vmatprep.mubr.f32.mxu0 0.0
      %v1839 = vand.u32 %v341, 4294901760
      %1840 = vmatmul.mubr.f32.gmra.mrb[0].mxu0 %v1839
      %v1841 = vpop.f32.mrb[0].mxu0
      %v1842 = vadd.f32 %v1655, %v1841
      %v1843 = vpop.f32.mrb[0].mxu0
      %1844 = vmatprep.mubr.f32.mxu0 0.0
      %v1845 = vand.u32 %v344, 4294901760
      %1846 = vmatmul.mubr.f32.gmra.mrb[0].mxu0 %v1845
      %v1847 = vpop.f32.mrb[0].mxu0
      %v1848 = vadd.f32 %v1665, %v1847
      %v1849 = vpop.f32.mrb[0].mxu0
      %1850 = vmatprep.mubr.f32.mxu0 0.0
      %v1851 = vand.u32 %v347, 4294901760
      %1852 = vmatmul.mubr.f32.gmra.mrb[0].mxu0 %v1851
      %v1853 = vpop.f32.mrb[0].mxu0
      %v1854 = vadd.f32 %v1675, %v1853
      %v1855 = vpop.f32.mrb[0].mxu0
      %1856 = vmatprep.mubr.f32.mxu0 0.0
      %v1857 = vand.u32 %v350, 4294901760
      %1858 = vmatmul.mubr.f32.gmra.mrb[0].mxu0 %v1857
      %v1859 = vpop.f32.mrb[0].mxu0
      %v1860 = vadd.f32 %v1685, %v1859
      %v1861 = vpop.f32.mrb[0].mxu0
      %1862 = vmatprep.mubr.f32.mxu0 0.0
      %v1863 = vand.u32 %v353, 4294901760
      %1864 = vmatmul.mubr.f32.gmra.mrb[0].mxu0 %v1863
      %v1865 = vpop.f32.mrb[0].mxu0
      %v1866 = vadd.f32 %v1695, %v1865
      %v1867 = vpop.f32.mrb[0].mxu0
      %1868 = vdwg.mxu0
      %1869 = vmatprep.subr.mxu0 0.0
      %v1870 = vand.u32 %v1466, 4294901760
      %v1871 = vsub.f32 %v1466, %v1870
      %1872 = vmatpush1.xpose.msra.mxu0 %v1871
      %1873 = vmatprep.subr.mxu0 0.0
      %v1874 = vand.u32 %v1469, 4294901760
      %v1875 = vsub.f32 %v1469, %v1874
      %1876 = vmatpush1.xpose.msra.mxu0 %v1875
      %1877 = vmatprep.subr.mxu0 0.0
      %1878 = vmatpush1.xpose.msra.mxu0 0.0
      %1879 = vmatprep.subr.mxu0 0.0
      %1880 = vmatpush1.xpose.msra.mxu0 0.0
      %1881 = vmatprep.subr.mxu0 0.0
      %1882 = vmatpush1.xpose.msra.mxu0 0.0
      %1883 = vmatprep.subr.mxu0 0.0
      %1884 = vmatpush1.xpose.msra.mxu0 0.0
      %1885 = vmatprep.subr.mxu0 0.0
      %1886 = vmatpush1.xpose.msra.mxu0 0.0
      %1887 = vmatprep.subr.mxu0 0.0
      %1888 = vmatpush1.xpose.msra.mxu0 0.0
      %1889 = vmatprep.subr.mxu0 0.0
      %1890 = vmatpush1.xpose.msra.mxu0 0.0
      %1891 = vmatprep.subr.mxu0 0.0
      %1892 = vmatpush1.xpose.msra.mxu0 0.0
      %1893 = vmatprep.subr.mxu0 0.0
      %1894 = vmatpush1.xpose.msra.mxu0 0.0
      %1895 = vmatprep.subr.mxu0 0.0
      %1896 = vmatpush1.xpose.msra.mxu0 0.0
      %1897 = vmatprep.subr.mxu0 0.0
      %1898 = vmatpush1.xpose.msra.mxu0 0.0
      %1899 = vmatprep.subr.mxu0 0.0
      %1900 = vmatpush1.xpose.msra.mxu0 0.0
      %1901 = vmatprep.subr.mxu0 0.0
      %1902 = vmatpush1.xpose.msra.mxu0 0.0
      %1903 = vmatprep.subr.mxu0 0.0
      %1904 = vmatpush1.xpose.msra.mxu0 0.0
      %1905 = vmatprep.subr.mxu0 0.0
      %1906 = vmatpush1.xpose.msra.mxu0 0.0
      %1907 = vmatprep.subr.mxu0 0.0
      %1908 = vmatpush1.xpose.msra.mxu0 0.0
      %1909 = vmatprep.subr.mxu0 0.0
      %1910 = vmatpush1.xpose.msra.mxu0 0.0
      %1911 = vmatprep.subr.mxu0 0.0
      %1912 = vmatpush1.xpose.msra.mxu0 0.0
      %1913 = vmatprep.subr.mxu0 0.0
      %1914 = vmatpush1.xpose.msra.mxu0 0.0
      %1915 = vmatprep.subr.mxu0 0.0
      %1916 = vmatpush1.xpose.msra.mxu0 0.0
      %1917 = vmatprep.subr.mxu0 0.0
      %1918 = vmatpush1.xpose.msra.mxu0 0.0
      %1919 = vmatprep.subr.mxu0 0.0
      %1920 = vmatpush1.xpose.msra.mxu0 0.0
      %1921 = vmatprep.subr.mxu0 0.0
      %1922 = vmatpush1.xpose.msra.mxu0 0.0
      %1923 = vmatprep.subr.mxu0 0.0
      %1924 = vmatpush1.xpose.msra.mxu0 0.0
      %1925 = vmatprep.subr.mxu0 0.0
      %1926 = vmatpush1.xpose.msra.mxu0 0.0
      %1927 = vmatprep.subr.mxu0 0.0
      %1928 = vmatpush1.xpose.msra.mxu0 0.0
      %1929 = vmatprep.subr.mxu0 0.0
      %1930 = vmatpush1.xpose.msra.mxu0 0.0
      %1931 = vmatprep.subr.mxu0 0.0
      %1932 = vmatpush1.xpose.msra.mxu0 0.0
      %1933 = vmatprep.subr.mxu0 0.0
      %1934 = vmatpush1.xpose.msra.mxu0 0.0
      %1935 = vmatprep.subr.mxu0 0.0
      %1936 = vmatpush1.xpose.msra.mxu0 0.0
      %1937 = vmatprep.mubr.f32.mxu0 0.0
      %v1938 = vand.u32 %v308, 4294901760
      %v1939 = vsub.f32 %v308, %v1938
      %1940 = vmatmul.mubr.f32.gmra.mrb[0].mxu0 %v1939
      %v1941 = vpop.f32.mrb[0].mxu0
      %v1942 = vadd.f32 %v1776, %v1941
      %v1943 = vpop.f32.mrb[0].mxu0
      %1944 = vmatprep.mubr.f32.mxu0 0.0
      %v1945 = vand.u32 %v311, 4294901760
      %v1946 = vsub.f32 %v311, %v1945
      %1947 = vmatmul.mubr.f32.gmra.mrb[0].mxu0 %v1946
      %v1948 = vpop.f32.mrb[0].mxu0
      %v1949 = vadd.f32 %v1782, %v1948
      %v1950 = vpop.f32.mrb[0].mxu0
      %1951 = vmatprep.mubr.f32.mxu0 0.0
      %v1952 = vand.u32 %v314, 4294901760
      %v1953 = vsub.f32 %v314, %v1952
      %1954 = vmatmul.mubr.f32.gmra.mrb[0].mxu0 %v1953
      %v1955 = vpop.f32.mrb[0].mxu0
      %v1956 = vadd.f32 %v1788, %v1955
      %v1957 = vpop.f32.mrb[0].mxu0
      %1958 = vmatprep.mubr.f32.mxu0 0.0
      %v1959 = vand.u32 %v317, 4294901760
      %v1960 = vsub.f32 %v317, %v1959
      %1961 = vmatmul.mubr.f32.gmra.mrb[0].mxu0 %v1960
      %v1962 = vpop.f32.mrb[0].mxu0
      %v1963 = vadd.f32 %v1794, %v1962
      %v1964 = vpop.f32.mrb[0].mxu0
      %1965 = vmatprep.mubr.f32.mxu0 0.0
      %v1966 = vand.u32 %v320, 4294901760
      %v1967 = vsub.f32 %v320, %v1966
      %1968 = vmatmul.mubr.f32.gmra.mrb[0].mxu0 %v1967
      %v1969 = vpop.f32.mrb[0].mxu0
      %v1970 = vadd.f32 %v1800, %v1969
      %v1971 = vpop.f32.mrb[0].mxu0
      %1972 = vmatprep.mubr.f32.mxu0 0.0
      %v1973 = vand.u32 %v323, 4294901760
      %v1974 = vsub.f32 %v323, %v1973
      %1975 = vmatmul.mubr.f32.gmra.mrb[0].mxu0 %v1974
      %v1976 = vpop.f32.mrb[0].mxu0
      %v1977 = vadd.f32 %v1806, %v1976
      %v1978 = vpop.f32.mrb[0].mxu0
      %1979 = vmatprep.mubr.f32.mxu0 0.0
      %v1980 = vand.u32 %v326, 4294901760
      %v1981 = vsub.f32 %v326, %v1980
      %1982 = vmatmul.mubr.f32.gmra.mrb[0].mxu0 %v1981
      %v1983 = vpop.f32.mrb[0].mxu0
      %v1984 = vadd.f32 %v1812, %v1983
      %v1985 = vpop.f32.mrb[0].mxu0
      %1986 = vmatprep.mubr.f32.mxu0 0.0
      %v1987 = vand.u32 %v329, 4294901760
      %v1988 = vsub.f32 %v329, %v1987
      %1989 = vmatmul.mubr.f32.gmra.mrb[0].mxu0 %v1988
      %v1990 = vpop.f32.mrb[0].mxu0
      %v1991 = vadd.f32 %v1818, %v1990
      %v1992 = vpop.f32.mrb[0].mxu0
      %1993 = vmatprep.mubr.f32.mxu0 0.0
      %v1994 = vand.u32 %v332, 4294901760
      %v1995 = vsub.f32 %v332, %v1994
      %1996 = vmatmul.mubr.f32.gmra.mrb[0].mxu0 %v1995
      %v1997 = vpop.f32.mrb[0].mxu0
      %v1998 = vadd.f32 %v1824, %v1997
      %v1999 = vpop.f32.mrb[0].mxu0
      %2000 = vmatprep.mubr.f32.mxu0 0.0
      %v2001 = vand.u32 %v335, 4294901760
      %v2002 = vsub.f32 %v335, %v2001
      %2003 = vmatmul.mubr.f32.gmra.mrb[0].mxu0 %v2002
      %v2004 = vpop.f32.mrb[0].mxu0
      %v2005 = vadd.f32 %v1830, %v2004
      %v2006 = vpop.f32.mrb[0].mxu0
      %2007 = vmatprep.mubr.f32.mxu0 0.0
      %v2008 = vand.u32 %v338, 4294901760
      %v2009 = vsub.f32 %v338, %v2008
      %2010 = vmatmul.mubr.f32.gmra.mrb[0].mxu0 %v2009
      %v2011 = vpop.f32.mrb[0].mxu0
      %v2012 = vadd.f32 %v1836, %v2011
      %v2013 = vpop.f32.mrb[0].mxu0
      %2014 = vmatprep.mubr.f32.mxu0 0.0
      %v2015 = vand.u32 %v341, 4294901760
      %v2016 = vsub.f32 %v341, %v2015
      %2017 = vmatmul.mubr.f32.gmra.mrb[0].mxu0 %v2016
      %v2018 = vpop.f32.mrb[0].mxu0
      %v2019 = vadd.f32 %v1842, %v2018
      %v2020 = vpop.f32.mrb[0].mxu0
      %2021 = vmatprep.mubr.f32.mxu0 0.0
      %v2022 = vand.u32 %v344, 4294901760
      %v2023 = vsub.f32 %v344, %v2022
      %2024 = vmatmul.mubr.f32.gmra.mrb[0].mxu0 %v2023
      %v2025 = vpop.f32.mrb[0].mxu0
      %v2026 = vadd.f32 %v1848, %v2025
      %v2027 = vpop.f32.mrb[0].mxu0
      %2028 = vmatprep.mubr.f32.mxu0 0.0
      %v2029 = vand.u32 %v347, 4294901760
      %v2030 = vsub.f32 %v347, %v2029
      %2031 = vmatmul.mubr.f32.gmra.mrb[0].mxu0 %v2030
      %v2032 = vpop.f32.mrb[0].mxu0
      %v2033 = vadd.f32 %v1854, %v2032
      %v2034 = vpop.f32.mrb[0].mxu0
      %2035 = vmatprep.mubr.f32.mxu0 0.0
      %v2036 = vand.u32 %v350, 4294901760
      %v2037 = vsub.f32 %v350, %v2036
      %2038 = vmatmul.mubr.f32.gmra.mrb[0].mxu0 %v2037
      %v2039 = vpop.f32.mrb[0].mxu0
      %v2040 = vadd.f32 %v1860, %v2039
      %v2041 = vpop.f32.mrb[0].mxu0
      %2042 = vmatprep.mubr.f32.mxu0 0.0
      %v2043 = vand.u32 %v353, 4294901760
      %v2044 = vsub.f32 %v353, %v2043
      %2045 = vmatmul.mubr.f32.gmra.mrb[0].mxu0 %v2044
      %v2046 = vpop.f32.mrb[0].mxu0
      %v2047 = vadd.f32 %v1866, %v2046
      %v2048 = vpop.f32.mrb[0].mxu0
      %2049 = vdwg.mxu0
      %2050 = vmatprep.subr.mxu0 0.0
      %v2051 = vand.u32 %v1466, 4294901760
      %2052 = vmatpush1.xpose.msra.mxu0 %v2051
      %2053 = vmatprep.subr.mxu0 0.0
      %v2054 = vand.u32 %v1469, 4294901760
      %2055 = vmatpush1.xpose.msra.mxu0 %v2054
      %2056 = vmatprep.subr.mxu0 0.0
      %2057 = vmatpush1.xpose.msra.mxu0 0.0
      %2058 = vmatprep.subr.mxu0 0.0
      %2059 = vmatpush1.xpose.msra.mxu0 0.0
      %2060 = vmatprep.subr.mxu0 0.0
      %2061 = vmatpush1.xpose.msra.mxu0 0.0
      %2062 = vmatprep.subr.mxu0 0.0
      %2063 = vmatpush1.xpose.msra.mxu0 0.0
      %2064 = vmatprep.subr.mxu0 0.0
      %2065 = vmatpush1.xpose.msra.mxu0 0.0
      %2066 = vmatprep.subr.mxu0 0.0
      %2067 = vmatpush1.xpose.msra.mxu0 0.0
      %2068 = vmatprep.subr.mxu0 0.0
      %2069 = vmatpush1.xpose.msra.mxu0 0.0
      %2070 = vmatprep.subr.mxu0 0.0
      %2071 = vmatpush1.xpose.msra.mxu0 0.0
      %2072 = vmatprep.subr.mxu0 0.0
      %2073 = vmatpush1.xpose.msra.mxu0 0.0
      %2074 = vmatprep.subr.mxu0 0.0
      %2075 = vmatpush1.xpose.msra.mxu0 0.0
      %2076 = vmatprep.subr.mxu0 0.0
      %2077 = vmatpush1.xpose.msra.mxu0 0.0
      %2078 = vmatprep.subr.mxu0 0.0
      %2079 = vmatpush1.xpose.msra.mxu0 0.0
      %2080 = vmatprep.subr.mxu0 0.0
      %2081 = vmatpush1.xpose.msra.mxu0 0.0
      %2082 = vmatprep.subr.mxu0 0.0
      %2083 = vmatpush1.xpose.msra.mxu0 0.0
      %2084 = vmatprep.subr.mxu0 0.0
      %2085 = vmatpush1.xpose.msra.mxu0 0.0
      %2086 = vmatprep.subr.mxu0 0.0
      %2087 = vmatpush1.xpose.msra.mxu0 0.0
      %2088 = vmatprep.subr.mxu0 0.0
      %2089 = vmatpush1.xpose.msra.mxu0 0.0
      %2090 = vmatprep.subr.mxu0 0.0
      %2091 = vmatpush1.xpose.msra.mxu0 0.0
      %2092 = vmatprep.subr.mxu0 0.0
      %2093 = vmatpush1.xpose.msra.mxu0 0.0
      %2094 = vmatprep.subr.mxu0 0.0
      %2095 = vmatpush1.xpose.msra.mxu0 0.0
      %2096 = vmatprep.subr.mxu0 0.0
      %2097 = vmatpush1.xpose.msra.mxu0 0.0
      %2098 = vmatprep.subr.mxu0 0.0
      %2099 = vmatpush1.xpose.msra.mxu0 0.0
      %2100 = vmatprep.subr.mxu0 0.0
      %2101 = vmatpush1.xpose.msra.mxu0 0.0
      %2102 = vmatprep.subr.mxu0 0.0
      %2103 = vmatpush1.xpose.msra.mxu0 0.0
      %2104 = vmatprep.subr.mxu0 0.0
      %2105 = vmatpush1.xpose.msra.mxu0 0.0
      %2106 = vmatprep.subr.mxu0 0.0
      %2107 = vmatpush1.xpose.msra.mxu0 0.0
      %2108 = vmatprep.subr.mxu0 0.0
      %2109 = vmatpush1.xpose.msra.mxu0 0.0
      %2110 = vmatprep.subr.mxu0 0.0
      %2111 = vmatpush1.xpose.msra.mxu0 0.0
      %2112 = vmatprep.subr.mxu0 0.0
      %2113 = vmatpush1.xpose.msra.mxu0 0.0
      %2114 = vmatprep.subr.mxu0 0.0
      %2115 = vmatpush1.xpose.msra.mxu0 0.0
      %2116 = vmatprep.mubr.f32.mxu0 0.0
      %v2117 = vand.u32 %v308, 4294901760
      %v2118 = vsub.f32 %v308, %v2117
      %v2119 = vand.u32 %v2118, 4294901760
      %2120 = vmatmul.mubr.f32.gmra.mrb[0].mxu0 %v2119
      %v2121 = vpop.f32.mrb[0].mxu0
      %v2122 = vadd.f32 %v1942, %v2121
      %v2123 = vpop.f32.mrb[0].mxu0
      %2124 = vmatprep.mubr.f32.mxu0 0.0
      %v2125 = vand.u32 %v311, 4294901760
      %v2126 = vsub.f32 %v311, %v2125
      %v2127 = vand.u32 %v2126, 4294901760
      %2128 = vmatmul.mubr.f32.gmra.mrb[0].mxu0 %v2127
      %v2129 = vpop.f32.mrb[0].mxu0
      %v2130 = vadd.f32 %v1949, %v2129
      %v2131 = vpop.f32.mrb[0].mxu0
      %2132 = vmatprep.mubr.f32.mxu0 0.0
      %v2133 = vand.u32 %v314, 4294901760
      %v2134 = vsub.f32 %v314, %v2133
      %v2135 = vand.u32 %v2134, 4294901760
      %2136 = vmatmul.mubr.f32.gmra.mrb[0].mxu0 %v2135
      %v2137 = vpop.f32.mrb[0].mxu0
      %v2138 = vadd.f32 %v1956, %v2137
      %v2139 = vpop.f32.mrb[0].mxu0
      %2140 = vmatprep.mubr.f32.mxu0 0.0
      %v2141 = vand.u32 %v317, 4294901760
      %v2142 = vsub.f32 %v317, %v2141
      %v2143 = vand.u32 %v2142, 4294901760
      %2144 = vmatmul.mubr.f32.gmra.mrb[0].mxu0 %v2143
      %v2145 = vpop.f32.mrb[0].mxu0
      %v2146 = vadd.f32 %v1963, %v2145
      %v2147 = vpop.f32.mrb[0].mxu0
      %2148 = vmatprep.mubr.f32.mxu0 0.0
      %v2149 = vand.u32 %v320, 4294901760
      %v2150 = vsub.f32 %v320, %v2149
      %v2151 = vand.u32 %v2150, 4294901760
      %2152 = vmatmul.mubr.f32.gmra.mrb[0].mxu0 %v2151
      %v2153 = vpop.f32.mrb[0].mxu0
      %v2154 = vadd.f32 %v1970, %v2153
      %v2155 = vpop.f32.mrb[0].mxu0
      %2156 = vmatprep.mubr.f32.mxu0 0.0
      %v2157 = vand.u32 %v323, 4294901760
      %v2158 = vsub.f32 %v323, %v2157
      %v2159 = vand.u32 %v2158, 4294901760
      %2160 = vmatmul.mubr.f32.gmra.mrb[0].mxu0 %v2159
      %v2161 = vpop.f32.mrb[0].mxu0
      %v2162 = vadd.f32 %v1977, %v2161
      %v2163 = vpop.f32.mrb[0].mxu0
      %2164 = vmatprep.mubr.f32.mxu0 0.0
      %v2165 = vand.u32 %v326, 4294901760
      %v2166 = vsub.f32 %v326, %v2165
      %v2167 = vand.u32 %v2166, 4294901760
      %2168 = vmatmul.mubr.f32.gmra.mrb[0].mxu0 %v2167
      %v2169 = vpop.f32.mrb[0].mxu0
      %v2170 = vadd.f32 %v1984, %v2169
      %v2171 = vpop.f32.mrb[0].mxu0
      %2172 = vmatprep.mubr.f32.mxu0 0.0
      %v2173 = vand.u32 %v329, 4294901760
      %v2174 = vsub.f32 %v329, %v2173
      %v2175 = vand.u32 %v2174, 4294901760
      %2176 = vmatmul.mubr.f32.gmra.mrb[0].mxu0 %v2175
      %v2177 = vpop.f32.mrb[0].mxu0
      %v2178 = vadd.f32 %v1991, %v2177
      %v2179 = vpop.f32.mrb[0].mxu0
      %2180 = vmatprep.mubr.f32.mxu0 0.0
      %v2181 = vand.u32 %v332, 4294901760
      %v2182 = vsub.f32 %v332, %v2181
      %v2183 = vand.u32 %v2182, 4294901760
      %2184 = vmatmul.mubr.f32.gmra.mrb[0].mxu0 %v2183
      %v2185 = vpop.f32.mrb[0].mxu0
      %v2186 = vadd.f32 %v1998, %v2185
      %v2187 = vpop.f32.mrb[0].mxu0
      %2188 = vmatprep.mubr.f32.mxu0 0.0
      %v2189 = vand.u32 %v335, 4294901760
      %v2190 = vsub.f32 %v335, %v2189
      %v2191 = vand.u32 %v2190, 4294901760
      %2192 = vmatmul.mubr.f32.gmra.mrb[0].mxu0 %v2191
      %v2193 = vpop.f32.mrb[0].mxu0
      %v2194 = vadd.f32 %v2005, %v2193
      %v2195 = vpop.f32.mrb[0].mxu0
      %2196 = vmatprep.mubr.f32.mxu0 0.0
      %v2197 = vand.u32 %v338, 4294901760
      %v2198 = vsub.f32 %v338, %v2197
      %v2199 = vand.u32 %v2198, 4294901760
      %2200 = vmatmul.mubr.f32.gmra.mrb[0].mxu0 %v2199
      %v2201 = vpop.f32.mrb[0].mxu0
      %v2202 = vadd.f32 %v2012, %v2201
      %v2203 = vpop.f32.mrb[0].mxu0
      %2204 = vmatprep.mubr.f32.mxu0 0.0
      %v2205 = vand.u32 %v341, 4294901760
      %v2206 = vsub.f32 %v341, %v2205
      %v2207 = vand.u32 %v2206, 4294901760
      %2208 = vmatmul.mubr.f32.gmra.mrb[0].mxu0 %v2207
      %v2209 = vpop.f32.mrb[0].mxu0
      %v2210 = vadd.f32 %v2019, %v2209
      %v2211 = vpop.f32.mrb[0].mxu0
      %2212 = vmatprep.mubr.f32.mxu0 0.0
      %v2213 = vand.u32 %v344, 4294901760
      %v2214 = vsub.f32 %v344, %v2213
      %v2215 = vand.u32 %v2214, 4294901760
      %2216 = vmatmul.mubr.f32.gmra.mrb[0].mxu0 %v2215
      %v2217 = vpop.f32.mrb[0].mxu0
      %v2218 = vadd.f32 %v2026, %v2217
      %v2219 = vpop.f32.mrb[0].mxu0
      %2220 = vmatprep.mubr.f32.mxu0 0.0
      %v2221 = vand.u32 %v347, 4294901760
      %v2222 = vsub.f32 %v347, %v2221
      %v2223 = vand.u32 %v2222, 4294901760
      %2224 = vmatmul.mubr.f32.gmra.mrb[0].mxu0 %v2223
      %v2225 = vpop.f32.mrb[0].mxu0
      %v2226 = vadd.f32 %v2033, %v2225
      %v2227 = vpop.f32.mrb[0].mxu0
      %2228 = vmatprep.mubr.f32.mxu0 0.0
      %v2229 = vand.u32 %v350, 4294901760
      %v2230 = vsub.f32 %v350, %v2229
      %v2231 = vand.u32 %v2230, 4294901760
      %2232 = vmatmul.mubr.f32.gmra.mrb[0].mxu0 %v2231
      %v2233 = vpop.f32.mrb[0].mxu0
      %v2234 = vadd.f32 %v2040, %v2233
      %v2235 = vpop.f32.mrb[0].mxu0
      %2236 = vmatprep.mubr.f32.mxu0 0.0
      %v2237 = vand.u32 %v353, 4294901760
      %v2238 = vsub.f32 %v353, %v2237
      %v2239 = vand.u32 %v2238, 4294901760
      %2240 = vmatmul.mubr.f32.gmra.mrb[0].mxu0 %v2239
      %v2241 = vpop.f32.mrb[0].mxu0
      %v2242 = vadd.f32 %v2047, %v2241
      %v2243 = vpop.f32.mrb[0].mxu0
      %2244 = vdwg.mxu0
      %2245 = vmatprep.subr.mxu0 0.0
      %v2246 = vand.u32 %v1466, 4294901760
      %v2247 = vsub.f32 %v1466, %v2246
      %v2248 = vand.u32 %v2247, 4294901760
      %2249 = vmatpush1.xpose.msra.mxu0 %v2248
      %2250 = vmatprep.subr.mxu0 0.0
      %v2251 = vand.u32 %v1469, 4294901760
      %v2252 = vsub.f32 %v1469, %v2251
      %v2253 = vand.u32 %v2252, 4294901760
      %2254 = vmatpush1.xpose.msra.mxu0 %v2253
      %2255 = vmatprep.subr.mxu0 0.0
      %2256 = vmatpush1.xpose.msra.mxu0 0.0
      %2257 = vmatprep.subr.mxu0 0.0
      %2258 = vmatpush1.xpose.msra.mxu0 0.0
      %2259 = vmatprep.subr.mxu0 0.0
      %2260 = vmatpush1.xpose.msra.mxu0 0.0
      %2261 = vmatprep.subr.mxu0 0.0
      %2262 = vmatpush1.xpose.msra.mxu0 0.0
      %2263 = vmatprep.subr.mxu0 0.0
      %2264 = vmatpush1.xpose.msra.mxu0 0.0
      %2265 = vmatprep.subr.mxu0 0.0
      %2266 = vmatpush1.xpose.msra.mxu0 0.0
      %2267 = vmatprep.subr.mxu0 0.0
      %2268 = vmatpush1.xpose.msra.mxu0 0.0
      %2269 = vmatprep.subr.mxu0 0.0
      %2270 = vmatpush1.xpose.msra.mxu0 0.0
      %2271 = vmatprep.subr.mxu0 0.0
      %2272 = vmatpush1.xpose.msra.mxu0 0.0
      %2273 = vmatprep.subr.mxu0 0.0
      %2274 = vmatpush1.xpose.msra.mxu0 0.0
      %2275 = vmatprep.subr.mxu0 0.0
      %2276 = vmatpush1.xpose.msra.mxu0 0.0
      %2277 = vmatprep.subr.mxu0 0.0
      %2278 = vmatpush1.xpose.msra.mxu0 0.0
      %2279 = vmatprep.subr.mxu0 0.0
      %2280 = vmatpush1.xpose.msra.mxu0 0.0
      %2281 = vmatprep.subr.mxu0 0.0
      %2282 = vmatpush1.xpose.msra.mxu0 0.0
      %2283 = vmatprep.subr.mxu0 0.0
      %2284 = vmatpush1.xpose.msra.mxu0 0.0
      %2285 = vmatprep.subr.mxu0 0.0
      %2286 = vmatpush1.xpose.msra.mxu0 0.0
      %2287 = vmatprep.subr.mxu0 0.0
      %2288 = vmatpush1.xpose.msra.mxu0 0.0
      %2289 = vmatprep.subr.mxu0 0.0
      %2290 = vmatpush1.xpose.msra.mxu0 0.0
      %2291 = vmatprep.subr.mxu0 0.0
      %2292 = vmatpush1.xpose.msra.mxu0 0.0
      %2293 = vmatprep.subr.mxu0 0.0
      %2294 = vmatpush1.xpose.msra.mxu0 0.0
      %2295 = vmatprep.subr.mxu0 0.0
      %2296 = vmatpush1.xpose.msra.mxu0 0.0
      %2297 = vmatprep.subr.mxu0 0.0
      %2298 = vmatpush1.xpose.msra.mxu0 0.0
      %2299 = vmatprep.subr.mxu0 0.0
      %2300 = vmatpush1.xpose.msra.mxu0 0.0
      %2301 = vmatprep.subr.mxu0 0.0
      %2302 = vmatpush1.xpose.msra.mxu0 0.0
      %2303 = vmatprep.subr.mxu0 0.0
      %2304 = vmatpush1.xpose.msra.mxu0 0.0
      %2305 = vmatprep.subr.mxu0 0.0
      %2306 = vmatpush1.xpose.msra.mxu0 0.0
      %2307 = vmatprep.subr.mxu0 0.0
      %2308 = vmatpush1.xpose.msra.mxu0 0.0
      %2309 = vmatprep.subr.mxu0 0.0
      %2310 = vmatpush1.xpose.msra.mxu0 0.0
      %2311 = vmatprep.subr.mxu0 0.0
      %2312 = vmatpush1.xpose.msra.mxu0 0.0
      %2313 = vmatprep.subr.mxu0 0.0
      %2314 = vmatpush1.xpose.msra.mxu0 0.0
      %2315 = vmatprep.mubr.f32.mxu0 0.0
      %v2316 = vand.u32 %v308, 4294901760
      %2317 = vmatmul.mubr.f32.gmra.mrb[0].mxu0 %v2316
      %v2318 = vpop.f32.mrb[0].mxu0
      %v2319 = vadd.f32 %v2122, %v2318
      %v2320 = vpop.f32.mrb[0].mxu0
      %2321 = vmatprep.mubr.f32.mxu0 0.0
      %v2322 = vand.u32 %v311, 4294901760
      %2323 = vmatmul.mubr.f32.gmra.mrb[0].mxu0 %v2322
      %v2324 = vpop.f32.mrb[0].mxu0
      %v2325 = vadd.f32 %v2130, %v2324
      %v2326 = vpop.f32.mrb[0].mxu0
      %2327 = vmatprep.mubr.f32.mxu0 0.0
      %v2328 = vand.u32 %v314, 4294901760
      %2329 = vmatmul.mubr.f32.gmra.mrb[0].mxu0 %v2328
      %v2330 = vpop.f32.mrb[0].mxu0
      %v2331 = vadd.f32 %v2138, %v2330
      %v2332 = vpop.f32.mrb[0].mxu0
      %2333 = vmatprep.mubr.f32.mxu0 0.0
      %v2334 = vand.u32 %v317, 4294901760
      %2335 = vmatmul.mubr.f32.gmra.mrb[0].mxu0 %v2334
      %v2336 = vpop.f32.mrb[0].mxu0
      %v2337 = vadd.f32 %v2146, %v2336
      %v2338 = vpop.f32.mrb[0].mxu0
      %2339 = vmatprep.mubr.f32.mxu0 0.0
      %v2340 = vand.u32 %v320, 4294901760
      %2341 = vmatmul.mubr.f32.gmra.mrb[0].mxu0 %v2340
      %v2342 = vpop.f32.mrb[0].mxu0
      %v2343 = vadd.f32 %v2154, %v2342
      %v2344 = vpop.f32.mrb[0].mxu0
      %2345 = vmatprep.mubr.f32.mxu0 0.0
      %v2346 = vand.u32 %v323, 4294901760
      %2347 = vmatmul.mubr.f32.gmra.mrb[0].mxu0 %v2346
      %v2348 = vpop.f32.mrb[0].mxu0
      %v2349 = vadd.f32 %v2162, %v2348
      %v2350 = vpop.f32.mrb[0].mxu0
      %2351 = vmatprep.mubr.f32.mxu0 0.0
      %v2352 = vand.u32 %v326, 4294901760
      %2353 = vmatmul.mubr.f32.gmra.mrb[0].mxu0 %v2352
      %v2354 = vpop.f32.mrb[0].mxu0
      %v2355 = vadd.f32 %v2170, %v2354
      %v2356 = vpop.f32.mrb[0].mxu0
      %2357 = vmatprep.mubr.f32.mxu0 0.0
      %v2358 = vand.u32 %v329, 4294901760
      %2359 = vmatmul.mubr.f32.gmra.mrb[0].mxu0 %v2358
      %v2360 = vpop.f32.mrb[0].mxu0
      %v2361 = vadd.f32 %v2178, %v2360
      %v2362 = vpop.f32.mrb[0].mxu0
      %2363 = vmatprep.mubr.f32.mxu0 0.0
      %v2364 = vand.u32 %v332, 4294901760
      %2365 = vmatmul.mubr.f32.gmra.mrb[0].mxu0 %v2364
      %v2366 = vpop.f32.mrb[0].mxu0
      %v2367 = vadd.f32 %v2186, %v2366
      %v2368 = vpop.f32.mrb[0].mxu0
      %2369 = vmatprep.mubr.f32.mxu0 0.0
      %v2370 = vand.u32 %v335, 4294901760
      %2371 = vmatmul.mubr.f32.gmra.mrb[0].mxu0 %v2370
      %v2372 = vpop.f32.mrb[0].mxu0
      %v2373 = vadd.f32 %v2194, %v2372
      %v2374 = vpop.f32.mrb[0].mxu0
      %2375 = vmatprep.mubr.f32.mxu0 0.0
      %v2376 = vand.u32 %v338, 4294901760
      %2377 = vmatmul.mubr.f32.gmra.mrb[0].mxu0 %v2376
      %v2378 = vpop.f32.mrb[0].mxu0
      %v2379 = vadd.f32 %v2202, %v2378
      %v2380 = vpop.f32.mrb[0].mxu0
      %2381 = vmatprep.mubr.f32.mxu0 0.0
      %v2382 = vand.u32 %v341, 4294901760
      %2383 = vmatmul.mubr.f32.gmra.mrb[0].mxu0 %v2382
      %v2384 = vpop.f32.mrb[0].mxu0
      %v2385 = vadd.f32 %v2210, %v2384
      %v2386 = vpop.f32.mrb[0].mxu0
      %2387 = vmatprep.mubr.f32.mxu0 0.0
      %v2388 = vand.u32 %v344, 4294901760
      %2389 = vmatmul.mubr.f32.gmra.mrb[0].mxu0 %v2388
      %v2390 = vpop.f32.mrb[0].mxu0
      %v2391 = vadd.f32 %v2218, %v2390
      %v2392 = vpop.f32.mrb[0].mxu0
      %2393 = vmatprep.mubr.f32.mxu0 0.0
      %v2394 = vand.u32 %v347, 4294901760
      %2395 = vmatmul.mubr.f32.gmra.mrb[0].mxu0 %v2394
      %v2396 = vpop.f32.mrb[0].mxu0
      %v2397 = vadd.f32 %v2226, %v2396
      %v2398 = vpop.f32.mrb[0].mxu0
      %2399 = vmatprep.mubr.f32.mxu0 0.0
      %v2400 = vand.u32 %v350, 4294901760
      %2401 = vmatmul.mubr.f32.gmra.mrb[0].mxu0 %v2400
      %v2402 = vpop.f32.mrb[0].mxu0
      %v2403 = vadd.f32 %v2234, %v2402
      %v2404 = vpop.f32.mrb[0].mxu0
      %2405 = vmatprep.mubr.f32.mxu0 0.0
      %v2406 = vand.u32 %v353, 4294901760
      %2407 = vmatmul.mubr.f32.gmra.mrb[0].mxu0 %v2406
      %v2408 = vpop.f32.mrb[0].mxu0
      %v2409 = vadd.f32 %v2242, %v2408
      %v2410 = vpop.f32.mrb[0].mxu0
      %2411 = vdwg.mxu0
      %2412 = vmatprep.subr.mxu0 0.0
      %v2413 = vand.u32 %v1466, 4294901760
      %2414 = vmatpush1.xpose.msra.mxu0 %v2413
      %2415 = vmatprep.subr.mxu0 0.0
      %v2416 = vand.u32 %v1469, 4294901760
      %2417 = vmatpush1.xpose.msra.mxu0 %v2416
      %2418 = vmatprep.subr.mxu0 0.0
      %2419 = vmatpush1.xpose.msra.mxu0 0.0
      %2420 = vmatprep.subr.mxu0 0.0
      %2421 = vmatpush1.xpose.msra.mxu0 0.0
      %2422 = vmatprep.subr.mxu0 0.0
      %2423 = vmatpush1.xpose.msra.mxu0 0.0
      %2424 = vmatprep.subr.mxu0 0.0
      %2425 = vmatpush1.xpose.msra.mxu0 0.0
      %2426 = vmatprep.subr.mxu0 0.0
      %2427 = vmatpush1.xpose.msra.mxu0 0.0
      %2428 = vmatprep.subr.mxu0 0.0
      %2429 = vmatpush1.xpose.msra.mxu0 0.0
      %2430 = vmatprep.subr.mxu0 0.0
      %2431 = vmatpush1.xpose.msra.mxu0 0.0
      %2432 = vmatprep.subr.mxu0 0.0
      %2433 = vmatpush1.xpose.msra.mxu0 0.0
      %2434 = vmatprep.subr.mxu0 0.0
      %2435 = vmatpush1.xpose.msra.mxu0 0.0
      %2436 = vmatprep.subr.mxu0 0.0
      %2437 = vmatpush1.xpose.msra.mxu0 0.0
      %2438 = vmatprep.subr.mxu0 0.0
      %2439 = vmatpush1.xpose.msra.mxu0 0.0
      %2440 = vmatprep.subr.mxu0 0.0
      %2441 = vmatpush1.xpose.msra.mxu0 0.0
      %2442 = vmatprep.subr.mxu0 0.0
      %2443 = vmatpush1.xpose.msra.mxu0 0.0
      %2444 = vmatprep.subr.mxu0 0.0
      %2445 = vmatpush1.xpose.msra.mxu0 0.0
      %2446 = vmatprep.subr.mxu0 0.0
      %2447 = vmatpush1.xpose.msra.mxu0 0.0
      %2448 = vmatprep.subr.mxu0 0.0
      %2449 = vmatpush1.xpose.msra.mxu0 0.0
      %2450 = vmatprep.subr.mxu0 0.0
      %2451 = vmatpush1.xpose.msra.mxu0 0.0
      %2452 = vmatprep.subr.mxu0 0.0
      %2453 = vmatpush1.xpose.msra.mxu0 0.0
      %2454 = vmatprep.subr.mxu0 0.0
      %2455 = vmatpush1.xpose.msra.mxu0 0.0
      %2456 = vmatprep.subr.mxu0 0.0
      %2457 = vmatpush1.xpose.msra.mxu0 0.0
      %2458 = vmatprep.subr.mxu0 0.0
      %2459 = vmatpush1.xpose.msra.mxu0 0.0
      %2460 = vmatprep.subr.mxu0 0.0
      %2461 = vmatpush1.xpose.msra.mxu0 0.0
      %2462 = vmatprep.subr.mxu0 0.0
      %2463 = vmatpush1.xpose.msra.mxu0 0.0
      %2464 = vmatprep.subr.mxu0 0.0
      %2465 = vmatpush1.xpose.msra.mxu0 0.0
      %2466 = vmatprep.subr.mxu0 0.0
      %2467 = vmatpush1.xpose.msra.mxu0 0.0
      %2468 = vmatprep.subr.mxu0 0.0
      %2469 = vmatpush1.xpose.msra.mxu0 0.0
      %2470 = vmatprep.subr.mxu0 0.0
      %2471 = vmatpush1.xpose.msra.mxu0 0.0
      %2472 = vmatprep.subr.mxu0 0.0
      %2473 = vmatpush1.xpose.msra.mxu0 0.0
      %2474 = vmatprep.subr.mxu0 0.0
      %2475 = vmatpush1.xpose.msra.mxu0 0.0
      %2476 = vmatprep.subr.mxu0 0.0
      %2477 = vmatpush1.xpose.msra.mxu0 0.0
      %2478 = vmatprep.mubr.f32.mxu0 0.0
      %v2479 = vand.u32 %v308, 4294901760
      %2480 = vmatmul.mubr.f32.gmra.mrb[0].mxu0 %v2479
      %v2481 = vpop.f32.mrb[0].mxu0
      %v2482 = vadd.f32 %v2319, %v2481
      %v2483 = vpop.f32.mrb[0].mxu0
      %2484 = vmatprep.mubr.f32.mxu0 0.0
      %v2485 = vand.u32 %v311, 4294901760
      %2486 = vmatmul.mubr.f32.gmra.mrb[0].mxu0 %v2485
      %v2487 = vpop.f32.mrb[0].mxu0
      %v2488 = vadd.f32 %v2325, %v2487
      %v2489 = vpop.f32.mrb[0].mxu0
      %2490 = vmatprep.mubr.f32.mxu0 0.0
      %v2491 = vand.u32 %v314, 4294901760
      %2492 = vmatmul.mubr.f32.gmra.mrb[0].mxu0 %v2491
      %v2493 = vpop.f32.mrb[0].mxu0
      %v2494 = vadd.f32 %v2331, %v2493
      %v2495 = vpop.f32.mrb[0].mxu0
      %2496 = vmatprep.mubr.f32.mxu0 0.0
      %v2497 = vand.u32 %v317, 4294901760
      %2498 = vmatmul.mubr.f32.gmra.mrb[0].mxu0 %v2497
      %v2499 = vpop.f32.mrb[0].mxu0
      %v2500 = vadd.f32 %v2337, %v2499
      %v2501 = vpop.f32.mrb[0].mxu0
      %2502 = vmatprep.mubr.f32.mxu0 0.0
      %v2503 = vand.u32 %v320, 4294901760
      %2504 = vmatmul.mubr.f32.gmra.mrb[0].mxu0 %v2503
      %v2505 = vpop.f32.mrb[0].mxu0
      %v2506 = vadd.f32 %v2343, %v2505
      %v2507 = vpop.f32.mrb[0].mxu0
      %2508 = vmatprep.mubr.f32.mxu0 0.0
      %v2509 = vand.u32 %v323, 4294901760
      %2510 = vmatmul.mubr.f32.gmra.mrb[0].mxu0 %v2509
      %v2511 = vpop.f32.mrb[0].mxu0
      %v2512 = vadd.f32 %v2349, %v2511
      %v2513 = vpop.f32.mrb[0].mxu0
      %2514 = vmatprep.mubr.f32.mxu0 0.0
      %v2515 = vand.u32 %v326, 4294901760
      %2516 = vmatmul.mubr.f32.gmra.mrb[0].mxu0 %v2515
      %v2517 = vpop.f32.mrb[0].mxu0
      %v2518 = vadd.f32 %v2355, %v2517
      %v2519 = vpop.f32.mrb[0].mxu0
      %2520 = vmatprep.mubr.f32.mxu0 0.0
      %v2521 = vand.u32 %v329, 4294901760
      %2522 = vmatmul.mubr.f32.gmra.mrb[0].mxu0 %v2521
      %v2523 = vpop.f32.mrb[0].mxu0
      %v2524 = vadd.f32 %v2361, %v2523
      %v2525 = vpop.f32.mrb[0].mxu0
      %2526 = vmatprep.mubr.f32.mxu0 0.0
      %v2527 = vand.u32 %v332, 4294901760
      %2528 = vmatmul.mubr.f32.gmra.mrb[0].mxu0 %v2527
      %v2529 = vpop.f32.mrb[0].mxu0
      %v2530 = vadd.f32 %v2367, %v2529
      %v2531 = vpop.f32.mrb[0].mxu0
      %2532 = vmatprep.mubr.f32.mxu0 0.0
      %v2533 = vand.u32 %v335, 4294901760
      %2534 = vmatmul.mubr.f32.gmra.mrb[0].mxu0 %v2533
      %v2535 = vpop.f32.mrb[0].mxu0
      %v2536 = vadd.f32 %v2373, %v2535
      %v2537 = vpop.f32.mrb[0].mxu0
      %2538 = vmatprep.mubr.f32.mxu0 0.0
      %v2539 = vand.u32 %v338, 4294901760
      %2540 = vmatmul.mubr.f32.gmra.mrb[0].mxu0 %v2539
      %v2541 = vpop.f32.mrb[0].mxu0
      %v2542 = vadd.f32 %v2379, %v2541
      %v2543 = vpop.f32.mrb[0].mxu0
      %2544 = vmatprep.mubr.f32.mxu0 0.0
      %v2545 = vand.u32 %v341, 4294901760
      %2546 = vmatmul.mubr.f32.gmra.mrb[0].mxu0 %v2545
      %v2547 = vpop.f32.mrb[0].mxu0
      %v2548 = vadd.f32 %v2385, %v2547
      %v2549 = vpop.f32.mrb[0].mxu0
      %2550 = vmatprep.mubr.f32.mxu0 0.0
      %v2551 = vand.u32 %v344, 4294901760
      %2552 = vmatmul.mubr.f32.gmra.mrb[0].mxu0 %v2551
      %v2553 = vpop.f32.mrb[0].mxu0
      %v2554 = vadd.f32 %v2391, %v2553
      %v2555 = vpop.f32.mrb[0].mxu0
      %2556 = vmatprep.mubr.f32.mxu0 0.0
      %v2557 = vand.u32 %v347, 4294901760
      %2558 = vmatmul.mubr.f32.gmra.mrb[0].mxu0 %v2557
      %v2559 = vpop.f32.mrb[0].mxu0
      %v2560 = vadd.f32 %v2397, %v2559
      %v2561 = vpop.f32.mrb[0].mxu0
      %2562 = vmatprep.mubr.f32.mxu0 0.0
      %v2563 = vand.u32 %v350, 4294901760
      %2564 = vmatmul.mubr.f32.gmra.mrb[0].mxu0 %v2563
      %v2565 = vpop.f32.mrb[0].mxu0
      %v2566 = vadd.f32 %v2403, %v2565
      %v2567 = vpop.f32.mrb[0].mxu0
      %2568 = vmatprep.mubr.f32.mxu0 0.0
      %v2569 = vand.u32 %v353, 4294901760
      %2570 = vmatmul.mubr.f32.gmra.mrb[0].mxu0 %v2569
      %v2571 = vpop.f32.mrb[0].mxu0
      %v2572 = vadd.f32 %v2409, %v2571
      %v2573 = vpop.f32.mrb[0].mxu0
      %2574 = vdwg.mxu0
      %vm2575 = vcmask 130048
      %v2576 = vsel %vm2575, %v1372, 0.0
      %v2577 = vsel %vm2575, %v1378, 0.0
      %v2578 = vadd.f32 %v2576, %v2577
      %v2579 = vsel %vm2575, %v1384, 0.0
      %v2580 = vadd.f32 %v2578, %v2579
      %v2581 = vsel %vm2575, %v1390, 0.0
      %v2582 = vadd.f32 %v2580, %v2581
      %v2583 = vsel %vm2575, %v1396, 0.0
      %v2584 = vadd.f32 %v2582, %v2583
      %v2585 = vsel %vm2575, %v1402, 0.0
      %v2586 = vadd.f32 %v2584, %v2585
      %v2587 = vsel %vm2575, %v1408, 0.0
      %v2588 = vadd.f32 %v2586, %v2587
      %v2589 = vsel %vm2575, %v1414, 0.0
      %v2590 = vadd.f32 %v2588, %v2589
      %v2591 = vsel %vm2575, %v1420, 0.0
      %v2592 = vadd.f32 %v2590, %v2591
      %v2593 = vsel %vm2575, %v1426, 0.0
      %v2594 = vadd.f32 %v2592, %v2593
      %v2595 = vsel %vm2575, %v1432, 0.0
      %v2596 = vadd.f32 %v2594, %v2595
      %v2597 = vsel %vm2575, %v1438, 0.0
      %v2598 = vadd.f32 %v2596, %v2597
      %v2599 = vsel %vm2575, %v1444, 0.0
      %v2600 = vadd.f32 %v2598, %v2599
      %v2601 = vsel %vm2575, %v1450, 0.0
      %v2602 = vadd.f32 %v2600, %v2601
      %v2603 = vsel %vm2575, %v1456, 0.0
      %v2604 = vadd.f32 %v2602, %v2603
      %v2605 = vsel %vm2575, %v1462, 0.0
      %v2606 = vadd.f32 %v2604, %v2605
      %v2607 = vrot.slane %v2606, 4
      %v2608 = vadd.f32 %v2606, %v2607
      %v2609 = vrot.slane %v2608, 2
      %v2610 = vadd.f32 %v2608, %v2609
      %v2611 = vrot.slane %v2610, 1
      %v2612 = vadd.f32 %v2610, %v2611
      %v2613 = vmul.f32 %v1372, %v1372
      %v2614 = vmul.f32 %v1378, %v1378
      %v2615 = vmul.f32 %v1384, %v1384
      %v2616 = vmul.f32 %v1390, %v1390
      %v2617 = vmul.f32 %v1396, %v1396
      %v2618 = vmul.f32 %v1402, %v1402
      %v2619 = vmul.f32 %v1408, %v1408
      %v2620 = vmul.f32 %v1414, %v1414
      %v2621 = vmul.f32 %v1420, %v1420
      %v2622 = vmul.f32 %v1426, %v1426
      %v2623 = vmul.f32 %v1432, %v1432
      %v2624 = vmul.f32 %v1438, %v1438
      %v2625 = vmul.f32 %v1444, %v1444
      %v2626 = vmul.f32 %v1450, %v1450
      %v2627 = vmul.f32 %v1456, %v1456
      %v2628 = vmul.f32 %v1462, %v1462
      %v2629 = vsel %vm2575, %v2613, 0.0
      %v2630 = vsel %vm2575, %v2614, 0.0
      %v2631 = vadd.f32 %v2629, %v2630
      %v2632 = vsel %vm2575, %v2615, 0.0
      %v2633 = vadd.f32 %v2631, %v2632
      %v2634 = vsel %vm2575, %v2616, 0.0
      %v2635 = vadd.f32 %v2633, %v2634
      %v2636 = vsel %vm2575, %v2617, 0.0
      %v2637 = vadd.f32 %v2635, %v2636
      %v2638 = vsel %vm2575, %v2618, 0.0
      %v2639 = vadd.f32 %v2637, %v2638
      %v2640 = vsel %vm2575, %v2619, 0.0
      %v2641 = vadd.f32 %v2639, %v2640
      %v2642 = vsel %vm2575, %v2620, 0.0
      %v2643 = vadd.f32 %v2641, %v2642
      %v2644 = vsel %vm2575, %v2621, 0.0
      %v2645 = vadd.f32 %v2643, %v2644
      %v2646 = vsel %vm2575, %v2622, 0.0
      %v2647 = vadd.f32 %v2645, %v2646
      %v2648 = vsel %vm2575, %v2623, 0.0
      %v2649 = vadd.f32 %v2647, %v2648
      %v2650 = vsel %vm2575, %v2624, 0.0
      %v2651 = vadd.f32 %v2649, %v2650
      %v2652 = vsel %vm2575, %v2625, 0.0
      %v2653 = vadd.f32 %v2651, %v2652
      %v2654 = vsel %vm2575, %v2626, 0.0
      %v2655 = vadd.f32 %v2653, %v2654
      %v2656 = vsel %vm2575, %v2627, 0.0
      %v2657 = vadd.f32 %v2655, %v2656
      %v2658 = vsel %vm2575, %v2628, 0.0
      %v2659 = vadd.f32 %v2657, %v2658
      %v2660 = vrot.slane %v2659, 4
      %v2661 = vadd.f32 %v2659, %v2660
      %v2662 = vrot.slane %v2661, 2
      %v2663 = vadd.f32 %v2661, %v2662
      %v2664 = vrot.slane %v2663, 1
      %v2665 = vadd.f32 %v2663, %v2664
      %v2666 = vmul.f32 %v2612, 0.0078125
      %v2667 = vmul.f32 %v2665, 0.0078125
      %v2668 = vmul.f32 %v2666, %v2666
      %v2669 = vsub.f32 %v2667, %v2668
      %v2670 = vmax.f32 %v2669, 0.0
      %v2671 = vadd.f32 %v2670, 1e-05
      %v2672 = vrsqrt.pop %v2671
      %v2673 = vmul.f32 %v286, %v2672
      %v2675 = vlaneseq
      %v2676 = vshrl.u32 %v2675, 7
      %v2677 = vsub.s32 0, %v2676
      %v2678 = vrot.slane %v2673, %v2677
      %v2680 = vmul.f32 %v1372, %v2678
      %v2681 = vmul.f32 %v1378, %v2678
      %v2682 = vmul.f32 %v1384, %v2678
      %v2683 = vmul.f32 %v1390, %v2678
      %v2684 = vmul.f32 %v1396, %v2678
      %v2685 = vmul.f32 %v1402, %v2678
      %v2686 = vmul.f32 %v1408, %v2678
      %v2687 = vmul.f32 %v1414, %v2678
      %v2688 = vmul.f32 %v1420, %v2678
      %v2689 = vmul.f32 %v1426, %v2678
      %v2690 = vmul.f32 %v1432, %v2678
      %v2691 = vmul.f32 %v1438, %v2678
      %v2692 = vmul.f32 %v1444, %v2678
      %v2693 = vmul.f32 %v1450, %v2678
      %v2694 = vmul.f32 %v1456, %v2678
      %v2695 = vmul.f32 %v1462, %v2678
      %v2696 = vmul.f32 %v2666, %v2673
      %v2697 = vsub.f32 %v287, %v2696
      %v2699 = vlaneseq
      %v2700 = vshrl.u32 %v2699, 7
      %v2701 = vsub.s32 0, %v2700
      %v2702 = vrot.slane %v2697, %v2701
      %v2704 = vadd.f32 %v2680, %v2702
      %v2705 = vadd.f32 %v2681, %v2702
      %v2706 = vadd.f32 %v2682, %v2702
      %v2707 = vadd.f32 %v2683, %v2702
      %v2708 = vadd.f32 %v2684, %v2702
      %v2709 = vadd.f32 %v2685, %v2702
      %v2710 = vadd.f32 %v2686, %v2702
      %v2711 = vadd.f32 %v2687, %v2702
      %v2712 = vadd.f32 %v2688, %v2702
      %v2713 = vadd.f32 %v2689, %v2702
      %v2714 = vadd.f32 %v2690, %v2702
      %v2715 = vadd.f32 %v2691, %v2702
      %v2716 = vadd.f32 %v2692, %v2702
      %v2717 = vadd.f32 %v2693, %v2702
      %v2718 = vadd.f32 %v2694, %v2702
      %v2719 = vadd.f32 %v2695, %v2702
      %v2720 = vsel %vm2575, %v2482, 0.0
      %v2721 = vsel %vm2575, %v2488, 0.0
      %v2722 = vadd.f32 %v2720, %v2721
      %v2723 = vsel %vm2575, %v2494, 0.0
      %v2724 = vadd.f32 %v2722, %v2723
      %v2725 = vsel %vm2575, %v2500, 0.0
      %v2726 = vadd.f32 %v2724, %v2725
      %v2727 = vsel %vm2575, %v2506, 0.0
      %v2728 = vadd.f32 %v2726, %v2727
      %v2729 = vsel %vm2575, %v2512, 0.0
      %v2730 = vadd.f32 %v2728, %v2729
      %v2731 = vsel %vm2575, %v2518, 0.0
      %v2732 = vadd.f32 %v2730, %v2731
      %v2733 = vsel %vm2575, %v2524, 0.0
      %v2734 = vadd.f32 %v2732, %v2733
      %v2735 = vsel %vm2575, %v2530, 0.0
      %v2736 = vadd.f32 %v2734, %v2735
      %v2737 = vsel %vm2575, %v2536, 0.0
      %v2738 = vadd.f32 %v2736, %v2737
      %v2739 = vsel %vm2575, %v2542, 0.0
      %v2740 = vadd.f32 %v2738, %v2739
      %v2741 = vsel %vm2575, %v2548, 0.0
      %v2742 = vadd.f32 %v2740, %v2741
      %v2743 = vsel %vm2575, %v2554, 0.0
      %v2744 = vadd.f32 %v2742, %v2743
      %v2745 = vsel %vm2575, %v2560, 0.0
      %v2746 = vadd.f32 %v2744, %v2745
      %v2747 = vsel %vm2575, %v2566, 0.0
      %v2748 = vadd.f32 %v2746, %v2747
      %v2749 = vsel %vm2575, %v2572, 0.0
      %v2750 = vadd.f32 %v2748, %v2749
      %v2751 = vrot.slane %v2750, 4
      %v2752 = vadd.f32 %v2750, %v2751
      %v2753 = vrot.slane %v2752, 2
      %v2754 = vadd.f32 %v2752, %v2753
      %v2755 = vrot.slane %v2754, 1
      %v2756 = vadd.f32 %v2754, %v2755
      %v2757 = vmul.f32 %v2482, %v2482
      %v2758 = vmul.f32 %v2488, %v2488
      %v2759 = vmul.f32 %v2494, %v2494
      %v2760 = vmul.f32 %v2500, %v2500
      %v2761 = vmul.f32 %v2506, %v2506
      %v2762 = vmul.f32 %v2512, %v2512
      %v2763 = vmul.f32 %v2518, %v2518
      %v2764 = vmul.f32 %v2524, %v2524
      %v2765 = vmul.f32 %v2530, %v2530
      %v2766 = vmul.f32 %v2536, %v2536
      %v2767 = vmul.f32 %v2542, %v2542
      %v2768 = vmul.f32 %v2548, %v2548
      %v2769 = vmul.f32 %v2554, %v2554
      %v2770 = vmul.f32 %v2560, %v2560
      %v2771 = vmul.f32 %v2566, %v2566
      %v2772 = vmul.f32 %v2572, %v2572
      %v2773 = vsel %vm2575, %v2757, 0.0
      %v2774 = vsel %vm2575, %v2758, 0.0
      %v2775 = vadd.f32 %v2773, %v2774
      %v2776 = vsel %vm2575, %v2759, 0.0
      %v2777 = vadd.f32 %v2775, %v2776
      %v2778 = vsel %vm2575, %v2760, 0.0
      %v2779 = vadd.f32 %v2777, %v2778
      %v2780 = vsel %vm2575, %v2761, 0.0
      %v2781 = vadd.f32 %v2779, %v2780
      %v2782 = vsel %vm2575, %v2762, 0.0
      %v2783 = vadd.f32 %v2781, %v2782
      %v2784 = vsel %vm2575, %v2763, 0.0
      %v2785 = vadd.f32 %v2783, %v2784
      %v2786 = vsel %vm2575, %v2764, 0.0
      %v2787 = vadd.f32 %v2785, %v2786
      %v2788 = vsel %vm2575, %v2765, 0.0
      %v2789 = vadd.f32 %v2787, %v2788
      %v2790 = vsel %vm2575, %v2766, 0.0
      %v2791 = vadd.f32 %v2789, %v2790
      %v2792 = vsel %vm2575, %v2767, 0.0
      %v2793 = vadd.f32 %v2791, %v2792
      %v2794 = vsel %vm2575, %v2768, 0.0
      %v2795 = vadd.f32 %v2793, %v2794
      %v2796 = vsel %vm2575, %v2769, 0.0
      %v2797 = vadd.f32 %v2795, %v2796
      %v2798 = vsel %vm2575, %v2770, 0.0
      %v2799 = vadd.f32 %v2797, %v2798
      %v2800 = vsel %vm2575, %v2771, 0.0
      %v2801 = vadd.f32 %v2799, %v2800
      %v2802 = vsel %vm2575, %v2772, 0.0
      %v2803 = vadd.f32 %v2801, %v2802
      %v2804 = vrot.slane %v2803, 4
      %v2805 = vadd.f32 %v2803, %v2804
      %v2806 = vrot.slane %v2805, 2
      %v2807 = vadd.f32 %v2805, %v2806
      %v2808 = vrot.slane %v2807, 1
      %v2809 = vadd.f32 %v2807, %v2808
      %v2810 = vmul.f32 %v2756, 0.0078125
      %v2811 = vmul.f32 %v2809, 0.0078125
      %v2812 = vmul.f32 %v2810, %v2810
      %v2813 = vsub.f32 %v2811, %v2812
      %v2814 = vmax.f32 %v2813, 0.0
      %v2815 = vadd.f32 %v2814, 1e-05
      %v2816 = vrsqrt.pop %v2815
      %v2817 = vmul.f32 %v288, %v2816
      %v2819 = vlaneseq
      %v2820 = vshrl.u32 %v2819, 7
      %v2821 = vsub.s32 0, %v2820
      %v2822 = vrot.slane %v2817, %v2821
      %v2824 = vmul.f32 %v2482, %v2822
      %v2825 = vmul.f32 %v2488, %v2822
      %v2826 = vmul.f32 %v2494, %v2822
      %v2827 = vmul.f32 %v2500, %v2822
      %v2828 = vmul.f32 %v2506, %v2822
      %v2829 = vmul.f32 %v2512, %v2822
      %v2830 = vmul.f32 %v2518, %v2822
      %v2831 = vmul.f32 %v2524, %v2822
      %v2832 = vmul.f32 %v2530, %v2822
      %v2833 = vmul.f32 %v2536, %v2822
      %v2834 = vmul.f32 %v2542, %v2822
      %v2835 = vmul.f32 %v2548, %v2822
      %v2836 = vmul.f32 %v2554, %v2822
      %v2837 = vmul.f32 %v2560, %v2822
      %v2838 = vmul.f32 %v2566, %v2822
      %v2839 = vmul.f32 %v2572, %v2822
      %v2840 = vmul.f32 %v2810, %v2817
      %v2841 = vsub.f32 %v289, %v2840
      %v2843 = vlaneseq
      %v2844 = vshrl.u32 %v2843, 7
      %v2845 = vsub.s32 0, %v2844
      %v2846 = vrot.slane %v2841, %v2845
      %v2848 = vadd.f32 %v2824, %v2846
      %v2849 = vadd.f32 %v2825, %v2846
      %v2850 = vadd.f32 %v2826, %v2846
      %v2851 = vadd.f32 %v2827, %v2846
      %v2852 = vadd.f32 %v2828, %v2846
      %v2853 = vadd.f32 %v2829, %v2846
      %v2854 = vadd.f32 %v2830, %v2846
      %v2855 = vadd.f32 %v2831, %v2846
      %v2856 = vadd.f32 %v2832, %v2846
      %v2857 = vadd.f32 %v2833, %v2846
      %v2858 = vadd.f32 %v2834, %v2846
      %v2859 = vadd.f32 %v2835, %v2846
      %v2860 = vadd.f32 %v2836, %v2846
      %v2861 = vadd.f32 %v2837, %v2846
      %v2862 = vadd.f32 %v2838, %v2846
      %v2863 = vadd.f32 %v2839, %v2846
      %v2864 = vmul.f32 %v2848, 0.5
      %v2865 = vmul.f32 %v2849, 0.5
      %v2866 = vmul.f32 %v2850, 0.5
      %v2867 = vmul.f32 %v2851, 0.5
      %v2868 = vmul.f32 %v2852, 0.5
      %v2869 = vmul.f32 %v2853, 0.5
      %v2870 = vmul.f32 %v2854, 0.5
      %v2871 = vmul.f32 %v2855, 0.5
      %v2872 = vmul.f32 %v2856, 0.5
      %v2873 = vmul.f32 %v2857, 0.5
      %v2874 = vmul.f32 %v2858, 0.5
      %v2875 = vmul.f32 %v2859, 0.5
      %v2876 = vmul.f32 %v2860, 0.5
      %v2877 = vmul.f32 %v2861, 0.5
      %v2878 = vmul.f32 %v2862, 0.5
      %v2879 = vmul.f32 %v2863, 0.5
      %v2880 = vtanh.pop %v2864
      %v2881 = vtanh.pop %v2865
      %v2882 = vtanh.pop %v2866
      %v2883 = vtanh.pop %v2867
      %v2884 = vtanh.pop %v2868
      %v2885 = vtanh.pop %v2869
      %v2886 = vtanh.pop %v2870
      %v2887 = vtanh.pop %v2871
      %v2888 = vtanh.pop %v2872
      %v2889 = vtanh.pop %v2873
      %v2890 = vtanh.pop %v2874
      %v2891 = vtanh.pop %v2875
      %v2892 = vtanh.pop %v2876
      %v2893 = vtanh.pop %v2877
      %v2894 = vtanh.pop %v2878
      %v2895 = vtanh.pop %v2879
      %v2896 = vmul.f32 %v2880, 0.5
      %v2897 = vmul.f32 %v2881, 0.5
      %v2898 = vmul.f32 %v2882, 0.5
      %v2899 = vmul.f32 %v2883, 0.5
      %v2900 = vmul.f32 %v2884, 0.5
      %v2901 = vmul.f32 %v2885, 0.5
      %v2902 = vmul.f32 %v2886, 0.5
      %v2903 = vmul.f32 %v2887, 0.5
      %v2904 = vmul.f32 %v2888, 0.5
      %v2905 = vmul.f32 %v2889, 0.5
      %v2906 = vmul.f32 %v2890, 0.5
      %v2907 = vmul.f32 %v2891, 0.5
      %v2908 = vmul.f32 %v2892, 0.5
      %v2909 = vmul.f32 %v2893, 0.5
      %v2910 = vmul.f32 %v2894, 0.5
      %v2911 = vmul.f32 %v2895, 0.5
      %v2912 = vadd.f32 %v2896, 0.5
      %v2913 = vadd.f32 %v2897, 0.5
      %v2914 = vadd.f32 %v2898, 0.5
      %v2915 = vadd.f32 %v2899, 0.5
      %v2916 = vadd.f32 %v2900, 0.5
      %v2917 = vadd.f32 %v2901, 0.5
      %v2918 = vadd.f32 %v2902, 0.5
      %v2919 = vadd.f32 %v2903, 0.5
      %v2920 = vadd.f32 %v2904, 0.5
      %v2921 = vadd.f32 %v2905, 0.5
      %v2922 = vadd.f32 %v2906, 0.5
      %v2923 = vadd.f32 %v2907, 0.5
      %v2924 = vadd.f32 %v2908, 0.5
      %v2925 = vadd.f32 %v2909, 0.5
      %v2926 = vadd.f32 %v2910, 0.5
      %v2927 = vadd.f32 %v2911, 0.5
      %v2928 = vmul.f32 %v2704, %v2912
      %v2929 = vmul.f32 %v2705, %v2913
      %v2930 = vmul.f32 %v2706, %v2914
      %v2931 = vmul.f32 %v2707, %v2915
      %v2932 = vmul.f32 %v2708, %v2916
      %v2933 = vmul.f32 %v2709, %v2917
      %v2934 = vmul.f32 %v2710, %v2918
      %v2935 = vmul.f32 %v2711, %v2919
      %v2936 = vmul.f32 %v2712, %v2920
      %v2937 = vmul.f32 %v2713, %v2921
      %v2938 = vmul.f32 %v2714, %v2922
      %v2939 = vmul.f32 %v2715, %v2923
      %v2940 = vmul.f32 %v2716, %v2924
      %v2941 = vmul.f32 %v2717, %v2925
      %v2942 = vmul.f32 %v2718, %v2926
      %v2943 = vmul.f32 %v2719, %v2927
      %2944 = vst.msk [vmem:[%s280] sm:$0xff] %vm2575, %v2928
      %2945 = vst.msk [vmem:[%s280 + $0x8] sm:$0xff] %vm2575, %v2929
      %2946 = vst.msk [vmem:[%s280 + $0x10] sm:$0xff] %vm2575, %v2930
      %2947 = vst.msk [vmem:[%s280 + $0x18] sm:$0xff] %vm2575, %v2931
      %2948 = vst.msk [vmem:[%s280 + $0x20] sm:$0xff] %vm2575, %v2932
      %2949 = vst.msk [vmem:[%s280 + $0x28] sm:$0xff] %vm2575, %v2933
      %2950 = vst.msk [vmem:[%s280 + $0x30] sm:$0xff] %vm2575, %v2934
      %2951 = vst.msk [vmem:[%s280 + $0x38] sm:$0xff] %vm2575, %v2935
      %2952 = vst.msk [vmem:[%s280 + $0x40] sm:$0xff] %vm2575, %v2936
      %2953 = vst.msk [vmem:[%s280 + $0x48] sm:$0xff] %vm2575, %v2937
      %2954 = vst.msk [vmem:[%s280 + $0x50] sm:$0xff] %vm2575, %v2938
      %2955 = vst.msk [vmem:[%s280 + $0x58] sm:$0xff] %vm2575, %v2939
      %2956 = vst.msk [vmem:[%s280 + $0x60] sm:$0xff] %vm2575, %v2940
      %2957 = vst.msk [vmem:[%s280 + $0x68] sm:$0xff] %vm2575, %v2941
      %2958 = vst.msk [vmem:[%s280 + $0x70] sm:$0xff] %vm2575, %v2942
      %2959 = vst.msk [vmem:[%s280 + $0x78] sm:$0xff] %vm2575, %v2943
      %v2960 = vld [vmem:[%s274 + $0x80] sm:$0xff]
      %v2961 = vld [vmem:[%s274 + $0x88] sm:$0xff]
      %v2962 = vld [vmem:[%s274 + $0x90] sm:$0xff]
      %v2963 = vld [vmem:[%s274 + $0x98] sm:$0xff]
      %v2964 = vld [vmem:[%s274 + $0xa0] sm:$0xff]
      %v2965 = vld [vmem:[%s274 + $0xa8] sm:$0xff]
      %v2966 = vld [vmem:[%s274 + $0xb0] sm:$0xff]
      %v2967 = vld [vmem:[%s274 + $0xb8] sm:$0xff]
      %v2968 = vld [vmem:[%s274 + $0xc0] sm:$0xff]
      %v2969 = vld [vmem:[%s274 + $0xc8] sm:$0xff]
      %v2970 = vld [vmem:[%s274 + $0xd0] sm:$0xff]
      %v2971 = vld [vmem:[%s274 + $0xd8] sm:$0xff]
      %v2972 = vld [vmem:[%s274 + $0xe0] sm:$0xff]
      %v2973 = vld [vmem:[%s274 + $0xe8] sm:$0xff]
      %v2974 = vld [vmem:[%s274 + $0xf0] sm:$0xff]
      %v2975 = vld [vmem:[%s274 + $0xf8] sm:$0xff]
      %v2977 = vsel %vm306, %v2960, 0
      %v2980 = vsel %vm306, %v2961, 0
      %v2983 = vsel %vm306, %v2962, 0
      %v2986 = vsel %vm306, %v2963, 0
      %v2989 = vsel %vm306, %v2964, 0
      %v2992 = vsel %vm306, %v2965, 0
      %v2995 = vsel %vm306, %v2966, 0
      %v2998 = vsel %vm306, %v2967, 0
      %v3001 = vsel %vm306, %v2968, 0
      %v3004 = vsel %vm306, %v2969, 0
      %v3007 = vsel %vm306, %v2970, 0
      %v3010 = vsel %vm306, %v2971, 0
      %v3013 = vsel %vm306, %v2972, 0
      %v3016 = vsel %vm306, %v2973, 0
      %v3019 = vsel %vm306, %v2974, 0
      %v3022 = vsel %vm306, %v2975, 0
      %3024 = vmatprep.subr.mxu0 0.0
      %v3025 = vand.u32 %v356, 4294901760
      %3026 = vmatpush1.xpose.msra.mxu0 %v3025
      %3027 = vmatprep.subr.mxu0 0.0
      %v3028 = vand.u32 %v359, 4294901760
      %3029 = vmatpush1.xpose.msra.mxu0 %v3028
      %3030 = vmatprep.subr.mxu0 0.0
      %3031 = vmatpush1.xpose.msra.mxu0 0.0
      %3032 = vmatprep.subr.mxu0 0.0
      %3033 = vmatpush1.xpose.msra.mxu0 0.0
      %3034 = vmatprep.subr.mxu0 0.0
      %3035 = vmatpush1.xpose.msra.mxu0 0.0
      %3036 = vmatprep.subr.mxu0 0.0
      %3037 = vmatpush1.xpose.msra.mxu0 0.0
      %3038 = vmatprep.subr.mxu0 0.0
      %3039 = vmatpush1.xpose.msra.mxu0 0.0
      %3040 = vmatprep.subr.mxu0 0.0
      %3041 = vmatpush1.xpose.msra.mxu0 0.0
      %3042 = vmatprep.subr.mxu0 0.0
      %3043 = vmatpush1.xpose.msra.mxu0 0.0
      %3044 = vmatprep.subr.mxu0 0.0
      %3045 = vmatpush1.xpose.msra.mxu0 0.0
      %3046 = vmatprep.subr.mxu0 0.0
      %3047 = vmatpush1.xpose.msra.mxu0 0.0
      %3048 = vmatprep.subr.mxu0 0.0
      %3049 = vmatpush1.xpose.msra.mxu0 0.0
      %3050 = vmatprep.subr.mxu0 0.0
      %3051 = vmatpush1.xpose.msra.mxu0 0.0
      %3052 = vmatprep.subr.mxu0 0.0
      %3053 = vmatpush1.xpose.msra.mxu0 0.0
      %3054 = vmatprep.subr.mxu0 0.0
      %3055 = vmatpush1.xpose.msra.mxu0 0.0
      %3056 = vmatprep.subr.mxu0 0.0
      %3057 = vmatpush1.xpose.msra.mxu0 0.0
      %3058 = vmatprep.subr.mxu0 0.0
      %3059 = vmatpush1.xpose.msra.mxu0 0.0
      %3060 = vmatprep.subr.mxu0 0.0
      %3061 = vmatpush1.xpose.msra.mxu0 0.0
      %3062 = vmatprep.subr.mxu0 0.0
      %3063 = vmatpush1.xpose.msra.mxu0 0.0
      %3064 = vmatprep.subr.mxu0 0.0
      %3065 = vmatpush1.xpose.msra.mxu0 0.0
      %3066 = vmatprep.subr.mxu0 0.0
      %3067 = vmatpush1.xpose.msra.mxu0 0.0
      %3068 = vmatprep.subr.mxu0 0.0
      %3069 = vmatpush1.xpose.msra.mxu0 0.0
      %3070 = vmatprep.subr.mxu0 0.0
      %3071 = vmatpush1.xpose.msra.mxu0 0.0
      %3072 = vmatprep.subr.mxu0 0.0
      %3073 = vmatpush1.xpose.msra.mxu0 0.0
      %3074 = vmatprep.subr.mxu0 0.0
      %3075 = vmatpush1.xpose.msra.mxu0 0.0
      %3076 = vmatprep.subr.mxu0 0.0
      %3077 = vmatpush1.xpose.msra.mxu0 0.0
      %3078 = vmatprep.subr.mxu0 0.0
      %3079 = vmatpush1.xpose.msra.mxu0 0.0
      %3080 = vmatprep.subr.mxu0 0.0
      %3081 = vmatpush1.xpose.msra.mxu0 0.0
      %3082 = vmatprep.subr.mxu0 0.0
      %3083 = vmatpush1.xpose.msra.mxu0 0.0
      %3084 = vmatprep.subr.mxu0 0.0
      %3085 = vmatpush1.xpose.msra.mxu0 0.0
      %3086 = vmatprep.subr.mxu0 0.0
      %3087 = vmatpush1.xpose.msra.mxu0 0.0
      %3088 = vmatprep.subr.mxu0 0.0
      %3089 = vmatpush1.xpose.msra.mxu0 0.0
      %3090 = vmatprep.mubr.f32.mxu0 0.0
      %v3091 = vand.u32 %v2977, 4294901760
      %v3092 = vsub.f32 %v2977, %v3091
      %v3093 = vand.u32 %v3092, 4294901760
      %v3094 = vsub.f32 %v3092, %v3093
      %v3095 = vand.u32 %v3094, 4294901760
      %3096 = vmatmul.mubr.f32.gmra.mrb[0].mxu0 %v3095
      %v3097 = vpop.f32.mrb[0].mxu0
      %v3098 = vadd.f32 0.0, %v3097
      %v3099 = vpop.f32.mrb[0].mxu0
      %3100 = vmatprep.mubr.f32.mxu0 0.0
      %v3101 = vand.u32 %v2980, 4294901760
      %v3102 = vsub.f32 %v2980, %v3101
      %v3103 = vand.u32 %v3102, 4294901760
      %v3104 = vsub.f32 %v3102, %v3103
      %v3105 = vand.u32 %v3104, 4294901760
      %3106 = vmatmul.mubr.f32.gmra.mrb[0].mxu0 %v3105
      %v3107 = vpop.f32.mrb[0].mxu0
      %v3108 = vadd.f32 0.0, %v3107
      %v3109 = vpop.f32.mrb[0].mxu0
      %3110 = vmatprep.mubr.f32.mxu0 0.0
      %v3111 = vand.u32 %v2983, 4294901760
      %v3112 = vsub.f32 %v2983, %v3111
      %v3113 = vand.u32 %v3112, 4294901760
      %v3114 = vsub.f32 %v3112, %v3113
      %v3115 = vand.u32 %v3114, 4294901760
      %3116 = vmatmul.mubr.f32.gmra.mrb[0].mxu0 %v3115
      %v3117 = vpop.f32.mrb[0].mxu0
      %v3118 = vadd.f32 0.0, %v3117
      %v3119 = vpop.f32.mrb[0].mxu0
      %3120 = vmatprep.mubr.f32.mxu0 0.0
      %v3121 = vand.u32 %v2986, 4294901760
      %v3122 = vsub.f32 %v2986, %v3121
      %v3123 = vand.u32 %v3122, 4294901760
      %v3124 = vsub.f32 %v3122, %v3123
      %v3125 = vand.u32 %v3124, 4294901760
      %3126 = vmatmul.mubr.f32.gmra.mrb[0].mxu0 %v3125
      %v3127 = vpop.f32.mrb[0].mxu0
      %v3128 = vadd.f32 0.0, %v3127
      %v3129 = vpop.f32.mrb[0].mxu0
      %3130 = vmatprep.mubr.f32.mxu0 0.0
      %v3131 = vand.u32 %v2989, 4294901760
      %v3132 = vsub.f32 %v2989, %v3131
      %v3133 = vand.u32 %v3132, 4294901760
      %v3134 = vsub.f32 %v3132, %v3133
      %v3135 = vand.u32 %v3134, 4294901760
      %3136 = vmatmul.mubr.f32.gmra.mrb[0].mxu0 %v3135
      %v3137 = vpop.f32.mrb[0].mxu0
      %v3138 = vadd.f32 0.0, %v3137
      %v3139 = vpop.f32.mrb[0].mxu0
      %3140 = vmatprep.mubr.f32.mxu0 0.0
      %v3141 = vand.u32 %v2992, 4294901760
      %v3142 = vsub.f32 %v2992, %v3141
      %v3143 = vand.u32 %v3142, 4294901760
      %v3144 = vsub.f32 %v3142, %v3143
      %v3145 = vand.u32 %v3144, 4294901760
      %3146 = vmatmul.mubr.f32.gmra.mrb[0].mxu0 %v3145
      %v3147 = vpop.f32.mrb[0].mxu0
      %v3148 = vadd.f32 0.0, %v3147
      %v3149 = vpop.f32.mrb[0].mxu0
      %3150 = vmatprep.mubr.f32.mxu0 0.0
      %v3151 = vand.u32 %v2995, 4294901760
      %v3152 = vsub.f32 %v2995, %v3151
      %v3153 = vand.u32 %v3152, 4294901760
      %v3154 = vsub.f32 %v3152, %v3153
      %v3155 = vand.u32 %v3154, 4294901760
      %3156 = vmatmul.mubr.f32.gmra.mrb[0].mxu0 %v3155
      %v3157 = vpop.f32.mrb[0].mxu0
      %v3158 = vadd.f32 0.0, %v3157
      %v3159 = vpop.f32.mrb[0].mxu0
      %3160 = vmatprep.mubr.f32.mxu0 0.0
      %v3161 = vand.u32 %v2998, 4294901760
      %v3162 = vsub.f32 %v2998, %v3161
      %v3163 = vand.u32 %v3162, 4294901760
      %v3164 = vsub.f32 %v3162, %v3163
      %v3165 = vand.u32 %v3164, 4294901760
      %3166 = vmatmul.mubr.f32.gmra.mrb[0].mxu0 %v3165
      %v3167 = vpop.f32.mrb[0].mxu0
      %v3168 = vadd.f32 0.0, %v3167
      %v3169 = vpop.f32.mrb[0].mxu0
      %3170 = vmatprep.mubr.f32.mxu0 0.0
      %v3171 = vand.u32 %v3001, 4294901760
      %v3172 = vsub.f32 %v3001, %v3171
      %v3173 = vand.u32 %v3172, 4294901760
      %v3174 = vsub.f32 %v3172, %v3173
      %v3175 = vand.u32 %v3174, 4294901760
      %3176 = vmatmul.mubr.f32.gmra.mrb[0].mxu0 %v3175
      %v3177 = vpop.f32.mrb[0].mxu0
      %v3178 = vadd.f32 0.0, %v3177
      %v3179 = vpop.f32.mrb[0].mxu0
      %3180 = vmatprep.mubr.f32.mxu0 0.0
      %v3181 = vand.u32 %v3004, 4294901760
      %v3182 = vsub.f32 %v3004, %v3181
      %v3183 = vand.u32 %v3182, 4294901760
      %v3184 = vsub.f32 %v3182, %v3183
      %v3185 = vand.u32 %v3184, 4294901760
      %3186 = vmatmul.mubr.f32.gmra.mrb[0].mxu0 %v3185
      %v3187 = vpop.f32.mrb[0].mxu0
      %v3188 = vadd.f32 0.0, %v3187
      %v3189 = vpop.f32.mrb[0].mxu0
      %3190 = vmatprep.mubr.f32.mxu0 0.0
      %v3191 = vand.u32 %v3007, 4294901760
      %v3192 = vsub.f32 %v3007, %v3191
      %v3193 = vand.u32 %v3192, 4294901760
      %v3194 = vsub.f32 %v3192, %v3193
      %v3195 = vand.u32 %v3194, 4294901760
      %3196 = vmatmul.mubr.f32.gmra.mrb[0].mxu0 %v3195
      %v3197 = vpop.f32.mrb[0].mxu0
      %v3198 = vadd.f32 0.0, %v3197
      %v3199 = vpop.f32.mrb[0].mxu0
      %3200 = vmatprep.mubr.f32.mxu0 0.0
      %v3201 = vand.u32 %v3010, 4294901760
      %v3202 = vsub.f32 %v3010, %v3201
      %v3203 = vand.u32 %v3202, 4294901760
      %v3204 = vsub.f32 %v3202, %v3203
      %v3205 = vand.u32 %v3204, 4294901760
      %3206 = vmatmul.mubr.f32.gmra.mrb[0].mxu0 %v3205
      %v3207 = vpop.f32.mrb[0].mxu0
      %v3208 = vadd.f32 0.0, %v3207
      %v3209 = vpop.f32.mrb[0].mxu0
      %3210 = vmatprep.mubr.f32.mxu0 0.0
      %v3211 = vand.u32 %v3013, 4294901760
      %v3212 = vsub.f32 %v3013, %v3211
      %v3213 = vand.u32 %v3212, 4294901760
      %v3214 = vsub.f32 %v3212, %v3213
      %v3215 = vand.u32 %v3214, 4294901760
      %3216 = vmatmul.mubr.f32.gmra.mrb[0].mxu0 %v3215
      %v3217 = vpop.f32.mrb[0].mxu0
      %v3218 = vadd.f32 0.0, %v3217
      %v3219 = vpop.f32.mrb[0].mxu0
      %3220 = vmatprep.mubr.f32.mxu0 0.0
      %v3221 = vand.u32 %v3016, 4294901760
      %v3222 = vsub.f32 %v3016, %v3221
      %v3223 = vand.u32 %v3222, 4294901760
      %v3224 = vsub.f32 %v3222, %v3223
      %v3225 = vand.u32 %v3224, 4294901760
      %3226 = vmatmul.mubr.f32.gmra.mrb[0].mxu0 %v3225
      %v3227 = vpop.f32.mrb[0].mxu0
      %v3228 = vadd.f32 0.0, %v3227
      %v3229 = vpop.f32.mrb[0].mxu0
      %3230 = vmatprep.mubr.f32.mxu0 0.0
      %v3231 = vand.u32 %v3019, 4294901760
      %v3232 = vsub.f32 %v3019, %v3231
      %v3233 = vand.u32 %v3232, 4294901760
      %v3234 = vsub.f32 %v3232, %v3233
      %v3235 = vand.u32 %v3234, 4294901760
      %3236 = vmatmul.mubr.f32.gmra.mrb[0].mxu0 %v3235
      %v3237 = vpop.f32.mrb[0].mxu0
      %v3238 = vadd.f32 0.0, %v3237
      %v3239 = vpop.f32.mrb[0].mxu0
      %3240 = vmatprep.mubr.f32.mxu0 0.0
      %v3241 = vand.u32 %v3022, 4294901760
      %v3242 = vsub.f32 %v3022, %v3241
      %v3243 = vand.u32 %v3242, 4294901760
      %v3244 = vsub.f32 %v3242, %v3243
      %v3245 = vand.u32 %v3244, 4294901760
      %3246 = vmatmul.mubr.f32.gmra.mrb[0].mxu0 %v3245
      %v3247 = vpop.f32.mrb[0].mxu0
      %v3248 = vadd.f32 0.0, %v3247
      %v3249 = vpop.f32.mrb[0].mxu0
      %3250 = vdwg.mxu0
      %3251 = vmatprep.subr.mxu0 0.0
      %v3252 = vand.u32 %v356, 4294901760
      %v3253 = vsub.f32 %v356, %v3252
      %v3254 = vand.u32 %v3253, 4294901760
      %v3255 = vsub.f32 %v3253, %v3254
      %v3256 = vand.u32 %v3255, 4294901760
      %3257 = vmatpush1.xpose.msra.mxu0 %v3256
      %3258 = vmatprep.subr.mxu0 0.0
      %v3259 = vand.u32 %v359, 4294901760
      %v3260 = vsub.f32 %v359, %v3259
      %v3261 = vand.u32 %v3260, 4294901760
      %v3262 = vsub.f32 %v3260, %v3261
      %v3263 = vand.u32 %v3262, 4294901760
      %3264 = vmatpush1.xpose.msra.mxu0 %v3263
      %3265 = vmatprep.subr.mxu0 0.0
      %3266 = vmatpush1.xpose.msra.mxu0 0.0
      %3267 = vmatprep.subr.mxu0 0.0
      %3268 = vmatpush1.xpose.msra.mxu0 0.0
      %3269 = vmatprep.subr.mxu0 0.0
      %3270 = vmatpush1.xpose.msra.mxu0 0.0
      %3271 = vmatprep.subr.mxu0 0.0
      %3272 = vmatpush1.xpose.msra.mxu0 0.0
      %3273 = vmatprep.subr.mxu0 0.0
      %3274 = vmatpush1.xpose.msra.mxu0 0.0
      %3275 = vmatprep.subr.mxu0 0.0
      %3276 = vmatpush1.xpose.msra.mxu0 0.0
      %3277 = vmatprep.subr.mxu0 0.0
      %3278 = vmatpush1.xpose.msra.mxu0 0.0
      %3279 = vmatprep.subr.mxu0 0.0
      %3280 = vmatpush1.xpose.msra.mxu0 0.0
      %3281 = vmatprep.subr.mxu0 0.0
      %3282 = vmatpush1.xpose.msra.mxu0 0.0
      %3283 = vmatprep.subr.mxu0 0.0
      %3284 = vmatpush1.xpose.msra.mxu0 0.0
      %3285 = vmatprep.subr.mxu0 0.0
      %3286 = vmatpush1.xpose.msra.mxu0 0.0
      %3287 = vmatprep.subr.mxu0 0.0
      %3288 = vmatpush1.xpose.msra.mxu0 0.0
      %3289 = vmatprep.subr.mxu0 0.0
      %3290 = vmatpush1.xpose.msra.mxu0 0.0
      %3291 = vmatprep.subr.mxu0 0.0
      %3292 = vmatpush1.xpose.msra.mxu0 0.0
      %3293 = vmatprep.subr.mxu0 0.0
      %3294 = vmatpush1.xpose.msra.mxu0 0.0
      %3295 = vmatprep.subr.mxu0 0.0
      %3296 = vmatpush1.xpose.msra.mxu0 0.0
      %3297 = vmatprep.subr.mxu0 0.0
      %3298 = vmatpush1.xpose.msra.mxu0 0.0
      %3299 = vmatprep.subr.mxu0 0.0
      %3300 = vmatpush1.xpose.msra.mxu0 0.0
      %3301 = vmatprep.subr.mxu0 0.0
      %3302 = vmatpush1.xpose.msra.mxu0 0.0
      %3303 = vmatprep.subr.mxu0 0.0
      %3304 = vmatpush1.xpose.msra.mxu0 0.0
      %3305 = vmatprep.subr.mxu0 0.0
      %3306 = vmatpush1.xpose.msra.mxu0 0.0
      %3307 = vmatprep.subr.mxu0 0.0
      %3308 = vmatpush1.xpose.msra.mxu0 0.0
      %3309 = vmatprep.subr.mxu0 0.0
      %3310 = vmatpush1.xpose.msra.mxu0 0.0
      %3311 = vmatprep.subr.mxu0 0.0
      %3312 = vmatpush1.xpose.msra.mxu0 0.0
      %3313 = vmatprep.subr.mxu0 0.0
      %3314 = vmatpush1.xpose.msra.mxu0 0.0
      %3315 = vmatprep.subr.mxu0 0.0
      %3316 = vmatpush1.xpose.msra.mxu0 0.0
      %3317 = vmatprep.subr.mxu0 0.0
      %3318 = vmatpush1.xpose.msra.mxu0 0.0
      %3319 = vmatprep.subr.mxu0 0.0
      %3320 = vmatpush1.xpose.msra.mxu0 0.0
      %3321 = vmatprep.subr.mxu0 0.0
      %3322 = vmatpush1.xpose.msra.mxu0 0.0
      %3323 = vmatprep.subr.mxu0 0.0
      %3324 = vmatpush1.xpose.msra.mxu0 0.0
      %3325 = vmatprep.mubr.f32.mxu0 0.0
      %v3326 = vand.u32 %v2977, 4294901760
      %3327 = vmatmul.mubr.f32.gmra.mrb[0].mxu0 %v3326
      %v3328 = vpop.f32.mrb[0].mxu0
      %v3329 = vadd.f32 %v3098, %v3328
      %v3330 = vpop.f32.mrb[0].mxu0
      %3331 = vmatprep.mubr.f32.mxu0 0.0
      %v3332 = vand.u32 %v2980, 4294901760
      %3333 = vmatmul.mubr.f32.gmra.mrb[0].mxu0 %v3332
      %v3334 = vpop.f32.mrb[0].mxu0
      %v3335 = vadd.f32 %v3108, %v3334
      %v3336 = vpop.f32.mrb[0].mxu0
      %3337 = vmatprep.mubr.f32.mxu0 0.0
      %v3338 = vand.u32 %v2983, 4294901760
      %3339 = vmatmul.mubr.f32.gmra.mrb[0].mxu0 %v3338
      %v3340 = vpop.f32.mrb[0].mxu0
      %v3341 = vadd.f32 %v3118, %v3340
      %v3342 = vpop.f32.mrb[0].mxu0
      %3343 = vmatprep.mubr.f32.mxu0 0.0
      %v3344 = vand.u32 %v2986, 4294901760
      %3345 = vmatmul.mubr.f32.gmra.mrb[0].mxu0 %v3344
      %v3346 = vpop.f32.mrb[0].mxu0
      %v3347 = vadd.f32 %v3128, %v3346
      %v3348 = vpop.f32.mrb[0].mxu0
      %3349 = vmatprep.mubr.f32.mxu0 0.0
      %v3350 = vand.u32 %v2989, 4294901760
      %3351 = vmatmul.mubr.f32.gmra.mrb[0].mxu0 %v3350
      %v3352 = vpop.f32.mrb[0].mxu0
      %v3353 = vadd.f32 %v3138, %v3352
      %v3354 = vpop.f32.mrb[0].mxu0
      %3355 = vmatprep.mubr.f32.mxu0 0.0
      %v3356 = vand.u32 %v2992, 4294901760
      %3357 = vmatmul.mubr.f32.gmra.mrb[0].mxu0 %v3356
      %v3358 = vpop.f32.mrb[0].mxu0
      %v3359 = vadd.f32 %v3148, %v3358
      %v3360 = vpop.f32.mrb[0].mxu0
      %3361 = vmatprep.mubr.f32.mxu0 0.0
      %v3362 = vand.u32 %v2995, 4294901760
      %3363 = vmatmul.mubr.f32.gmra.mrb[0].mxu0 %v3362
      %v3364 = vpop.f32.mrb[0].mxu0
      %v3365 = vadd.f32 %v3158, %v3364
      %v3366 = vpop.f32.mrb[0].mxu0
      %3367 = vmatprep.mubr.f32.mxu0 0.0
      %v3368 = vand.u32 %v2998, 4294901760
      %3369 = vmatmul.mubr.f32.gmra.mrb[0].mxu0 %v3368
      %v3370 = vpop.f32.mrb[0].mxu0
      %v3371 = vadd.f32 %v3168, %v3370
      %v3372 = vpop.f32.mrb[0].mxu0
      %3373 = vmatprep.mubr.f32.mxu0 0.0
      %v3374 = vand.u32 %v3001, 4294901760
      %3375 = vmatmul.mubr.f32.gmra.mrb[0].mxu0 %v3374
      %v3376 = vpop.f32.mrb[0].mxu0
      %v3377 = vadd.f32 %v3178, %v3376
      %v3378 = vpop.f32.mrb[0].mxu0
      %3379 = vmatprep.mubr.f32.mxu0 0.0
      %v3380 = vand.u32 %v3004, 4294901760
      %3381 = vmatmul.mubr.f32.gmra.mrb[0].mxu0 %v3380
      %v3382 = vpop.f32.mrb[0].mxu0
      %v3383 = vadd.f32 %v3188, %v3382
      %v3384 = vpop.f32.mrb[0].mxu0
      %3385 = vmatprep.mubr.f32.mxu0 0.0
      %v3386 = vand.u32 %v3007, 4294901760
      %3387 = vmatmul.mubr.f32.gmra.mrb[0].mxu0 %v3386
      %v3388 = vpop.f32.mrb[0].mxu0
      %v3389 = vadd.f32 %v3198, %v3388
      %v3390 = vpop.f32.mrb[0].mxu0
      %3391 = vmatprep.mubr.f32.mxu0 0.0
      %v3392 = vand.u32 %v3010, 4294901760
      %3393 = vmatmul.mubr.f32.gmra.mrb[0].mxu0 %v3392
      %v3394 = vpop.f32.mrb[0].mxu0
      %v3395 = vadd.f32 %v3208, %v3394
      %v3396 = vpop.f32.mrb[0].mxu0
      %3397 = vmatprep.mubr.f32.mxu0 0.0
      %v3398 = vand.u32 %v3013, 4294901760
      %3399 = vmatmul.mubr.f32.gmra.mrb[0].mxu0 %v3398
      %v3400 = vpop.f32.mrb[0].mxu0
      %v3401 = vadd.f32 %v3218, %v3400
      %v3402 = vpop.f32.mrb[0].mxu0
      %3403 = vmatprep.mubr.f32.mxu0 0.0
      %v3404 = vand.u32 %v3016, 4294901760
      %3405 = vmatmul.mubr.f32.gmra.mrb[0].mxu0 %v3404
      %v3406 = vpop.f32.mrb[0].mxu0
      %v3407 = vadd.f32 %v3228, %v3406
      %v3408 = vpop.f32.mrb[0].mxu0
      %3409 = vmatprep.mubr.f32.mxu0 0.0
      %v3410 = vand.u32 %v3019, 4294901760
      %3411 = vmatmul.mubr.f32.gmra.mrb[0].mxu0 %v3410
      %v3412 = vpop.f32.mrb[0].mxu0
      %v3413 = vadd.f32 %v3238, %v3412
      %v3414 = vpop.f32.mrb[0].mxu0
      %3415 = vmatprep.mubr.f32.mxu0 0.0
      %v3416 = vand.u32 %v3022, 4294901760
      %3417 = vmatmul.mubr.f32.gmra.mrb[0].mxu0 %v3416
      %v3418 = vpop.f32.mrb[0].mxu0
      %v3419 = vadd.f32 %v3248, %v3418
      %v3420 = vpop.f32.mrb[0].mxu0
      %3421 = vdwg.mxu0
      %3422 = vmatprep.subr.mxu0 0.0
      %v3423 = vand.u32 %v356, 4294901760
      %v3424 = vsub.f32 %v356, %v3423
      %3425 = vmatpush1.xpose.msra.mxu0 %v3424
      %3426 = vmatprep.subr.mxu0 0.0
      %v3427 = vand.u32 %v359, 4294901760
      %v3428 = vsub.f32 %v359, %v3427
      %3429 = vmatpush1.xpose.msra.mxu0 %v3428
      %3430 = vmatprep.subr.mxu0 0.0
      %3431 = vmatpush1.xpose.msra.mxu0 0.0
      %3432 = vmatprep.subr.mxu0 0.0
      %3433 = vmatpush1.xpose.msra.mxu0 0.0
      %3434 = vmatprep.subr.mxu0 0.0
      %3435 = vmatpush1.xpose.msra.mxu0 0.0
      %3436 = vmatprep.subr.mxu0 0.0
      %3437 = vmatpush1.xpose.msra.mxu0 0.0
      %3438 = vmatprep.subr.mxu0 0.0
      %3439 = vmatpush1.xpose.msra.mxu0 0.0
      %3440 = vmatprep.subr.mxu0 0.0
      %3441 = vmatpush1.xpose.msra.mxu0 0.0
      %3442 = vmatprep.subr.mxu0 0.0
      %3443 = vmatpush1.xpose.msra.mxu0 0.0
      %3444 = vmatprep.subr.mxu0 0.0
      %3445 = vmatpush1.xpose.msra.mxu0 0.0
      %3446 = vmatprep.subr.mxu0 0.0
      %3447 = vmatpush1.xpose.msra.mxu0 0.0
      %3448 = vmatprep.subr.mxu0 0.0
      %3449 = vmatpush1.xpose.msra.mxu0 0.0
      %3450 = vmatprep.subr.mxu0 0.0
      %3451 = vmatpush1.xpose.msra.mxu0 0.0
      %3452 = vmatprep.subr.mxu0 0.0
      %3453 = vmatpush1.xpose.msra.mxu0 0.0
      %3454 = vmatprep.subr.mxu0 0.0
      %3455 = vmatpush1.xpose.msra.mxu0 0.0
      %3456 = vmatprep.subr.mxu0 0.0
      %3457 = vmatpush1.xpose.msra.mxu0 0.0
      %3458 = vmatprep.subr.mxu0 0.0
      %3459 = vmatpush1.xpose.msra.mxu0 0.0
      %3460 = vmatprep.subr.mxu0 0.0
      %3461 = vmatpush1.xpose.msra.mxu0 0.0
      %3462 = vmatprep.subr.mxu0 0.0
      %3463 = vmatpush1.xpose.msra.mxu0 0.0
      %3464 = vmatprep.subr.mxu0 0.0
      %3465 = vmatpush1.xpose.msra.mxu0 0.0
      %3466 = vmatprep.subr.mxu0 0.0
      %3467 = vmatpush1.xpose.msra.mxu0 0.0
      %3468 = vmatprep.subr.mxu0 0.0
      %3469 = vmatpush1.xpose.msra.mxu0 0.0
      %3470 = vmatprep.subr.mxu0 0.0
      %3471 = vmatpush1.xpose.msra.mxu0 0.0
      %3472 = vmatprep.subr.mxu0 0.0
      %3473 = vmatpush1.xpose.msra.mxu0 0.0
      %3474 = vmatprep.subr.mxu0 0.0
      %3475 = vmatpush1.xpose.msra.mxu0 0.0
      %3476 = vmatprep.subr.mxu0 0.0
      %3477 = vmatpush1.xpose.msra.mxu0 0.0
      %3478 = vmatprep.subr.mxu0 0.0
      %3479 = vmatpush1.xpose.msra.mxu0 0.0
      %3480 = vmatprep.subr.mxu0 0.0
      %3481 = vmatpush1.xpose.msra.mxu0 0.0
      %3482 = vmatprep.subr.mxu0 0.0
      %3483 = vmatpush1.xpose.msra.mxu0 0.0
      %3484 = vmatprep.subr.mxu0 0.0
      %3485 = vmatpush1.xpose.msra.mxu0 0.0
      %3486 = vmatprep.subr.mxu0 0.0
      %3487 = vmatpush1.xpose.msra.mxu0 0.0
      %3488 = vmatprep.subr.mxu0 0.0
      %3489 = vmatpush1.xpose.msra.mxu0 0.0
      %3490 = vmatprep.mubr.f32.mxu0 0.0
      %v3491 = vand.u32 %v2977, 4294901760
      %v3492 = vsub.f32 %v2977, %v3491
      %3493 = vmatmul.mubr.f32.gmra.mrb[0].mxu0 %v3492
      %v3494 = vpop.f32.mrb[0].mxu0
      %v3495 = vadd.f32 %v3329, %v3494
      %v3496 = vpop.f32.mrb[0].mxu0
      %3497 = vmatprep.mubr.f32.mxu0 0.0
      %v3498 = vand.u32 %v2980, 4294901760
      %v3499 = vsub.f32 %v2980, %v3498
      %3500 = vmatmul.mubr.f32.gmra.mrb[0].mxu0 %v3499
      %v3501 = vpop.f32.mrb[0].mxu0
      %v3502 = vadd.f32 %v3335, %v3501
      %v3503 = vpop.f32.mrb[0].mxu0
      %3504 = vmatprep.mubr.f32.mxu0 0.0
      %v3505 = vand.u32 %v2983, 4294901760
      %v3506 = vsub.f32 %v2983, %v3505
      %3507 = vmatmul.mubr.f32.gmra.mrb[0].mxu0 %v3506
      %v3508 = vpop.f32.mrb[0].mxu0
      %v3509 = vadd.f32 %v3341, %v3508
      %v3510 = vpop.f32.mrb[0].mxu0
      %3511 = vmatprep.mubr.f32.mxu0 0.0
      %v3512 = vand.u32 %v2986, 4294901760
      %v3513 = vsub.f32 %v2986, %v3512
      %3514 = vmatmul.mubr.f32.gmra.mrb[0].mxu0 %v3513
      %v3515 = vpop.f32.mrb[0].mxu0
      %v3516 = vadd.f32 %v3347, %v3515
      %v3517 = vpop.f32.mrb[0].mxu0
      %3518 = vmatprep.mubr.f32.mxu0 0.0
      %v3519 = vand.u32 %v2989, 4294901760
      %v3520 = vsub.f32 %v2989, %v3519
      %3521 = vmatmul.mubr.f32.gmra.mrb[0].mxu0 %v3520
      %v3522 = vpop.f32.mrb[0].mxu0
      %v3523 = vadd.f32 %v3353, %v3522
      %v3524 = vpop.f32.mrb[0].mxu0
      %3525 = vmatprep.mubr.f32.mxu0 0.0
      %v3526 = vand.u32 %v2992, 4294901760
      %v3527 = vsub.f32 %v2992, %v3526
      %3528 = vmatmul.mubr.f32.gmra.mrb[0].mxu0 %v3527
      %v3529 = vpop.f32.mrb[0].mxu0
      %v3530 = vadd.f32 %v3359, %v3529
      %v3531 = vpop.f32.mrb[0].mxu0
      %3532 = vmatprep.mubr.f32.mxu0 0.0
      %v3533 = vand.u32 %v2995, 4294901760
      %v3534 = vsub.f32 %v2995, %v3533
      %3535 = vmatmul.mubr.f32.gmra.mrb[0].mxu0 %v3534
      %v3536 = vpop.f32.mrb[0].mxu0
      %v3537 = vadd.f32 %v3365, %v3536
      %v3538 = vpop.f32.mrb[0].mxu0
      %3539 = vmatprep.mubr.f32.mxu0 0.0
      %v3540 = vand.u32 %v2998, 4294901760
      %v3541 = vsub.f32 %v2998, %v3540
      %3542 = vmatmul.mubr.f32.gmra.mrb[0].mxu0 %v3541
      %v3543 = vpop.f32.mrb[0].mxu0
      %v3544 = vadd.f32 %v3371, %v3543
      %v3545 = vpop.f32.mrb[0].mxu0
      %3546 = vmatprep.mubr.f32.mxu0 0.0
      %v3547 = vand.u32 %v3001, 4294901760
      %v3548 = vsub.f32 %v3001, %v3547
      %3549 = vmatmul.mubr.f32.gmra.mrb[0].mxu0 %v3548
      %v3550 = vpop.f32.mrb[0].mxu0
      %v3551 = vadd.f32 %v3377, %v3550
      %v3552 = vpop.f32.mrb[0].mxu0
      %3553 = vmatprep.mubr.f32.mxu0 0.0
      %v3554 = vand.u32 %v3004, 4294901760
      %v3555 = vsub.f32 %v3004, %v3554
      %3556 = vmatmul.mubr.f32.gmra.mrb[0].mxu0 %v3555
      %v3557 = vpop.f32.mrb[0].mxu0
      %v3558 = vadd.f32 %v3383, %v3557
      %v3559 = vpop.f32.mrb[0].mxu0
      %3560 = vmatprep.mubr.f32.mxu0 0.0
      %v3561 = vand.u32 %v3007, 4294901760
      %v3562 = vsub.f32 %v3007, %v3561
      %3563 = vmatmul.mubr.f32.gmra.mrb[0].mxu0 %v3562
      %v3564 = vpop.f32.mrb[0].mxu0
      %v3565 = vadd.f32 %v3389, %v3564
      %v3566 = vpop.f32.mrb[0].mxu0
      %3567 = vmatprep.mubr.f32.mxu0 0.0
      %v3568 = vand.u32 %v3010, 4294901760
      %v3569 = vsub.f32 %v3010, %v3568
      %3570 = vmatmul.mubr.f32.gmra.mrb[0].mxu0 %v3569
      %v3571 = vpop.f32.mrb[0].mxu0
      %v3572 = vadd.f32 %v3395, %v3571
      %v3573 = vpop.f32.mrb[0].mxu0
      %3574 = vmatprep.mubr.f32.mxu0 0.0
      %v3575 = vand.u32 %v3013, 4294901760
      %v3576 = vsub.f32 %v3013, %v3575
      %3577 = vmatmul.mubr.f32.gmra.mrb[0].mxu0 %v3576
      %v3578 = vpop.f32.mrb[0].mxu0
      %v3579 = vadd.f32 %v3401, %v3578
      %v3580 = vpop.f32.mrb[0].mxu0
      %3581 = vmatprep.mubr.f32.mxu0 0.0
      %v3582 = vand.u32 %v3016, 4294901760
      %v3583 = vsub.f32 %v3016, %v3582
      %3584 = vmatmul.mubr.f32.gmra.mrb[0].mxu0 %v3583
      %v3585 = vpop.f32.mrb[0].mxu0
      %v3586 = vadd.f32 %v3407, %v3585
      %v3587 = vpop.f32.mrb[0].mxu0
      %3588 = vmatprep.mubr.f32.mxu0 0.0
      %v3589 = vand.u32 %v3019, 4294901760
      %v3590 = vsub.f32 %v3019, %v3589
      %3591 = vmatmul.mubr.f32.gmra.mrb[0].mxu0 %v3590
      %v3592 = vpop.f32.mrb[0].mxu0
      %v3593 = vadd.f32 %v3413, %v3592
      %v3594 = vpop.f32.mrb[0].mxu0
      %3595 = vmatprep.mubr.f32.mxu0 0.0
      %v3596 = vand.u32 %v3022, 4294901760
      %v3597 = vsub.f32 %v3022, %v3596
      %3598 = vmatmul.mubr.f32.gmra.mrb[0].mxu0 %v3597
      %v3599 = vpop.f32.mrb[0].mxu0
      %v3600 = vadd.f32 %v3419, %v3599
      %v3601 = vpop.f32.mrb[0].mxu0
      %3602 = vdwg.mxu0
      %3603 = vmatprep.subr.mxu0 0.0
      %v3604 = vand.u32 %v356, 4294901760
      %3605 = vmatpush1.xpose.msra.mxu0 %v3604
      %3606 = vmatprep.subr.mxu0 0.0
      %v3607 = vand.u32 %v359, 4294901760
      %3608 = vmatpush1.xpose.msra.mxu0 %v3607
      %3609 = vmatprep.subr.mxu0 0.0
      %3610 = vmatpush1.xpose.msra.mxu0 0.0
      %3611 = vmatprep.subr.mxu0 0.0
      %3612 = vmatpush1.xpose.msra.mxu0 0.0
      %3613 = vmatprep.subr.mxu0 0.0
      %3614 = vmatpush1.xpose.msra.mxu0 0.0
      %3615 = vmatprep.subr.mxu0 0.0
      %3616 = vmatpush1.xpose.msra.mxu0 0.0
      %3617 = vmatprep.subr.mxu0 0.0
      %3618 = vmatpush1.xpose.msra.mxu0 0.0
      %3619 = vmatprep.subr.mxu0 0.0
      %3620 = vmatpush1.xpose.msra.mxu0 0.0
      %3621 = vmatprep.subr.mxu0 0.0
      %3622 = vmatpush1.xpose.msra.mxu0 0.0
      %3623 = vmatprep.subr.mxu0 0.0
      %3624 = vmatpush1.xpose.msra.mxu0 0.0
      %3625 = vmatprep.subr.mxu0 0.0
      %3626 = vmatpush1.xpose.msra.mxu0 0.0
      %3627 = vmatprep.subr.mxu0 0.0
      %3628 = vmatpush1.xpose.msra.mxu0 0.0
      %3629 = vmatprep.subr.mxu0 0.0
      %3630 = vmatpush1.xpose.msra.mxu0 0.0
      %3631 = vmatprep.subr.mxu0 0.0
      %3632 = vmatpush1.xpose.msra.mxu0 0.0
      %3633 = vmatprep.subr.mxu0 0.0
      %3634 = vmatpush1.xpose.msra.mxu0 0.0
      %3635 = vmatprep.subr.mxu0 0.0
      %3636 = vmatpush1.xpose.msra.mxu0 0.0
      %3637 = vmatprep.subr.mxu0 0.0
      %3638 = vmatpush1.xpose.msra.mxu0 0.0
      %3639 = vmatprep.subr.mxu0 0.0
      %3640 = vmatpush1.xpose.msra.mxu0 0.0
      %3641 = vmatprep.subr.mxu0 0.0
      %3642 = vmatpush1.xpose.msra.mxu0 0.0
      %3643 = vmatprep.subr.mxu0 0.0
      %3644 = vmatpush1.xpose.msra.mxu0 0.0
      %3645 = vmatprep.subr.mxu0 0.0
      %3646 = vmatpush1.xpose.msra.mxu0 0.0
      %3647 = vmatprep.subr.mxu0 0.0
      %3648 = vmatpush1.xpose.msra.mxu0 0.0
      %3649 = vmatprep.subr.mxu0 0.0
      %3650 = vmatpush1.xpose.msra.mxu0 0.0
      %3651 = vmatprep.subr.mxu0 0.0
      %3652 = vmatpush1.xpose.msra.mxu0 0.0
      %3653 = vmatprep.subr.mxu0 0.0
      %3654 = vmatpush1.xpose.msra.mxu0 0.0
      %3655 = vmatprep.subr.mxu0 0.0
      %3656 = vmatpush1.xpose.msra.mxu0 0.0
      %3657 = vmatprep.subr.mxu0 0.0
      %3658 = vmatpush1.xpose.msra.mxu0 0.0
      %3659 = vmatprep.subr.mxu0 0.0
      %3660 = vmatpush1.xpose.msra.mxu0 0.0
      %3661 = vmatprep.subr.mxu0 0.0
      %3662 = vmatpush1.xpose.msra.mxu0 0.0
      %3663 = vmatprep.subr.mxu0 0.0
      %3664 = vmatpush1.xpose.msra.mxu0 0.0
      %3665 = vmatprep.subr.mxu0 0.0
      %3666 = vmatpush1.xpose.msra.mxu0 0.0
      %3667 = vmatprep.subr.mxu0 0.0
      %3668 = vmatpush1.xpose.msra.mxu0 0.0
      %3669 = vmatprep.mubr.f32.mxu0 0.0
      %v3670 = vand.u32 %v2977, 4294901760
      %v3671 = vsub.f32 %v2977, %v3670
      %v3672 = vand.u32 %v3671, 4294901760
      %3673 = vmatmul.mubr.f32.gmra.mrb[0].mxu0 %v3672
      %v3674 = vpop.f32.mrb[0].mxu0
      %v3675 = vadd.f32 %v3495, %v3674
      %v3676 = vpop.f32.mrb[0].mxu0
      %3677 = vmatprep.mubr.f32.mxu0 0.0
      %v3678 = vand.u32 %v2980, 4294901760
      %v3679 = vsub.f32 %v2980, %v3678
      %v3680 = vand.u32 %v3679, 4294901760
      %3681 = vmatmul.mubr.f32.gmra.mrb[0].mxu0 %v3680
      %v3682 = vpop.f32.mrb[0].mxu0
      %v3683 = vadd.f32 %v3502, %v3682
      %v3684 = vpop.f32.mrb[0].mxu0
      %3685 = vmatprep.mubr.f32.mxu0 0.0
      %v3686 = vand.u32 %v2983, 4294901760
      %v3687 = vsub.f32 %v2983, %v3686
      %v3688 = vand.u32 %v3687, 4294901760
      %3689 = vmatmul.mubr.f32.gmra.mrb[0].mxu0 %v3688
      %v3690 = vpop.f32.mrb[0].mxu0
      %v3691 = vadd.f32 %v3509, %v3690
      %v3692 = vpop.f32.mrb[0].mxu0
      %3693 = vmatprep.mubr.f32.mxu0 0.0
      %v3694 = vand.u32 %v2986, 4294901760
      %v3695 = vsub.f32 %v2986, %v3694
      %v3696 = vand.u32 %v3695, 4294901760
      %3697 = vmatmul.mubr.f32.gmra.mrb[0].mxu0 %v3696
      %v3698 = vpop.f32.mrb[0].mxu0
      %v3699 = vadd.f32 %v3516, %v3698
      %v3700 = vpop.f32.mrb[0].mxu0
      %3701 = vmatprep.mubr.f32.mxu0 0.0
      %v3702 = vand.u32 %v2989, 4294901760
      %v3703 = vsub.f32 %v2989, %v3702
      %v3704 = vand.u32 %v3703, 4294901760
      %3705 = vmatmul.mubr.f32.gmra.mrb[0].mxu0 %v3704
      %v3706 = vpop.f32.mrb[0].mxu0
      %v3707 = vadd.f32 %v3523, %v3706
      %v3708 = vpop.f32.mrb[0].mxu0
      %3709 = vmatprep.mubr.f32.mxu0 0.0
      %v3710 = vand.u32 %v2992, 4294901760
      %v3711 = vsub.f32 %v2992, %v3710
      %v3712 = vand.u32 %v3711, 4294901760
      %3713 = vmatmul.mubr.f32.gmra.mrb[0].mxu0 %v3712
      %v3714 = vpop.f32.mrb[0].mxu0
      %v3715 = vadd.f32 %v3530, %v3714
      %v3716 = vpop.f32.mrb[0].mxu0
      %3717 = vmatprep.mubr.f32.mxu0 0.0
      %v3718 = vand.u32 %v2995, 4294901760
      %v3719 = vsub.f32 %v2995, %v3718
      %v3720 = vand.u32 %v3719, 4294901760
      %3721 = vmatmul.mubr.f32.gmra.mrb[0].mxu0 %v3720
      %v3722 = vpop.f32.mrb[0].mxu0
      %v3723 = vadd.f32 %v3537, %v3722
      %v3724 = vpop.f32.mrb[0].mxu0
      %3725 = vmatprep.mubr.f32.mxu0 0.0
      %v3726 = vand.u32 %v2998, 4294901760
      %v3727 = vsub.f32 %v2998, %v3726
      %v3728 = vand.u32 %v3727, 4294901760
      %3729 = vmatmul.mubr.f32.gmra.mrb[0].mxu0 %v3728
      %v3730 = vpop.f32.mrb[0].mxu0
      %v3731 = vadd.f32 %v3544, %v3730
      %v3732 = vpop.f32.mrb[0].mxu0
      %3733 = vmatprep.mubr.f32.mxu0 0.0
      %v3734 = vand.u32 %v3001, 4294901760
      %v3735 = vsub.f32 %v3001, %v3734
      %v3736 = vand.u32 %v3735, 4294901760
      %3737 = vmatmul.mubr.f32.gmra.mrb[0].mxu0 %v3736
      %v3738 = vpop.f32.mrb[0].mxu0
      %v3739 = vadd.f32 %v3551, %v3738
      %v3740 = vpop.f32.mrb[0].mxu0
      %3741 = vmatprep.mubr.f32.mxu0 0.0
      %v3742 = vand.u32 %v3004, 4294901760
      %v3743 = vsub.f32 %v3004, %v3742
      %v3744 = vand.u32 %v3743, 4294901760
      %3745 = vmatmul.mubr.f32.gmra.mrb[0].mxu0 %v3744
      %v3746 = vpop.f32.mrb[0].mxu0
      %v3747 = vadd.f32 %v3558, %v3746
      %v3748 = vpop.f32.mrb[0].mxu0
      %3749 = vmatprep.mubr.f32.mxu0 0.0
      %v3750 = vand.u32 %v3007, 4294901760
      %v3751 = vsub.f32 %v3007, %v3750
      %v3752 = vand.u32 %v3751, 4294901760
      %3753 = vmatmul.mubr.f32.gmra.mrb[0].mxu0 %v3752
      %v3754 = vpop.f32.mrb[0].mxu0
      %v3755 = vadd.f32 %v3565, %v3754
      %v3756 = vpop.f32.mrb[0].mxu0
      %3757 = vmatprep.mubr.f32.mxu0 0.0
      %v3758 = vand.u32 %v3010, 4294901760
      %v3759 = vsub.f32 %v3010, %v3758
      %v3760 = vand.u32 %v3759, 4294901760
      %3761 = vmatmul.mubr.f32.gmra.mrb[0].mxu0 %v3760
      %v3762 = vpop.f32.mrb[0].mxu0
      %v3763 = vadd.f32 %v3572, %v3762
      %v3764 = vpop.f32.mrb[0].mxu0
      %3765 = vmatprep.mubr.f32.mxu0 0.0
      %v3766 = vand.u32 %v3013, 4294901760
      %v3767 = vsub.f32 %v3013, %v3766
      %v3768 = vand.u32 %v3767, 4294901760
      %3769 = vmatmul.mubr.f32.gmra.mrb[0].mxu0 %v3768
      %v3770 = vpop.f32.mrb[0].mxu0
      %v3771 = vadd.f32 %v3579, %v3770
      %v3772 = vpop.f32.mrb[0].mxu0
      %3773 = vmatprep.mubr.f32.mxu0 0.0
      %v3774 = vand.u32 %v3016, 4294901760
      %v3775 = vsub.f32 %v3016, %v3774
      %v3776 = vand.u32 %v3775, 4294901760
      %3777 = vmatmul.mubr.f32.gmra.mrb[0].mxu0 %v3776
      %v3778 = vpop.f32.mrb[0].mxu0
      %v3779 = vadd.f32 %v3586, %v3778
      %v3780 = vpop.f32.mrb[0].mxu0
      %3781 = vmatprep.mubr.f32.mxu0 0.0
      %v3782 = vand.u32 %v3019, 4294901760
      %v3783 = vsub.f32 %v3019, %v3782
      %v3784 = vand.u32 %v3783, 4294901760
      %3785 = vmatmul.mubr.f32.gmra.mrb[0].mxu0 %v3784
      %v3786 = vpop.f32.mrb[0].mxu0
      %v3787 = vadd.f32 %v3593, %v3786
      %v3788 = vpop.f32.mrb[0].mxu0
      %3789 = vmatprep.mubr.f32.mxu0 0.0
      %v3790 = vand.u32 %v3022, 4294901760
      %v3791 = vsub.f32 %v3022, %v3790
      %v3792 = vand.u32 %v3791, 4294901760
      %3793 = vmatmul.mubr.f32.gmra.mrb[0].mxu0 %v3792
      %v3794 = vpop.f32.mrb[0].mxu0
      %v3795 = vadd.f32 %v3600, %v3794
      %v3796 = vpop.f32.mrb[0].mxu0
      %3797 = vdwg.mxu0
      %3798 = vmatprep.subr.mxu0 0.0
      %v3799 = vand.u32 %v356, 4294901760
      %v3800 = vsub.f32 %v356, %v3799
      %v3801 = vand.u32 %v3800, 4294901760
      %3802 = vmatpush1.xpose.msra.mxu0 %v3801
      %3803 = vmatprep.subr.mxu0 0.0
      %v3804 = vand.u32 %v359, 4294901760
      %v3805 = vsub.f32 %v359, %v3804
      %v3806 = vand.u32 %v3805, 4294901760
      %3807 = vmatpush1.xpose.msra.mxu0 %v3806
      %3808 = vmatprep.subr.mxu0 0.0
      %3809 = vmatpush1.xpose.msra.mxu0 0.0
      %3810 = vmatprep.subr.mxu0 0.0
      %3811 = vmatpush1.xpose.msra.mxu0 0.0
      %3812 = vmatprep.subr.mxu0 0.0
      %3813 = vmatpush1.xpose.msra.mxu0 0.0
      %3814 = vmatprep.subr.mxu0 0.0
      %3815 = vmatpush1.xpose.msra.mxu0 0.0
      %3816 = vmatprep.subr.mxu0 0.0
      %3817 = vmatpush1.xpose.msra.mxu0 0.0
      %3818 = vmatprep.subr.mxu0 0.0
      %3819 = vmatpush1.xpose.msra.mxu0 0.0
      %3820 = vmatprep.subr.mxu0 0.0
      %3821 = vmatpush1.xpose.msra.mxu0 0.0
      %3822 = vmatprep.subr.mxu0 0.0
      %3823 = vmatpush1.xpose.msra.mxu0 0.0
      %3824 = vmatprep.subr.mxu0 0.0
      %3825 = vmatpush1.xpose.msra.mxu0 0.0
      %3826 = vmatprep.subr.mxu0 0.0
      %3827 = vmatpush1.xpose.msra.mxu0 0.0
      %3828 = vmatprep.subr.mxu0 0.0
      %3829 = vmatpush1.xpose.msra.mxu0 0.0
      %3830 = vmatprep.subr.mxu0 0.0
      %3831 = vmatpush1.xpose.msra.mxu0 0.0
      %3832 = vmatprep.subr.mxu0 0.0
      %3833 = vmatpush1.xpose.msra.mxu0 0.0
      %3834 = vmatprep.subr.mxu0 0.0
      %3835 = vmatpush1.xpose.msra.mxu0 0.0
      %3836 = vmatprep.subr.mxu0 0.0
      %3837 = vmatpush1.xpose.msra.mxu0 0.0
      %3838 = vmatprep.subr.mxu0 0.0
      %3839 = vmatpush1.xpose.msra.mxu0 0.0
      %3840 = vmatprep.subr.mxu0 0.0
      %3841 = vmatpush1.xpose.msra.mxu0 0.0
      %3842 = vmatprep.subr.mxu0 0.0
      %3843 = vmatpush1.xpose.msra.mxu0 0.0
      %3844 = vmatprep.subr.mxu0 0.0
      %3845 = vmatpush1.xpose.msra.mxu0 0.0
      %3846 = vmatprep.subr.mxu0 0.0
      %3847 = vmatpush1.xpose.msra.mxu0 0.0
      %3848 = vmatprep.subr.mxu0 0.0
      %3849 = vmatpush1.xpose.msra.mxu0 0.0
      %3850 = vmatprep.subr.mxu0 0.0
      %3851 = vmatpush1.xpose.msra.mxu0 0.0
      %3852 = vmatprep.subr.mxu0 0.0
      %3853 = vmatpush1.xpose.msra.mxu0 0.0
      %3854 = vmatprep.subr.mxu0 0.0
      %3855 = vmatpush1.xpose.msra.mxu0 0.0
      %3856 = vmatprep.subr.mxu0 0.0
      %3857 = vmatpush1.xpose.msra.mxu0 0.0
      %3858 = vmatprep.subr.mxu0 0.0
      %3859 = vmatpush1.xpose.msra.mxu0 0.0
      %3860 = vmatprep.subr.mxu0 0.0
      %3861 = vmatpush1.xpose.msra.mxu0 0.0
      %3862 = vmatprep.subr.mxu0 0.0
      %3863 = vmatpush1.xpose.msra.mxu0 0.0
      %3864 = vmatprep.subr.mxu0 0.0
      %3865 = vmatpush1.xpose.msra.mxu0 0.0
      %3866 = vmatprep.subr.mxu0 0.0
      %3867 = vmatpush1.xpose.msra.mxu0 0.0
      %3868 = vmatprep.mubr.f32.mxu0 0.0
      %v3869 = vand.u32 %v2977, 4294901760
      %3870 = vmatmul.mubr.f32.gmra.mrb[0].mxu0 %v3869
      %v3871 = vpop.f32.mrb[0].mxu0
      %v3872 = vadd.f32 %v3675, %v3871
      %v3873 = vpop.f32.mrb[0].mxu0
      %3874 = vmatprep.mubr.f32.mxu0 0.0
      %v3875 = vand.u32 %v2980, 4294901760
      %3876 = vmatmul.mubr.f32.gmra.mrb[0].mxu0 %v3875
      %v3877 = vpop.f32.mrb[0].mxu0
      %v3878 = vadd.f32 %v3683, %v3877
      %v3879 = vpop.f32.mrb[0].mxu0
      %3880 = vmatprep.mubr.f32.mxu0 0.0
      %v3881 = vand.u32 %v2983, 4294901760
      %3882 = vmatmul.mubr.f32.gmra.mrb[0].mxu0 %v3881
      %v3883 = vpop.f32.mrb[0].mxu0
      %v3884 = vadd.f32 %v3691, %v3883
      %v3885 = vpop.f32.mrb[0].mxu0
      %3886 = vmatprep.mubr.f32.mxu0 0.0
      %v3887 = vand.u32 %v2986, 4294901760
      %3888 = vmatmul.mubr.f32.gmra.mrb[0].mxu0 %v3887
      %v3889 = vpop.f32.mrb[0].mxu0
      %v3890 = vadd.f32 %v3699, %v3889
      %v3891 = vpop.f32.mrb[0].mxu0
      %3892 = vmatprep.mubr.f32.mxu0 0.0
      %v3893 = vand.u32 %v2989, 4294901760
      %3894 = vmatmul.mubr.f32.gmra.mrb[0].mxu0 %v3893
      %v3895 = vpop.f32.mrb[0].mxu0
      %v3896 = vadd.f32 %v3707, %v3895
      %v3897 = vpop.f32.mrb[0].mxu0
      %3898 = vmatprep.mubr.f32.mxu0 0.0
      %v3899 = vand.u32 %v2992, 4294901760
      %3900 = vmatmul.mubr.f32.gmra.mrb[0].mxu0 %v3899
      %v3901 = vpop.f32.mrb[0].mxu0
      %v3902 = vadd.f32 %v3715, %v3901
      %v3903 = vpop.f32.mrb[0].mxu0
      %3904 = vmatprep.mubr.f32.mxu0 0.0
      %v3905 = vand.u32 %v2995, 4294901760
      %3906 = vmatmul.mubr.f32.gmra.mrb[0].mxu0 %v3905
      %v3907 = vpop.f32.mrb[0].mxu0
      %v3908 = vadd.f32 %v3723, %v3907
      %v3909 = vpop.f32.mrb[0].mxu0
      %3910 = vmatprep.mubr.f32.mxu0 0.0
      %v3911 = vand.u32 %v2998, 4294901760
      %3912 = vmatmul.mubr.f32.gmra.mrb[0].mxu0 %v3911
      %v3913 = vpop.f32.mrb[0].mxu0
      %v3914 = vadd.f32 %v3731, %v3913
      %v3915 = vpop.f32.mrb[0].mxu0
      %3916 = vmatprep.mubr.f32.mxu0 0.0
      %v3917 = vand.u32 %v3001, 4294901760
      %3918 = vmatmul.mubr.f32.gmra.mrb[0].mxu0 %v3917
      %v3919 = vpop.f32.mrb[0].mxu0
      %v3920 = vadd.f32 %v3739, %v3919
      %v3921 = vpop.f32.mrb[0].mxu0
      %3922 = vmatprep.mubr.f32.mxu0 0.0
      %v3923 = vand.u32 %v3004, 4294901760
      %3924 = vmatmul.mubr.f32.gmra.mrb[0].mxu0 %v3923
      %v3925 = vpop.f32.mrb[0].mxu0
      %v3926 = vadd.f32 %v3747, %v3925
      %v3927 = vpop.f32.mrb[0].mxu0
      %3928 = vmatprep.mubr.f32.mxu0 0.0
      %v3929 = vand.u32 %v3007, 4294901760
      %3930 = vmatmul.mubr.f32.gmra.mrb[0].mxu0 %v3929
      %v3931 = vpop.f32.mrb[0].mxu0
      %v3932 = vadd.f32 %v3755, %v3931
      %v3933 = vpop.f32.mrb[0].mxu0
      %3934 = vmatprep.mubr.f32.mxu0 0.0
      %v3935 = vand.u32 %v3010, 4294901760
      %3936 = vmatmul.mubr.f32.gmra.mrb[0].mxu0 %v3935
      %v3937 = vpop.f32.mrb[0].mxu0
      %v3938 = vadd.f32 %v3763, %v3937
      %v3939 = vpop.f32.mrb[0].mxu0
      %3940 = vmatprep.mubr.f32.mxu0 0.0
      %v3941 = vand.u32 %v3013, 4294901760
      %3942 = vmatmul.mubr.f32.gmra.mrb[0].mxu0 %v3941
      %v3943 = vpop.f32.mrb[0].mxu0
      %v3944 = vadd.f32 %v3771, %v3943
      %v3945 = vpop.f32.mrb[0].mxu0
      %3946 = vmatprep.mubr.f32.mxu0 0.0
      %v3947 = vand.u32 %v3016, 4294901760
      %3948 = vmatmul.mubr.f32.gmra.mrb[0].mxu0 %v3947
      %v3949 = vpop.f32.mrb[0].mxu0
      %v3950 = vadd.f32 %v3779, %v3949
      %v3951 = vpop.f32.mrb[0].mxu0
      %3952 = vmatprep.mubr.f32.mxu0 0.0
      %v3953 = vand.u32 %v3019, 4294901760
      %3954 = vmatmul.mubr.f32.gmra.mrb[0].mxu0 %v3953
      %v3955 = vpop.f32.mrb[0].mxu0
      %v3956 = vadd.f32 %v3787, %v3955
      %v3957 = vpop.f32.mrb[0].mxu0
      %3958 = vmatprep.mubr.f32.mxu0 0.0
      %v3959 = vand.u32 %v3022, 4294901760
      %3960 = vmatmul.mubr.f32.gmra.mrb[0].mxu0 %v3959
      %v3961 = vpop.f32.mrb[0].mxu0
      %v3962 = vadd.f32 %v3795, %v3961
      %v3963 = vpop.f32.mrb[0].mxu0
      %3964 = vdwg.mxu0
      %3965 = vmatprep.subr.mxu0 0.0
      %v3966 = vand.u32 %v356, 4294901760
      %3967 = vmatpush1.xpose.msra.mxu0 %v3966
      %3968 = vmatprep.subr.mxu0 0.0
      %v3969 = vand.u32 %v359, 4294901760
      %3970 = vmatpush1.xpose.msra.mxu0 %v3969
      %3971 = vmatprep.subr.mxu0 0.0
      %3972 = vmatpush1.xpose.msra.mxu0 0.0
      %3973 = vmatprep.subr.mxu0 0.0
      %3974 = vmatpush1.xpose.msra.mxu0 0.0
      %3975 = vmatprep.subr.mxu0 0.0
      %3976 = vmatpush1.xpose.msra.mxu0 0.0
      %3977 = vmatprep.subr.mxu0 0.0
      %3978 = vmatpush1.xpose.msra.mxu0 0.0
      %3979 = vmatprep.subr.mxu0 0.0
      %3980 = vmatpush1.xpose.msra.mxu0 0.0
      %3981 = vmatprep.subr.mxu0 0.0
      %3982 = vmatpush1.xpose.msra.mxu0 0.0
      %3983 = vmatprep.subr.mxu0 0.0
      %3984 = vmatpush1.xpose.msra.mxu0 0.0
      %3985 = vmatprep.subr.mxu0 0.0
      %3986 = vmatpush1.xpose.msra.mxu0 0.0
      %3987 = vmatprep.subr.mxu0 0.0
      %3988 = vmatpush1.xpose.msra.mxu0 0.0
      %3989 = vmatprep.subr.mxu0 0.0
      %3990 = vmatpush1.xpose.msra.mxu0 0.0
      %3991 = vmatprep.subr.mxu0 0.0
      %3992 = vmatpush1.xpose.msra.mxu0 0.0
      %3993 = vmatprep.subr.mxu0 0.0
      %3994 = vmatpush1.xpose.msra.mxu0 0.0
      %3995 = vmatprep.subr.mxu0 0.0
      %3996 = vmatpush1.xpose.msra.mxu0 0.0
      %3997 = vmatprep.subr.mxu0 0.0
      %3998 = vmatpush1.xpose.msra.mxu0 0.0
      %3999 = vmatprep.subr.mxu0 0.0
      %4000 = vmatpush1.xpose.msra.mxu0 0.0
      %4001 = vmatprep.subr.mxu0 0.0
      %4002 = vmatpush1.xpose.msra.mxu0 0.0
      %4003 = vmatprep.subr.mxu0 0.0
      %4004 = vmatpush1.xpose.msra.mxu0 0.0
      %4005 = vmatprep.subr.mxu0 0.0
      %4006 = vmatpush1.xpose.msra.mxu0 0.0
      %4007 = vmatprep.subr.mxu0 0.0
      %4008 = vmatpush1.xpose.msra.mxu0 0.0
      %4009 = vmatprep.subr.mxu0 0.0
      %4010 = vmatpush1.xpose.msra.mxu0 0.0
      %4011 = vmatprep.subr.mxu0 0.0
      %4012 = vmatpush1.xpose.msra.mxu0 0.0
      %4013 = vmatprep.subr.mxu0 0.0
      %4014 = vmatpush1.xpose.msra.mxu0 0.0
      %4015 = vmatprep.subr.mxu0 0.0
      %4016 = vmatpush1.xpose.msra.mxu0 0.0
      %4017 = vmatprep.subr.mxu0 0.0
      %4018 = vmatpush1.xpose.msra.mxu0 0.0
      %4019 = vmatprep.subr.mxu0 0.0
      %4020 = vmatpush1.xpose.msra.mxu0 0.0
      %4021 = vmatprep.subr.mxu0 0.0
      %4022 = vmatpush1.xpose.msra.mxu0 0.0
      %4023 = vmatprep.subr.mxu0 0.0
      %4024 = vmatpush1.xpose.msra.mxu0 0.0
      %4025 = vmatprep.subr.mxu0 0.0
      %4026 = vmatpush1.xpose.msra.mxu0 0.0
      %4027 = vmatprep.subr.mxu0 0.0
      %4028 = vmatpush1.xpose.msra.mxu0 0.0
      %4029 = vmatprep.subr.mxu0 0.0
      %4030 = vmatpush1.xpose.msra.mxu0 0.0
      %4031 = vmatprep.mubr.f32.mxu0 0.0
      %v4032 = vand.u32 %v2977, 4294901760
      %4033 = vmatmul.mubr.f32.gmra.mrb[0].mxu0 %v4032
      %v4034 = vpop.f32.mrb[0].mxu0
      %v4035 = vadd.f32 %v3872, %v4034
      %v4036 = vpop.f32.mrb[0].mxu0
      %4037 = vmatprep.mubr.f32.mxu0 0.0
      %v4038 = vand.u32 %v2980, 4294901760
      %4039 = vmatmul.mubr.f32.gmra.mrb[0].mxu0 %v4038
      %v4040 = vpop.f32.mrb[0].mxu0
      %v4041 = vadd.f32 %v3878, %v4040
      %v4042 = vpop.f32.mrb[0].mxu0
      %4043 = vmatprep.mubr.f32.mxu0 0.0
      %v4044 = vand.u32 %v2983, 4294901760
      %4045 = vmatmul.mubr.f32.gmra.mrb[0].mxu0 %v4044
      %v4046 = vpop.f32.mrb[0].mxu0
      %v4047 = vadd.f32 %v3884, %v4046
      %v4048 = vpop.f32.mrb[0].mxu0
      %4049 = vmatprep.mubr.f32.mxu0 0.0
      %v4050 = vand.u32 %v2986, 4294901760
      %4051 = vmatmul.mubr.f32.gmra.mrb[0].mxu0 %v4050
      %v4052 = vpop.f32.mrb[0].mxu0
      %v4053 = vadd.f32 %v3890, %v4052
      %v4054 = vpop.f32.mrb[0].mxu0
      %4055 = vmatprep.mubr.f32.mxu0 0.0
      %v4056 = vand.u32 %v2989, 4294901760
      %4057 = vmatmul.mubr.f32.gmra.mrb[0].mxu0 %v4056
      %v4058 = vpop.f32.mrb[0].mxu0
      %v4059 = vadd.f32 %v3896, %v4058
      %v4060 = vpop.f32.mrb[0].mxu0
      %4061 = vmatprep.mubr.f32.mxu0 0.0
      %v4062 = vand.u32 %v2992, 4294901760
      %4063 = vmatmul.mubr.f32.gmra.mrb[0].mxu0 %v4062
      %v4064 = vpop.f32.mrb[0].mxu0
      %v4065 = vadd.f32 %v3902, %v4064
      %v4066 = vpop.f32.mrb[0].mxu0
      %4067 = vmatprep.mubr.f32.mxu0 0.0
      %v4068 = vand.u32 %v2995, 4294901760
      %4069 = vmatmul.mubr.f32.gmra.mrb[0].mxu0 %v4068
      %v4070 = vpop.f32.mrb[0].mxu0
      %v4071 = vadd.f32 %v3908, %v4070
      %v4072 = vpop.f32.mrb[0].mxu0
      %4073 = vmatprep.mubr.f32.mxu0 0.0
      %v4074 = vand.u32 %v2998, 4294901760
      %4075 = vmatmul.mubr.f32.gmra.mrb[0].mxu0 %v4074
      %v4076 = vpop.f32.mrb[0].mxu0
      %v4077 = vadd.f32 %v3914, %v4076
      %v4078 = vpop.f32.mrb[0].mxu0
      %4079 = vmatprep.mubr.f32.mxu0 0.0
      %v4080 = vand.u32 %v3001, 4294901760
      %4081 = vmatmul.mubr.f32.gmra.mrb[0].mxu0 %v4080
      %v4082 = vpop.f32.mrb[0].mxu0
      %v4083 = vadd.f32 %v3920, %v4082
      %v4084 = vpop.f32.mrb[0].mxu0
      %4085 = vmatprep.mubr.f32.mxu0 0.0
      %v4086 = vand.u32 %v3004, 4294901760
      %4087 = vmatmul.mubr.f32.gmra.mrb[0].mxu0 %v4086
      %v4088 = vpop.f32.mrb[0].mxu0
      %v4089 = vadd.f32 %v3926, %v4088
      %v4090 = vpop.f32.mrb[0].mxu0
      %4091 = vmatprep.mubr.f32.mxu0 0.0
      %v4092 = vand.u32 %v3007, 4294901760
      %4093 = vmatmul.mubr.f32.gmra.mrb[0].mxu0 %v4092
      %v4094 = vpop.f32.mrb[0].mxu0
      %v4095 = vadd.f32 %v3932, %v4094
      %v4096 = vpop.f32.mrb[0].mxu0
      %4097 = vmatprep.mubr.f32.mxu0 0.0
      %v4098 = vand.u32 %v3010, 4294901760
      %4099 = vmatmul.mubr.f32.gmra.mrb[0].mxu0 %v4098
      %v4100 = vpop.f32.mrb[0].mxu0
      %v4101 = vadd.f32 %v3938, %v4100
      %v4102 = vpop.f32.mrb[0].mxu0
      %4103 = vmatprep.mubr.f32.mxu0 0.0
      %v4104 = vand.u32 %v3013, 4294901760
      %4105 = vmatmul.mubr.f32.gmra.mrb[0].mxu0 %v4104
      %v4106 = vpop.f32.mrb[0].mxu0
      %v4107 = vadd.f32 %v3944, %v4106
      %v4108 = vpop.f32.mrb[0].mxu0
      %4109 = vmatprep.mubr.f32.mxu0 0.0
      %v4110 = vand.u32 %v3016, 4294901760
      %4111 = vmatmul.mubr.f32.gmra.mrb[0].mxu0 %v4110
      %v4112 = vpop.f32.mrb[0].mxu0
      %v4113 = vadd.f32 %v3950, %v4112
      %v4114 = vpop.f32.mrb[0].mxu0
      %4115 = vmatprep.mubr.f32.mxu0 0.0
      %v4116 = vand.u32 %v3019, 4294901760
      %4117 = vmatmul.mubr.f32.gmra.mrb[0].mxu0 %v4116
      %v4118 = vpop.f32.mrb[0].mxu0
      %v4119 = vadd.f32 %v3956, %v4118
      %v4120 = vpop.f32.mrb[0].mxu0
      %4121 = vmatprep.mubr.f32.mxu0 0.0
      %v4122 = vand.u32 %v3022, 4294901760
      %4123 = vmatmul.mubr.f32.gmra.mrb[0].mxu0 %v4122
      %v4124 = vpop.f32.mrb[0].mxu0
      %v4125 = vadd.f32 %v3962, %v4124
      %v4126 = vpop.f32.mrb[0].mxu0
      %4127 = vdwg.mxu0
      %4128 = vmatprep.subr.mxu0 0.0
      %v4129 = vand.u32 %v1466, 4294901760
      %4130 = vmatpush1.xpose.msra.mxu0 %v4129
      %4131 = vmatprep.subr.mxu0 0.0
      %v4132 = vand.u32 %v1469, 4294901760
      %4133 = vmatpush1.xpose.msra.mxu0 %v4132
      %4134 = vmatprep.subr.mxu0 0.0
      %4135 = vmatpush1.xpose.msra.mxu0 0.0
      %4136 = vmatprep.subr.mxu0 0.0
      %4137 = vmatpush1.xpose.msra.mxu0 0.0
      %4138 = vmatprep.subr.mxu0 0.0
      %4139 = vmatpush1.xpose.msra.mxu0 0.0
      %4140 = vmatprep.subr.mxu0 0.0
      %4141 = vmatpush1.xpose.msra.mxu0 0.0
      %4142 = vmatprep.subr.mxu0 0.0
      %4143 = vmatpush1.xpose.msra.mxu0 0.0
      %4144 = vmatprep.subr.mxu0 0.0
      %4145 = vmatpush1.xpose.msra.mxu0 0.0
      %4146 = vmatprep.subr.mxu0 0.0
      %4147 = vmatpush1.xpose.msra.mxu0 0.0
      %4148 = vmatprep.subr.mxu0 0.0
      %4149 = vmatpush1.xpose.msra.mxu0 0.0
      %4150 = vmatprep.subr.mxu0 0.0
      %4151 = vmatpush1.xpose.msra.mxu0 0.0
      %4152 = vmatprep.subr.mxu0 0.0
      %4153 = vmatpush1.xpose.msra.mxu0 0.0
      %4154 = vmatprep.subr.mxu0 0.0
      %4155 = vmatpush1.xpose.msra.mxu0 0.0
      %4156 = vmatprep.subr.mxu0 0.0
      %4157 = vmatpush1.xpose.msra.mxu0 0.0
      %4158 = vmatprep.subr.mxu0 0.0
      %4159 = vmatpush1.xpose.msra.mxu0 0.0
      %4160 = vmatprep.subr.mxu0 0.0
      %4161 = vmatpush1.xpose.msra.mxu0 0.0
      %4162 = vmatprep.subr.mxu0 0.0
      %4163 = vmatpush1.xpose.msra.mxu0 0.0
      %4164 = vmatprep.subr.mxu0 0.0
      %4165 = vmatpush1.xpose.msra.mxu0 0.0
      %4166 = vmatprep.subr.mxu0 0.0
      %4167 = vmatpush1.xpose.msra.mxu0 0.0
      %4168 = vmatprep.subr.mxu0 0.0
      %4169 = vmatpush1.xpose.msra.mxu0 0.0
      %4170 = vmatprep.subr.mxu0 0.0
      %4171 = vmatpush1.xpose.msra.mxu0 0.0
      %4172 = vmatprep.subr.mxu0 0.0
      %4173 = vmatpush1.xpose.msra.mxu0 0.0
      %4174 = vmatprep.subr.mxu0 0.0
      %4175 = vmatpush1.xpose.msra.mxu0 0.0
      %4176 = vmatprep.subr.mxu0 0.0
      %4177 = vmatpush1.xpose.msra.mxu0 0.0
      %4178 = vmatprep.subr.mxu0 0.0
      %4179 = vmatpush1.xpose.msra.mxu0 0.0
      %4180 = vmatprep.subr.mxu0 0.0
      %4181 = vmatpush1.xpose.msra.mxu0 0.0
      %4182 = vmatprep.subr.mxu0 0.0
      %4183 = vmatpush1.xpose.msra.mxu0 0.0
      %4184 = vmatprep.subr.mxu0 0.0
      %4185 = vmatpush1.xpose.msra.mxu0 0.0
      %4186 = vmatprep.subr.mxu0 0.0
      %4187 = vmatpush1.xpose.msra.mxu0 0.0
      %4188 = vmatprep.subr.mxu0 0.0
      %4189 = vmatpush1.xpose.msra.mxu0 0.0
      %4190 = vmatprep.subr.mxu0 0.0
      %4191 = vmatpush1.xpose.msra.mxu0 0.0
      %4192 = vmatprep.subr.mxu0 0.0
      %4193 = vmatpush1.xpose.msra.mxu0 0.0
      %4194 = vmatprep.mubr.f32.mxu0 0.0
      %v4195 = vand.u32 %v2977, 4294901760
      %v4196 = vsub.f32 %v2977, %v4195
      %v4197 = vand.u32 %v4196, 4294901760
      %v4198 = vsub.f32 %v4196, %v4197
      %v4199 = vand.u32 %v4198, 4294901760
      %4200 = vmatmul.mubr.f32.gmra.mrb[0].mxu0 %v4199
      %v4201 = vpop.f32.mrb[0].mxu0
      %v4202 = vadd.f32 0.0, %v4201
      %v4203 = vpop.f32.mrb[0].mxu0
      %4204 = vmatprep.mubr.f32.mxu0 0.0
      %v4205 = vand.u32 %v2980, 4294901760
      %v4206 = vsub.f32 %v2980, %v4205
      %v4207 = vand.u32 %v4206, 4294901760
      %v4208 = vsub.f32 %v4206, %v4207
      %v4209 = vand.u32 %v4208, 4294901760
      %4210 = vmatmul.mubr.f32.gmra.mrb[0].mxu0 %v4209
      %v4211 = vpop.f32.mrb[0].mxu0
      %v4212 = vadd.f32 0.0, %v4211
      %v4213 = vpop.f32.mrb[0].mxu0
      %4214 = vmatprep.mubr.f32.mxu0 0.0
      %v4215 = vand.u32 %v2983, 4294901760
      %v4216 = vsub.f32 %v2983, %v4215
      %v4217 = vand.u32 %v4216, 4294901760
      %v4218 = vsub.f32 %v4216, %v4217
      %v4219 = vand.u32 %v4218, 4294901760
      %4220 = vmatmul.mubr.f32.gmra.mrb[0].mxu0 %v4219
      %v4221 = vpop.f32.mrb[0].mxu0
      %v4222 = vadd.f32 0.0, %v4221
      %v4223 = vpop.f32.mrb[0].mxu0
      %4224 = vmatprep.mubr.f32.mxu0 0.0
      %v4225 = vand.u32 %v2986, 4294901760
      %v4226 = vsub.f32 %v2986, %v4225
      %v4227 = vand.u32 %v4226, 4294901760
      %v4228 = vsub.f32 %v4226, %v4227
      %v4229 = vand.u32 %v4228, 4294901760
      %4230 = vmatmul.mubr.f32.gmra.mrb[0].mxu0 %v4229
      %v4231 = vpop.f32.mrb[0].mxu0
      %v4232 = vadd.f32 0.0, %v4231
      %v4233 = vpop.f32.mrb[0].mxu0
      %4234 = vmatprep.mubr.f32.mxu0 0.0
      %v4235 = vand.u32 %v2989, 4294901760
      %v4236 = vsub.f32 %v2989, %v4235
      %v4237 = vand.u32 %v4236, 4294901760
      %v4238 = vsub.f32 %v4236, %v4237
      %v4239 = vand.u32 %v4238, 4294901760
      %4240 = vmatmul.mubr.f32.gmra.mrb[0].mxu0 %v4239
      %v4241 = vpop.f32.mrb[0].mxu0
      %v4242 = vadd.f32 0.0, %v4241
      %v4243 = vpop.f32.mrb[0].mxu0
      %4244 = vmatprep.mubr.f32.mxu0 0.0
      %v4245 = vand.u32 %v2992, 4294901760
      %v4246 = vsub.f32 %v2992, %v4245
      %v4247 = vand.u32 %v4246, 4294901760
      %v4248 = vsub.f32 %v4246, %v4247
      %v4249 = vand.u32 %v4248, 4294901760
      %4250 = vmatmul.mubr.f32.gmra.mrb[0].mxu0 %v4249
      %v4251 = vpop.f32.mrb[0].mxu0
      %v4252 = vadd.f32 0.0, %v4251
      %v4253 = vpop.f32.mrb[0].mxu0
      %4254 = vmatprep.mubr.f32.mxu0 0.0
      %v4255 = vand.u32 %v2995, 4294901760
      %v4256 = vsub.f32 %v2995, %v4255
      %v4257 = vand.u32 %v4256, 4294901760
      %v4258 = vsub.f32 %v4256, %v4257
      %v4259 = vand.u32 %v4258, 4294901760
      %4260 = vmatmul.mubr.f32.gmra.mrb[0].mxu0 %v4259
      %v4261 = vpop.f32.mrb[0].mxu0
      %v4262 = vadd.f32 0.0, %v4261
      %v4263 = vpop.f32.mrb[0].mxu0
      %4264 = vmatprep.mubr.f32.mxu0 0.0
      %v4265 = vand.u32 %v2998, 4294901760
      %v4266 = vsub.f32 %v2998, %v4265
      %v4267 = vand.u32 %v4266, 4294901760
      %v4268 = vsub.f32 %v4266, %v4267
      %v4269 = vand.u32 %v4268, 4294901760
      %4270 = vmatmul.mubr.f32.gmra.mrb[0].mxu0 %v4269
      %v4271 = vpop.f32.mrb[0].mxu0
      %v4272 = vadd.f32 0.0, %v4271
      %v4273 = vpop.f32.mrb[0].mxu0
      %4274 = vmatprep.mubr.f32.mxu0 0.0
      %v4275 = vand.u32 %v3001, 4294901760
      %v4276 = vsub.f32 %v3001, %v4275
      %v4277 = vand.u32 %v4276, 4294901760
      %v4278 = vsub.f32 %v4276, %v4277
      %v4279 = vand.u32 %v4278, 4294901760
      %4280 = vmatmul.mubr.f32.gmra.mrb[0].mxu0 %v4279
      %v4281 = vpop.f32.mrb[0].mxu0
      %v4282 = vadd.f32 0.0, %v4281
      %v4283 = vpop.f32.mrb[0].mxu0
      %4284 = vmatprep.mubr.f32.mxu0 0.0
      %v4285 = vand.u32 %v3004, 4294901760
      %v4286 = vsub.f32 %v3004, %v4285
      %v4287 = vand.u32 %v4286, 4294901760
      %v4288 = vsub.f32 %v4286, %v4287
      %v4289 = vand.u32 %v4288, 4294901760
      %4290 = vmatmul.mubr.f32.gmra.mrb[0].mxu0 %v4289
      %v4291 = vpop.f32.mrb[0].mxu0
      %v4292 = vadd.f32 0.0, %v4291
      %v4293 = vpop.f32.mrb[0].mxu0
      %4294 = vmatprep.mubr.f32.mxu0 0.0
      %v4295 = vand.u32 %v3007, 4294901760
      %v4296 = vsub.f32 %v3007, %v4295
      %v4297 = vand.u32 %v4296, 4294901760
      %v4298 = vsub.f32 %v4296, %v4297
      %v4299 = vand.u32 %v4298, 4294901760
      %4300 = vmatmul.mubr.f32.gmra.mrb[0].mxu0 %v4299
      %v4301 = vpop.f32.mrb[0].mxu0
      %v4302 = vadd.f32 0.0, %v4301
      %v4303 = vpop.f32.mrb[0].mxu0
      %4304 = vmatprep.mubr.f32.mxu0 0.0
      %v4305 = vand.u32 %v3010, 4294901760
      %v4306 = vsub.f32 %v3010, %v4305
      %v4307 = vand.u32 %v4306, 4294901760
      %v4308 = vsub.f32 %v4306, %v4307
      %v4309 = vand.u32 %v4308, 4294901760
      %4310 = vmatmul.mubr.f32.gmra.mrb[0].mxu0 %v4309
      %v4311 = vpop.f32.mrb[0].mxu0
      %v4312 = vadd.f32 0.0, %v4311
      %v4313 = vpop.f32.mrb[0].mxu0
      %4314 = vmatprep.mubr.f32.mxu0 0.0
      %v4315 = vand.u32 %v3013, 4294901760
      %v4316 = vsub.f32 %v3013, %v4315
      %v4317 = vand.u32 %v4316, 4294901760
      %v4318 = vsub.f32 %v4316, %v4317
      %v4319 = vand.u32 %v4318, 4294901760
      %4320 = vmatmul.mubr.f32.gmra.mrb[0].mxu0 %v4319
      %v4321 = vpop.f32.mrb[0].mxu0
      %v4322 = vadd.f32 0.0, %v4321
      %v4323 = vpop.f32.mrb[0].mxu0
      %4324 = vmatprep.mubr.f32.mxu0 0.0
      %v4325 = vand.u32 %v3016, 4294901760
      %v4326 = vsub.f32 %v3016, %v4325
      %v4327 = vand.u32 %v4326, 4294901760
      %v4328 = vsub.f32 %v4326, %v4327
      %v4329 = vand.u32 %v4328, 4294901760
      %4330 = vmatmul.mubr.f32.gmra.mrb[0].mxu0 %v4329
      %v4331 = vpop.f32.mrb[0].mxu0
      %v4332 = vadd.f32 0.0, %v4331
      %v4333 = vpop.f32.mrb[0].mxu0
      %4334 = vmatprep.mubr.f32.mxu0 0.0
      %v4335 = vand.u32 %v3019, 4294901760
      %v4336 = vsub.f32 %v3019, %v4335
      %v4337 = vand.u32 %v4336, 4294901760
      %v4338 = vsub.f32 %v4336, %v4337
      %v4339 = vand.u32 %v4338, 4294901760
      %4340 = vmatmul.mubr.f32.gmra.mrb[0].mxu0 %v4339
      %v4341 = vpop.f32.mrb[0].mxu0
      %v4342 = vadd.f32 0.0, %v4341
      %v4343 = vpop.f32.mrb[0].mxu0
      %4344 = vmatprep.mubr.f32.mxu0 0.0
      %v4345 = vand.u32 %v3022, 4294901760
      %v4346 = vsub.f32 %v3022, %v4345
      %v4347 = vand.u32 %v4346, 4294901760
      %v4348 = vsub.f32 %v4346, %v4347
      %v4349 = vand.u32 %v4348, 4294901760
      %4350 = vmatmul.mubr.f32.gmra.mrb[0].mxu0 %v4349
      %v4351 = vpop.f32.mrb[0].mxu0
      %v4352 = vadd.f32 0.0, %v4351
      %v4353 = vpop.f32.mrb[0].mxu0
      %4354 = vdwg.mxu0
      %4355 = vmatprep.subr.mxu0 0.0
      %v4356 = vand.u32 %v1466, 4294901760
      %v4357 = vsub.f32 %v1466, %v4356
      %v4358 = vand.u32 %v4357, 4294901760
      %v4359 = vsub.f32 %v4357, %v4358
      %v4360 = vand.u32 %v4359, 4294901760
      %4361 = vmatpush1.xpose.msra.mxu0 %v4360
      %4362 = vmatprep.subr.mxu0 0.0
      %v4363 = vand.u32 %v1469, 4294901760
      %v4364 = vsub.f32 %v1469, %v4363
      %v4365 = vand.u32 %v4364, 4294901760
      %v4366 = vsub.f32 %v4364, %v4365
      %v4367 = vand.u32 %v4366, 4294901760
      %4368 = vmatpush1.xpose.msra.mxu0 %v4367
      %4369 = vmatprep.subr.mxu0 0.0
      %4370 = vmatpush1.xpose.msra.mxu0 0.0
      %4371 = vmatprep.subr.mxu0 0.0
      %4372 = vmatpush1.xpose.msra.mxu0 0.0
      %4373 = vmatprep.subr.mxu0 0.0
      %4374 = vmatpush1.xpose.msra.mxu0 0.0
      %4375 = vmatprep.subr.mxu0 0.0
      %4376 = vmatpush1.xpose.msra.mxu0 0.0
      %4377 = vmatprep.subr.mxu0 0.0
      %4378 = vmatpush1.xpose.msra.mxu0 0.0
      %4379 = vmatprep.subr.mxu0 0.0
      %4380 = vmatpush1.xpose.msra.mxu0 0.0
      %4381 = vmatprep.subr.mxu0 0.0
      %4382 = vmatpush1.xpose.msra.mxu0 0.0
      %4383 = vmatprep.subr.mxu0 0.0
      %4384 = vmatpush1.xpose.msra.mxu0 0.0
      %4385 = vmatprep.subr.mxu0 0.0
      %4386 = vmatpush1.xpose.msra.mxu0 0.0
      %4387 = vmatprep.subr.mxu0 0.0
      %4388 = vmatpush1.xpose.msra.mxu0 0.0
      %4389 = vmatprep.subr.mxu0 0.0
      %4390 = vmatpush1.xpose.msra.mxu0 0.0
      %4391 = vmatprep.subr.mxu0 0.0
      %4392 = vmatpush1.xpose.msra.mxu0 0.0
      %4393 = vmatprep.subr.mxu0 0.0
      %4394 = vmatpush1.xpose.msra.mxu0 0.0
      %4395 = vmatprep.subr.mxu0 0.0
      %4396 = vmatpush1.xpose.msra.mxu0 0.0
      %4397 = vmatprep.subr.mxu0 0.0
      %4398 = vmatpush1.xpose.msra.mxu0 0.0
      %4399 = vmatprep.subr.mxu0 0.0
      %4400 = vmatpush1.xpose.msra.mxu0 0.0
      %4401 = vmatprep.subr.mxu0 0.0
      %4402 = vmatpush1.xpose.msra.mxu0 0.0
      %4403 = vmatprep.subr.mxu0 0.0
      %4404 = vmatpush1.xpose.msra.mxu0 0.0
      %4405 = vmatprep.subr.mxu0 0.0
      %4406 = vmatpush1.xpose.msra.mxu0 0.0
      %4407 = vmatprep.subr.mxu0 0.0
      %4408 = vmatpush1.xpose.msra.mxu0 0.0
      %4409 = vmatprep.subr.mxu0 0.0
      %4410 = vmatpush1.xpose.msra.mxu0 0.0
      %4411 = vmatprep.subr.mxu0 0.0
      %4412 = vmatpush1.xpose.msra.mxu0 0.0
      %4413 = vmatprep.subr.mxu0 0.0
      %4414 = vmatpush1.xpose.msra.mxu0 0.0
      %4415 = vmatprep.subr.mxu0 0.0
      %4416 = vmatpush1.xpose.msra.mxu0 0.0
      %4417 = vmatprep.subr.mxu0 0.0
      %4418 = vmatpush1.xpose.msra.mxu0 0.0
      %4419 = vmatprep.subr.mxu0 0.0
      %4420 = vmatpush1.xpose.msra.mxu0 0.0
      %4421 = vmatprep.subr.mxu0 0.0
      %4422 = vmatpush1.xpose.msra.mxu0 0.0
      %4423 = vmatprep.subr.mxu0 0.0
      %4424 = vmatpush1.xpose.msra.mxu0 0.0
      %4425 = vmatprep.subr.mxu0 0.0
      %4426 = vmatpush1.xpose.msra.mxu0 0.0
      %4427 = vmatprep.subr.mxu0 0.0
      %4428 = vmatpush1.xpose.msra.mxu0 0.0
      %4429 = vmatprep.mubr.f32.mxu0 0.0
      %v4430 = vand.u32 %v2977, 4294901760
      %4431 = vmatmul.mubr.f32.gmra.mrb[0].mxu0 %v4430
      %v4432 = vpop.f32.mrb[0].mxu0
      %v4433 = vadd.f32 %v4202, %v4432
      %v4434 = vpop.f32.mrb[0].mxu0
      %4435 = vmatprep.mubr.f32.mxu0 0.0
      %v4436 = vand.u32 %v2980, 4294901760
      %4437 = vmatmul.mubr.f32.gmra.mrb[0].mxu0 %v4436
      %v4438 = vpop.f32.mrb[0].mxu0
      %v4439 = vadd.f32 %v4212, %v4438
      %v4440 = vpop.f32.mrb[0].mxu0
      %4441 = vmatprep.mubr.f32.mxu0 0.0
      %v4442 = vand.u32 %v2983, 4294901760
      %4443 = vmatmul.mubr.f32.gmra.mrb[0].mxu0 %v4442
      %v4444 = vpop.f32.mrb[0].mxu0
      %v4445 = vadd.f32 %v4222, %v4444
      %v4446 = vpop.f32.mrb[0].mxu0
      %4447 = vmatprep.mubr.f32.mxu0 0.0
      %v4448 = vand.u32 %v2986, 4294901760
      %4449 = vmatmul.mubr.f32.gmra.mrb[0].mxu0 %v4448
      %v4450 = vpop.f32.mrb[0].mxu0
      %v4451 = vadd.f32 %v4232, %v4450
      %v4452 = vpop.f32.mrb[0].mxu0
      %4453 = vmatprep.mubr.f32.mxu0 0.0
      %v4454 = vand.u32 %v2989, 4294901760
      %4455 = vmatmul.mubr.f32.gmra.mrb[0].mxu0 %v4454
      %v4456 = vpop.f32.mrb[0].mxu0
      %v4457 = vadd.f32 %v4242, %v4456
      %v4458 = vpop.f32.mrb[0].mxu0
      %4459 = vmatprep.mubr.f32.mxu0 0.0
      %v4460 = vand.u32 %v2992, 4294901760
      %4461 = vmatmul.mubr.f32.gmra.mrb[0].mxu0 %v4460
      %v4462 = vpop.f32.mrb[0].mxu0
      %v4463 = vadd.f32 %v4252, %v4462
      %v4464 = vpop.f32.mrb[0].mxu0
      %4465 = vmatprep.mubr.f32.mxu0 0.0
      %v4466 = vand.u32 %v2995, 4294901760
      %4467 = vmatmul.mubr.f32.gmra.mrb[0].mxu0 %v4466
      %v4468 = vpop.f32.mrb[0].mxu0
      %v4469 = vadd.f32 %v4262, %v4468
      %v4470 = vpop.f32.mrb[0].mxu0
      %4471 = vmatprep.mubr.f32.mxu0 0.0
      %v4472 = vand.u32 %v2998, 4294901760
      %4473 = vmatmul.mubr.f32.gmra.mrb[0].mxu0 %v4472
      %v4474 = vpop.f32.mrb[0].mxu0
      %v4475 = vadd.f32 %v4272, %v4474
      %v4476 = vpop.f32.mrb[0].mxu0
      %4477 = vmatprep.mubr.f32.mxu0 0.0
      %v4478 = vand.u32 %v3001, 4294901760
      %4479 = vmatmul.mubr.f32.gmra.mrb[0].mxu0 %v4478
      %v4480 = vpop.f32.mrb[0].mxu0
      %v4481 = vadd.f32 %v4282, %v4480
      %v4482 = vpop.f32.mrb[0].mxu0
      %4483 = vmatprep.mubr.f32.mxu0 0.0
      %v4484 = vand.u32 %v3004, 4294901760
      %4485 = vmatmul.mubr.f32.gmra.mrb[0].mxu0 %v4484
      %v4486 = vpop.f32.mrb[0].mxu0
      %v4487 = vadd.f32 %v4292, %v4486
      %v4488 = vpop.f32.mrb[0].mxu0
      %4489 = vmatprep.mubr.f32.mxu0 0.0
      %v4490 = vand.u32 %v3007, 4294901760
      %4491 = vmatmul.mubr.f32.gmra.mrb[0].mxu0 %v4490
      %v4492 = vpop.f32.mrb[0].mxu0
      %v4493 = vadd.f32 %v4302, %v4492
      %v4494 = vpop.f32.mrb[0].mxu0
      %4495 = vmatprep.mubr.f32.mxu0 0.0
      %v4496 = vand.u32 %v3010, 4294901760
      %4497 = vmatmul.mubr.f32.gmra.mrb[0].mxu0 %v4496
      %v4498 = vpop.f32.mrb[0].mxu0
      %v4499 = vadd.f32 %v4312, %v4498
      %v4500 = vpop.f32.mrb[0].mxu0
      %4501 = vmatprep.mubr.f32.mxu0 0.0
      %v4502 = vand.u32 %v3013, 4294901760
      %4503 = vmatmul.mubr.f32.gmra.mrb[0].mxu0 %v4502
      %v4504 = vpop.f32.mrb[0].mxu0
      %v4505 = vadd.f32 %v4322, %v4504
      %v4506 = vpop.f32.mrb[0].mxu0
      %4507 = vmatprep.mubr.f32.mxu0 0.0
      %v4508 = vand.u32 %v3016, 4294901760
      %4509 = vmatmul.mubr.f32.gmra.mrb[0].mxu0 %v4508
      %v4510 = vpop.f32.mrb[0].mxu0
      %v4511 = vadd.f32 %v4332, %v4510
      %v4512 = vpop.f32.mrb[0].mxu0
      %4513 = vmatprep.mubr.f32.mxu0 0.0
      %v4514 = vand.u32 %v3019, 4294901760
      %4515 = vmatmul.mubr.f32.gmra.mrb[0].mxu0 %v4514
      %v4516 = vpop.f32.mrb[0].mxu0
      %v4517 = vadd.f32 %v4342, %v4516
      %v4518 = vpop.f32.mrb[0].mxu0
      %4519 = vmatprep.mubr.f32.mxu0 0.0
      %v4520 = vand.u32 %v3022, 4294901760
      %4521 = vmatmul.mubr.f32.gmra.mrb[0].mxu0 %v4520
      %v4522 = vpop.f32.mrb[0].mxu0
      %v4523 = vadd.f32 %v4352, %v4522
      %v4524 = vpop.f32.mrb[0].mxu0
      %4525 = vdwg.mxu0
      %4526 = vmatprep.subr.mxu0 0.0
      %v4527 = vand.u32 %v1466, 4294901760
      %v4528 = vsub.f32 %v1466, %v4527
      %4529 = vmatpush1.xpose.msra.mxu0 %v4528
      %4530 = vmatprep.subr.mxu0 0.0
      %v4531 = vand.u32 %v1469, 4294901760
      %v4532 = vsub.f32 %v1469, %v4531
      %4533 = vmatpush1.xpose.msra.mxu0 %v4532
      %4534 = vmatprep.subr.mxu0 0.0
      %4535 = vmatpush1.xpose.msra.mxu0 0.0
      %4536 = vmatprep.subr.mxu0 0.0
      %4537 = vmatpush1.xpose.msra.mxu0 0.0
      %4538 = vmatprep.subr.mxu0 0.0
      %4539 = vmatpush1.xpose.msra.mxu0 0.0
      %4540 = vmatprep.subr.mxu0 0.0
      %4541 = vmatpush1.xpose.msra.mxu0 0.0
      %4542 = vmatprep.subr.mxu0 0.0
      %4543 = vmatpush1.xpose.msra.mxu0 0.0
      %4544 = vmatprep.subr.mxu0 0.0
      %4545 = vmatpush1.xpose.msra.mxu0 0.0
      %4546 = vmatprep.subr.mxu0 0.0
      %4547 = vmatpush1.xpose.msra.mxu0 0.0
      %4548 = vmatprep.subr.mxu0 0.0
      %4549 = vmatpush1.xpose.msra.mxu0 0.0
      %4550 = vmatprep.subr.mxu0 0.0
      %4551 = vmatpush1.xpose.msra.mxu0 0.0
      %4552 = vmatprep.subr.mxu0 0.0
      %4553 = vmatpush1.xpose.msra.mxu0 0.0
      %4554 = vmatprep.subr.mxu0 0.0
      %4555 = vmatpush1.xpose.msra.mxu0 0.0
      %4556 = vmatprep.subr.mxu0 0.0
      %4557 = vmatpush1.xpose.msra.mxu0 0.0
      %4558 = vmatprep.subr.mxu0 0.0
      %4559 = vmatpush1.xpose.msra.mxu0 0.0
      %4560 = vmatprep.subr.mxu0 0.0
      %4561 = vmatpush1.xpose.msra.mxu0 0.0
      %4562 = vmatprep.subr.mxu0 0.0
      %4563 = vmatpush1.xpose.msra.mxu0 0.0
      %4564 = vmatprep.subr.mxu0 0.0
      %4565 = vmatpush1.xpose.msra.mxu0 0.0
      %4566 = vmatprep.subr.mxu0 0.0
      %4567 = vmatpush1.xpose.msra.mxu0 0.0
      %4568 = vmatprep.subr.mxu0 0.0
      %4569 = vmatpush1.xpose.msra.mxu0 0.0
      %4570 = vmatprep.subr.mxu0 0.0
      %4571 = vmatpush1.xpose.msra.mxu0 0.0
      %4572 = vmatprep.subr.mxu0 0.0
      %4573 = vmatpush1.xpose.msra.mxu0 0.0
      %4574 = vmatprep.subr.mxu0 0.0
      %4575 = vmatpush1.xpose.msra.mxu0 0.0
      %4576 = vmatprep.subr.mxu0 0.0
      %4577 = vmatpush1.xpose.msra.mxu0 0.0
      %4578 = vmatprep.subr.mxu0 0.0
      %4579 = vmatpush1.xpose.msra.mxu0 0.0
      %4580 = vmatprep.subr.mxu0 0.0
      %4581 = vmatpush1.xpose.msra.mxu0 0.0
      %4582 = vmatprep.subr.mxu0 0.0
      %4583 = vmatpush1.xpose.msra.mxu0 0.0
      %4584 = vmatprep.subr.mxu0 0.0
      %4585 = vmatpush1.xpose.msra.mxu0 0.0
      %4586 = vmatprep.subr.mxu0 0.0
      %4587 = vmatpush1.xpose.msra.mxu0 0.0
      %4588 = vmatprep.subr.mxu0 0.0
      %4589 = vmatpush1.xpose.msra.mxu0 0.0
      %4590 = vmatprep.subr.mxu0 0.0
      %4591 = vmatpush1.xpose.msra.mxu0 0.0
      %4592 = vmatprep.subr.mxu0 0.0
      %4593 = vmatpush1.xpose.msra.mxu0 0.0
      %4594 = vmatprep.mubr.f32.mxu0 0.0
      %v4595 = vand.u32 %v2977, 4294901760
      %v4596 = vsub.f32 %v2977, %v4595
      %4597 = vmatmul.mubr.f32.gmra.mrb[0].mxu0 %v4596
      %v4598 = vpop.f32.mrb[0].mxu0
      %v4599 = vadd.f32 %v4433, %v4598
      %v4600 = vpop.f32.mrb[0].mxu0
      %4601 = vmatprep.mubr.f32.mxu0 0.0
      %v4602 = vand.u32 %v2980, 4294901760
      %v4603 = vsub.f32 %v2980, %v4602
      %4604 = vmatmul.mubr.f32.gmra.mrb[0].mxu0 %v4603
      %v4605 = vpop.f32.mrb[0].mxu0
      %v4606 = vadd.f32 %v4439, %v4605
      %v4607 = vpop.f32.mrb[0].mxu0
      %4608 = vmatprep.mubr.f32.mxu0 0.0
      %v4609 = vand.u32 %v2983, 4294901760
      %v4610 = vsub.f32 %v2983, %v4609
      %4611 = vmatmul.mubr.f32.gmra.mrb[0].mxu0 %v4610
      %v4612 = vpop.f32.mrb[0].mxu0
      %v4613 = vadd.f32 %v4445, %v4612
      %v4614 = vpop.f32.mrb[0].mxu0
      %4615 = vmatprep.mubr.f32.mxu0 0.0
      %v4616 = vand.u32 %v2986, 4294901760
      %v4617 = vsub.f32 %v2986, %v4616
      %4618 = vmatmul.mubr.f32.gmra.mrb[0].mxu0 %v4617
      %v4619 = vpop.f32.mrb[0].mxu0
      %v4620 = vadd.f32 %v4451, %v4619
      %v4621 = vpop.f32.mrb[0].mxu0
      %4622 = vmatprep.mubr.f32.mxu0 0.0
      %v4623 = vand.u32 %v2989, 4294901760
      %v4624 = vsub.f32 %v2989, %v4623
      %4625 = vmatmul.mubr.f32.gmra.mrb[0].mxu0 %v4624
      %v4626 = vpop.f32.mrb[0].mxu0
      %v4627 = vadd.f32 %v4457, %v4626
      %v4628 = vpop.f32.mrb[0].mxu0
      %4629 = vmatprep.mubr.f32.mxu0 0.0
      %v4630 = vand.u32 %v2992, 4294901760
      %v4631 = vsub.f32 %v2992, %v4630
      %4632 = vmatmul.mubr.f32.gmra.mrb[0].mxu0 %v4631
      %v4633 = vpop.f32.mrb[0].mxu0
      %v4634 = vadd.f32 %v4463, %v4633
      %v4635 = vpop.f32.mrb[0].mxu0
      %4636 = vmatprep.mubr.f32.mxu0 0.0
      %v4637 = vand.u32 %v2995, 4294901760
      %v4638 = vsub.f32 %v2995, %v4637
      %4639 = vmatmul.mubr.f32.gmra.mrb[0].mxu0 %v4638
      %v4640 = vpop.f32.mrb[0].mxu0
      %v4641 = vadd.f32 %v4469, %v4640
      %v4642 = vpop.f32.mrb[0].mxu0
      %4643 = vmatprep.mubr.f32.mxu0 0.0
      %v4644 = vand.u32 %v2998, 4294901760
      %v4645 = vsub.f32 %v2998, %v4644
      %4646 = vmatmul.mubr.f32.gmra.mrb[0].mxu0 %v4645
      %v4647 = vpop.f32.mrb[0].mxu0
      %v4648 = vadd.f32 %v4475, %v4647
      %v4649 = vpop.f32.mrb[0].mxu0
      %4650 = vmatprep.mubr.f32.mxu0 0.0
      %v4651 = vand.u32 %v3001, 4294901760
      %v4652 = vsub.f32 %v3001, %v4651
      %4653 = vmatmul.mubr.f32.gmra.mrb[0].mxu0 %v4652
      %v4654 = vpop.f32.mrb[0].mxu0
      %v4655 = vadd.f32 %v4481, %v4654
      %v4656 = vpop.f32.mrb[0].mxu0
      %4657 = vmatprep.mubr.f32.mxu0 0.0
      %v4658 = vand.u32 %v3004, 4294901760
      %v4659 = vsub.f32 %v3004, %v4658
      %4660 = vmatmul.mubr.f32.gmra.mrb[0].mxu0 %v4659
      %v4661 = vpop.f32.mrb[0].mxu0
      %v4662 = vadd.f32 %v4487, %v4661
      %v4663 = vpop.f32.mrb[0].mxu0
      %4664 = vmatprep.mubr.f32.mxu0 0.0
      %v4665 = vand.u32 %v3007, 4294901760
      %v4666 = vsub.f32 %v3007, %v4665
      %4667 = vmatmul.mubr.f32.gmra.mrb[0].mxu0 %v4666
      %v4668 = vpop.f32.mrb[0].mxu0
      %v4669 = vadd.f32 %v4493, %v4668
      %v4670 = vpop.f32.mrb[0].mxu0
      %4671 = vmatprep.mubr.f32.mxu0 0.0
      %v4672 = vand.u32 %v3010, 4294901760
      %v4673 = vsub.f32 %v3010, %v4672
      %4674 = vmatmul.mubr.f32.gmra.mrb[0].mxu0 %v4673
      %v4675 = vpop.f32.mrb[0].mxu0
      %v4676 = vadd.f32 %v4499, %v4675
      %v4677 = vpop.f32.mrb[0].mxu0
      %4678 = vmatprep.mubr.f32.mxu0 0.0
      %v4679 = vand.u32 %v3013, 4294901760
      %v4680 = vsub.f32 %v3013, %v4679
      %4681 = vmatmul.mubr.f32.gmra.mrb[0].mxu0 %v4680
      %v4682 = vpop.f32.mrb[0].mxu0
      %v4683 = vadd.f32 %v4505, %v4682
      %v4684 = vpop.f32.mrb[0].mxu0
      %4685 = vmatprep.mubr.f32.mxu0 0.0
      %v4686 = vand.u32 %v3016, 4294901760
      %v4687 = vsub.f32 %v3016, %v4686
      %4688 = vmatmul.mubr.f32.gmra.mrb[0].mxu0 %v4687
      %v4689 = vpop.f32.mrb[0].mxu0
      %v4690 = vadd.f32 %v4511, %v4689
      %v4691 = vpop.f32.mrb[0].mxu0
      %4692 = vmatprep.mubr.f32.mxu0 0.0
      %v4693 = vand.u32 %v3019, 4294901760
      %v4694 = vsub.f32 %v3019, %v4693
      %4695 = vmatmul.mubr.f32.gmra.mrb[0].mxu0 %v4694
      %v4696 = vpop.f32.mrb[0].mxu0
      %v4697 = vadd.f32 %v4517, %v4696
      %v4698 = vpop.f32.mrb[0].mxu0
      %4699 = vmatprep.mubr.f32.mxu0 0.0
      %v4700 = vand.u32 %v3022, 4294901760
      %v4701 = vsub.f32 %v3022, %v4700
      %4702 = vmatmul.mubr.f32.gmra.mrb[0].mxu0 %v4701
      %v4703 = vpop.f32.mrb[0].mxu0
      %v4704 = vadd.f32 %v4523, %v4703
      %v4705 = vpop.f32.mrb[0].mxu0
      %4706 = vdwg.mxu0
      %4707 = vmatprep.subr.mxu0 0.0
      %v4708 = vand.u32 %v1466, 4294901760
      %4709 = vmatpush1.xpose.msra.mxu0 %v4708
      %4710 = vmatprep.subr.mxu0 0.0
      %v4711 = vand.u32 %v1469, 4294901760
      %4712 = vmatpush1.xpose.msra.mxu0 %v4711
      %4713 = vmatprep.subr.mxu0 0.0
      %4714 = vmatpush1.xpose.msra.mxu0 0.0
      %4715 = vmatprep.subr.mxu0 0.0
      %4716 = vmatpush1.xpose.msra.mxu0 0.0
      %4717 = vmatprep.subr.mxu0 0.0
      %4718 = vmatpush1.xpose.msra.mxu0 0.0
      %4719 = vmatprep.subr.mxu0 0.0
      %4720 = vmatpush1.xpose.msra.mxu0 0.0
      %4721 = vmatprep.subr.mxu0 0.0
      %4722 = vmatpush1.xpose.msra.mxu0 0.0
      %4723 = vmatprep.subr.mxu0 0.0
      %4724 = vmatpush1.xpose.msra.mxu0 0.0
      %4725 = vmatprep.subr.mxu0 0.0
      %4726 = vmatpush1.xpose.msra.mxu0 0.0
      %4727 = vmatprep.subr.mxu0 0.0
      %4728 = vmatpush1.xpose.msra.mxu0 0.0
      %4729 = vmatprep.subr.mxu0 0.0
      %4730 = vmatpush1.xpose.msra.mxu0 0.0
      %4731 = vmatprep.subr.mxu0 0.0
      %4732 = vmatpush1.xpose.msra.mxu0 0.0
      %4733 = vmatprep.subr.mxu0 0.0
      %4734 = vmatpush1.xpose.msra.mxu0 0.0
      %4735 = vmatprep.subr.mxu0 0.0
      %4736 = vmatpush1.xpose.msra.mxu0 0.0
      %4737 = vmatprep.subr.mxu0 0.0
      %4738 = vmatpush1.xpose.msra.mxu0 0.0
      %4739 = vmatprep.subr.mxu0 0.0
      %4740 = vmatpush1.xpose.msra.mxu0 0.0
      %4741 = vmatprep.subr.mxu0 0.0
      %4742 = vmatpush1.xpose.msra.mxu0 0.0
      %4743 = vmatprep.subr.mxu0 0.0
      %4744 = vmatpush1.xpose.msra.mxu0 0.0
      %4745 = vmatprep.subr.mxu0 0.0
      %4746 = vmatpush1.xpose.msra.mxu0 0.0
      %4747 = vmatprep.subr.mxu0 0.0
      %4748 = vmatpush1.xpose.msra.mxu0 0.0
      %4749 = vmatprep.subr.mxu0 0.0
      %4750 = vmatpush1.xpose.msra.mxu0 0.0
      %4751 = vmatprep.subr.mxu0 0.0
      %4752 = vmatpush1.xpose.msra.mxu0 0.0
      %4753 = vmatprep.subr.mxu0 0.0
      %4754 = vmatpush1.xpose.msra.mxu0 0.0
      %4755 = vmatprep.subr.mxu0 0.0
      %4756 = vmatpush1.xpose.msra.mxu0 0.0
      %4757 = vmatprep.subr.mxu0 0.0
      %4758 = vmatpush1.xpose.msra.mxu0 0.0
      %4759 = vmatprep.subr.mxu0 0.0
      %4760 = vmatpush1.xpose.msra.mxu0 0.0
      %4761 = vmatprep.subr.mxu0 0.0
      %4762 = vmatpush1.xpose.msra.mxu0 0.0
      %4763 = vmatprep.subr.mxu0 0.0
      %4764 = vmatpush1.xpose.msra.mxu0 0.0
      %4765 = vmatprep.subr.mxu0 0.0
      %4766 = vmatpush1.xpose.msra.mxu0 0.0
      %4767 = vmatprep.subr.mxu0 0.0
      %4768 = vmatpush1.xpose.msra.mxu0 0.0
      %4769 = vmatprep.subr.mxu0 0.0
      %4770 = vmatpush1.xpose.msra.mxu0 0.0
      %4771 = vmatprep.subr.mxu0 0.0
      %4772 = vmatpush1.xpose.msra.mxu0 0.0
      %4773 = vmatprep.mubr.f32.mxu0 0.0
      %v4774 = vand.u32 %v2977, 4294901760
      %v4775 = vsub.f32 %v2977, %v4774
      %v4776 = vand.u32 %v4775, 4294901760
      %4777 = vmatmul.mubr.f32.gmra.mrb[0].mxu0 %v4776
      %v4778 = vpop.f32.mrb[0].mxu0
      %v4779 = vadd.f32 %v4599, %v4778
      %v4780 = vpop.f32.mrb[0].mxu0
      %4781 = vmatprep.mubr.f32.mxu0 0.0
      %v4782 = vand.u32 %v2980, 4294901760
      %v4783 = vsub.f32 %v2980, %v4782
      %v4784 = vand.u32 %v4783, 4294901760
      %4785 = vmatmul.mubr.f32.gmra.mrb[0].mxu0 %v4784
      %v4786 = vpop.f32.mrb[0].mxu0
      %v4787 = vadd.f32 %v4606, %v4786
      %v4788 = vpop.f32.mrb[0].mxu0
      %4789 = vmatprep.mubr.f32.mxu0 0.0
      %v4790 = vand.u32 %v2983, 4294901760
      %v4791 = vsub.f32 %v2983, %v4790
      %v4792 = vand.u32 %v4791, 4294901760
      %4793 = vmatmul.mubr.f32.gmra.mrb[0].mxu0 %v4792
      %v4794 = vpop.f32.mrb[0].mxu0
      %v4795 = vadd.f32 %v4613, %v4794
      %v4796 = vpop.f32.mrb[0].mxu0
      %4797 = vmatprep.mubr.f32.mxu0 0.0
      %v4798 = vand.u32 %v2986, 4294901760
      %v4799 = vsub.f32 %v2986, %v4798
      %v4800 = vand.u32 %v4799, 4294901760
      %4801 = vmatmul.mubr.f32.gmra.mrb[0].mxu0 %v4800
      %v4802 = vpop.f32.mrb[0].mxu0
      %v4803 = vadd.f32 %v4620, %v4802
      %v4804 = vpop.f32.mrb[0].mxu0
      %4805 = vmatprep.mubr.f32.mxu0 0.0
      %v4806 = vand.u32 %v2989, 4294901760
      %v4807 = vsub.f32 %v2989, %v4806
      %v4808 = vand.u32 %v4807, 4294901760
      %4809 = vmatmul.mubr.f32.gmra.mrb[0].mxu0 %v4808
      %v4810 = vpop.f32.mrb[0].mxu0
      %v4811 = vadd.f32 %v4627, %v4810
      %v4812 = vpop.f32.mrb[0].mxu0
      %4813 = vmatprep.mubr.f32.mxu0 0.0
      %v4814 = vand.u32 %v2992, 4294901760
      %v4815 = vsub.f32 %v2992, %v4814
      %v4816 = vand.u32 %v4815, 4294901760
      %4817 = vmatmul.mubr.f32.gmra.mrb[0].mxu0 %v4816
      %v4818 = vpop.f32.mrb[0].mxu0
      %v4819 = vadd.f32 %v4634, %v4818
      %v4820 = vpop.f32.mrb[0].mxu0
      %4821 = vmatprep.mubr.f32.mxu0 0.0
      %v4822 = vand.u32 %v2995, 4294901760
      %v4823 = vsub.f32 %v2995, %v4822
      %v4824 = vand.u32 %v4823, 4294901760
      %4825 = vmatmul.mubr.f32.gmra.mrb[0].mxu0 %v4824
      %v4826 = vpop.f32.mrb[0].mxu0
      %v4827 = vadd.f32 %v4641, %v4826
      %v4828 = vpop.f32.mrb[0].mxu0
      %4829 = vmatprep.mubr.f32.mxu0 0.0
      %v4830 = vand.u32 %v2998, 4294901760
      %v4831 = vsub.f32 %v2998, %v4830
      %v4832 = vand.u32 %v4831, 4294901760
      %4833 = vmatmul.mubr.f32.gmra.mrb[0].mxu0 %v4832
      %v4834 = vpop.f32.mrb[0].mxu0
      %v4835 = vadd.f32 %v4648, %v4834
      %v4836 = vpop.f32.mrb[0].mxu0
      %4837 = vmatprep.mubr.f32.mxu0 0.0
      %v4838 = vand.u32 %v3001, 4294901760
      %v4839 = vsub.f32 %v3001, %v4838
      %v4840 = vand.u32 %v4839, 4294901760
      %4841 = vmatmul.mubr.f32.gmra.mrb[0].mxu0 %v4840
      %v4842 = vpop.f32.mrb[0].mxu0
      %v4843 = vadd.f32 %v4655, %v4842
      %v4844 = vpop.f32.mrb[0].mxu0
      %4845 = vmatprep.mubr.f32.mxu0 0.0
      %v4846 = vand.u32 %v3004, 4294901760
      %v4847 = vsub.f32 %v3004, %v4846
      %v4848 = vand.u32 %v4847, 4294901760
      %4849 = vmatmul.mubr.f32.gmra.mrb[0].mxu0 %v4848
      %v4850 = vpop.f32.mrb[0].mxu0
      %v4851 = vadd.f32 %v4662, %v4850
      %v4852 = vpop.f32.mrb[0].mxu0
      %4853 = vmatprep.mubr.f32.mxu0 0.0
      %v4854 = vand.u32 %v3007, 4294901760
      %v4855 = vsub.f32 %v3007, %v4854
      %v4856 = vand.u32 %v4855, 4294901760
      %4857 = vmatmul.mubr.f32.gmra.mrb[0].mxu0 %v4856
      %v4858 = vpop.f32.mrb[0].mxu0
      %v4859 = vadd.f32 %v4669, %v4858
      %v4860 = vpop.f32.mrb[0].mxu0
      %4861 = vmatprep.mubr.f32.mxu0 0.0
      %v4862 = vand.u32 %v3010, 4294901760
      %v4863 = vsub.f32 %v3010, %v4862
      %v4864 = vand.u32 %v4863, 4294901760
      %4865 = vmatmul.mubr.f32.gmra.mrb[0].mxu0 %v4864
      %v4866 = vpop.f32.mrb[0].mxu0
      %v4867 = vadd.f32 %v4676, %v4866
      %v4868 = vpop.f32.mrb[0].mxu0
      %4869 = vmatprep.mubr.f32.mxu0 0.0
      %v4870 = vand.u32 %v3013, 4294901760
      %v4871 = vsub.f32 %v3013, %v4870
      %v4872 = vand.u32 %v4871, 4294901760
      %4873 = vmatmul.mubr.f32.gmra.mrb[0].mxu0 %v4872
      %v4874 = vpop.f32.mrb[0].mxu0
      %v4875 = vadd.f32 %v4683, %v4874
      %v4876 = vpop.f32.mrb[0].mxu0
      %4877 = vmatprep.mubr.f32.mxu0 0.0
      %v4878 = vand.u32 %v3016, 4294901760
      %v4879 = vsub.f32 %v3016, %v4878
      %v4880 = vand.u32 %v4879, 4294901760
      %4881 = vmatmul.mubr.f32.gmra.mrb[0].mxu0 %v4880
      %v4882 = vpop.f32.mrb[0].mxu0
      %v4883 = vadd.f32 %v4690, %v4882
      %v4884 = vpop.f32.mrb[0].mxu0
      %4885 = vmatprep.mubr.f32.mxu0 0.0
      %v4886 = vand.u32 %v3019, 4294901760
      %v4887 = vsub.f32 %v3019, %v4886
      %v4888 = vand.u32 %v4887, 4294901760
      %4889 = vmatmul.mubr.f32.gmra.mrb[0].mxu0 %v4888
      %v4890 = vpop.f32.mrb[0].mxu0
      %v4891 = vadd.f32 %v4697, %v4890
      %v4892 = vpop.f32.mrb[0].mxu0
      %4893 = vmatprep.mubr.f32.mxu0 0.0
      %v4894 = vand.u32 %v3022, 4294901760
      %v4895 = vsub.f32 %v3022, %v4894
      %v4896 = vand.u32 %v4895, 4294901760
      %4897 = vmatmul.mubr.f32.gmra.mrb[0].mxu0 %v4896
      %v4898 = vpop.f32.mrb[0].mxu0
      %v4899 = vadd.f32 %v4704, %v4898
      %v4900 = vpop.f32.mrb[0].mxu0
      %4901 = vdwg.mxu0
      %4902 = vmatprep.subr.mxu0 0.0
      %v4903 = vand.u32 %v1466, 4294901760
      %v4904 = vsub.f32 %v1466, %v4903
      %v4905 = vand.u32 %v4904, 4294901760
      %4906 = vmatpush1.xpose.msra.mxu0 %v4905
      %4907 = vmatprep.subr.mxu0 0.0
      %v4908 = vand.u32 %v1469, 4294901760
      %v4909 = vsub.f32 %v1469, %v4908
      %v4910 = vand.u32 %v4909, 4294901760
      %4911 = vmatpush1.xpose.msra.mxu0 %v4910
      %4912 = vmatprep.subr.mxu0 0.0
      %4913 = vmatpush1.xpose.msra.mxu0 0.0
      %4914 = vmatprep.subr.mxu0 0.0
      %4915 = vmatpush1.xpose.msra.mxu0 0.0
      %4916 = vmatprep.subr.mxu0 0.0
      %4917 = vmatpush1.xpose.msra.mxu0 0.0
      %4918 = vmatprep.subr.mxu0 0.0
      %4919 = vmatpush1.xpose.msra.mxu0 0.0
      %4920 = vmatprep.subr.mxu0 0.0
      %4921 = vmatpush1.xpose.msra.mxu0 0.0
      %4922 = vmatprep.subr.mxu0 0.0
      %4923 = vmatpush1.xpose.msra.mxu0 0.0
      %4924 = vmatprep.subr.mxu0 0.0
      %4925 = vmatpush1.xpose.msra.mxu0 0.0
      %4926 = vmatprep.subr.mxu0 0.0
      %4927 = vmatpush1.xpose.msra.mxu0 0.0
      %4928 = vmatprep.subr.mxu0 0.0
      %4929 = vmatpush1.xpose.msra.mxu0 0.0
      %4930 = vmatprep.subr.mxu0 0.0
      %4931 = vmatpush1.xpose.msra.mxu0 0.0
      %4932 = vmatprep.subr.mxu0 0.0
      %4933 = vmatpush1.xpose.msra.mxu0 0.0
      %4934 = vmatprep.subr.mxu0 0.0
      %4935 = vmatpush1.xpose.msra.mxu0 0.0
      %4936 = vmatprep.subr.mxu0 0.0
      %4937 = vmatpush1.xpose.msra.mxu0 0.0
      %4938 = vmatprep.subr.mxu0 0.0
      %4939 = vmatpush1.xpose.msra.mxu0 0.0
      %4940 = vmatprep.subr.mxu0 0.0
      %4941 = vmatpush1.xpose.msra.mxu0 0.0
      %4942 = vmatprep.subr.mxu0 0.0
      %4943 = vmatpush1.xpose.msra.mxu0 0.0
      %4944 = vmatprep.subr.mxu0 0.0
      %4945 = vmatpush1.xpose.msra.mxu0 0.0
      %4946 = vmatprep.subr.mxu0 0.0
      %4947 = vmatpush1.xpose.msra.mxu0 0.0
      %4948 = vmatprep.subr.mxu0 0.0
      %4949 = vmatpush1.xpose.msra.mxu0 0.0
      %4950 = vmatprep.subr.mxu0 0.0
      %4951 = vmatpush1.xpose.msra.mxu0 0.0
      %4952 = vmatprep.subr.mxu0 0.0
      %4953 = vmatpush1.xpose.msra.mxu0 0.0
      %4954 = vmatprep.subr.mxu0 0.0
      %4955 = vmatpush1.xpose.msra.mxu0 0.0
      %4956 = vmatprep.subr.mxu0 0.0
      %4957 = vmatpush1.xpose.msra.mxu0 0.0
      %4958 = vmatprep.subr.mxu0 0.0
      %4959 = vmatpush1.xpose.msra.mxu0 0.0
      %4960 = vmatprep.subr.mxu0 0.0
      %4961 = vmatpush1.xpose.msra.mxu0 0.0
      %4962 = vmatprep.subr.mxu0 0.0
      %4963 = vmatpush1.xpose.msra.mxu0 0.0
      %4964 = vmatprep.subr.mxu0 0.0
      %4965 = vmatpush1.xpose.msra.mxu0 0.0
      %4966 = vmatprep.subr.mxu0 0.0
      %4967 = vmatpush1.xpose.msra.mxu0 0.0
      %4968 = vmatprep.subr.mxu0 0.0
      %4969 = vmatpush1.xpose.msra.mxu0 0.0
      %4970 = vmatprep.subr.mxu0 0.0
      %4971 = vmatpush1.xpose.msra.mxu0 0.0
      %4972 = vmatprep.mubr.f32.mxu0 0.0
      %v4973 = vand.u32 %v2977, 4294901760
      %4974 = vmatmul.mubr.f32.gmra.mrb[0].mxu0 %v4973
      %v4975 = vpop.f32.mrb[0].mxu0
      %v4976 = vadd.f32 %v4779, %v4975
      %v4977 = vpop.f32.mrb[0].mxu0
      %4978 = vmatprep.mubr.f32.mxu0 0.0
      %v4979 = vand.u32 %v2980, 4294901760
      %4980 = vmatmul.mubr.f32.gmra.mrb[0].mxu0 %v4979
      %v4981 = vpop.f32.mrb[0].mxu0
      %v4982 = vadd.f32 %v4787, %v4981
      %v4983 = vpop.f32.mrb[0].mxu0
      %4984 = vmatprep.mubr.f32.mxu0 0.0
      %v4985 = vand.u32 %v2983, 4294901760
      %4986 = vmatmul.mubr.f32.gmra.mrb[0].mxu0 %v4985
      %v4987 = vpop.f32.mrb[0].mxu0
      %v4988 = vadd.f32 %v4795, %v4987
      %v4989 = vpop.f32.mrb[0].mxu0
      %4990 = vmatprep.mubr.f32.mxu0 0.0
      %v4991 = vand.u32 %v2986, 4294901760
      %4992 = vmatmul.mubr.f32.gmra.mrb[0].mxu0 %v4991
      %v4993 = vpop.f32.mrb[0].mxu0
      %v4994 = vadd.f32 %v4803, %v4993
      %v4995 = vpop.f32.mrb[0].mxu0
      %4996 = vmatprep.mubr.f32.mxu0 0.0
      %v4997 = vand.u32 %v2989, 4294901760
      %4998 = vmatmul.mubr.f32.gmra.mrb[0].mxu0 %v4997
      %v4999 = vpop.f32.mrb[0].mxu0
      %v5000 = vadd.f32 %v4811, %v4999
      %v5001 = vpop.f32.mrb[0].mxu0
      %5002 = vmatprep.mubr.f32.mxu0 0.0
      %v5003 = vand.u32 %v2992, 4294901760
      %5004 = vmatmul.mubr.f32.gmra.mrb[0].mxu0 %v5003
      %v5005 = vpop.f32.mrb[0].mxu0
      %v5006 = vadd.f32 %v4819, %v5005
      %v5007 = vpop.f32.mrb[0].mxu0
      %5008 = vmatprep.mubr.f32.mxu0 0.0
      %v5009 = vand.u32 %v2995, 4294901760
      %5010 = vmatmul.mubr.f32.gmra.mrb[0].mxu0 %v5009
      %v5011 = vpop.f32.mrb[0].mxu0
      %v5012 = vadd.f32 %v4827, %v5011
      %v5013 = vpop.f32.mrb[0].mxu0
      %5014 = vmatprep.mubr.f32.mxu0 0.0
      %v5015 = vand.u32 %v2998, 4294901760
      %5016 = vmatmul.mubr.f32.gmra.mrb[0].mxu0 %v5015
      %v5017 = vpop.f32.mrb[0].mxu0
      %v5018 = vadd.f32 %v4835, %v5017
      %v5019 = vpop.f32.mrb[0].mxu0
      %5020 = vmatprep.mubr.f32.mxu0 0.0
      %v5021 = vand.u32 %v3001, 4294901760
      %5022 = vmatmul.mubr.f32.gmra.mrb[0].mxu0 %v5021
      %v5023 = vpop.f32.mrb[0].mxu0
      %v5024 = vadd.f32 %v4843, %v5023
      %v5025 = vpop.f32.mrb[0].mxu0
      %5026 = vmatprep.mubr.f32.mxu0 0.0
      %v5027 = vand.u32 %v3004, 4294901760
      %5028 = vmatmul.mubr.f32.gmra.mrb[0].mxu0 %v5027
      %v5029 = vpop.f32.mrb[0].mxu0
      %v5030 = vadd.f32 %v4851, %v5029
      %v5031 = vpop.f32.mrb[0].mxu0
      %5032 = vmatprep.mubr.f32.mxu0 0.0
      %v5033 = vand.u32 %v3007, 4294901760
      %5034 = vmatmul.mubr.f32.gmra.mrb[0].mxu0 %v5033
      %v5035 = vpop.f32.mrb[0].mxu0
      %v5036 = vadd.f32 %v4859, %v5035
      %v5037 = vpop.f32.mrb[0].mxu0
      %5038 = vmatprep.mubr.f32.mxu0 0.0
      %v5039 = vand.u32 %v3010, 4294901760
      %5040 = vmatmul.mubr.f32.gmra.mrb[0].mxu0 %v5039
      %v5041 = vpop.f32.mrb[0].mxu0
      %v5042 = vadd.f32 %v4867, %v5041
      %v5043 = vpop.f32.mrb[0].mxu0
      %5044 = vmatprep.mubr.f32.mxu0 0.0
      %v5045 = vand.u32 %v3013, 4294901760
      %5046 = vmatmul.mubr.f32.gmra.mrb[0].mxu0 %v5045
      %v5047 = vpop.f32.mrb[0].mxu0
      %v5048 = vadd.f32 %v4875, %v5047
      %v5049 = vpop.f32.mrb[0].mxu0
      %5050 = vmatprep.mubr.f32.mxu0 0.0
      %v5051 = vand.u32 %v3016, 4294901760
      %5052 = vmatmul.mubr.f32.gmra.mrb[0].mxu0 %v5051
      %v5053 = vpop.f32.mrb[0].mxu0
      %v5054 = vadd.f32 %v4883, %v5053
      %v5055 = vpop.f32.mrb[0].mxu0
      %5056 = vmatprep.mubr.f32.mxu0 0.0
      %v5057 = vand.u32 %v3019, 4294901760
      %5058 = vmatmul.mubr.f32.gmra.mrb[0].mxu0 %v5057
      %v5059 = vpop.f32.mrb[0].mxu0
      %v5060 = vadd.f32 %v4891, %v5059
      %v5061 = vpop.f32.mrb[0].mxu0
      %5062 = vmatprep.mubr.f32.mxu0 0.0
      %v5063 = vand.u32 %v3022, 4294901760
      %5064 = vmatmul.mubr.f32.gmra.mrb[0].mxu0 %v5063
      %v5065 = vpop.f32.mrb[0].mxu0
      %v5066 = vadd.f32 %v4899, %v5065
      %v5067 = vpop.f32.mrb[0].mxu0
      %5068 = vdwg.mxu0
      %5069 = vmatprep.subr.mxu0 0.0
      %v5070 = vand.u32 %v1466, 4294901760
      %5071 = vmatpush1.xpose.msra.mxu0 %v5070
      %5072 = vmatprep.subr.mxu0 0.0
      %v5073 = vand.u32 %v1469, 4294901760
      %5074 = vmatpush1.xpose.msra.mxu0 %v5073
      %5075 = vmatprep.subr.mxu0 0.0
      %5076 = vmatpush1.xpose.msra.mxu0 0.0
      %5077 = vmatprep.subr.mxu0 0.0
      %5078 = vmatpush1.xpose.msra.mxu0 0.0
      %5079 = vmatprep.subr.mxu0 0.0
      %5080 = vmatpush1.xpose.msra.mxu0 0.0
      %5081 = vmatprep.subr.mxu0 0.0
      %5082 = vmatpush1.xpose.msra.mxu0 0.0
      %5083 = vmatprep.subr.mxu0 0.0
      %5084 = vmatpush1.xpose.msra.mxu0 0.0
      %5085 = vmatprep.subr.mxu0 0.0
      %5086 = vmatpush1.xpose.msra.mxu0 0.0
      %5087 = vmatprep.subr.mxu0 0.0
      %5088 = vmatpush1.xpose.msra.mxu0 0.0
      %5089 = vmatprep.subr.mxu0 0.0
      %5090 = vmatpush1.xpose.msra.mxu0 0.0
      %5091 = vmatprep.subr.mxu0 0.0
      %5092 = vmatpush1.xpose.msra.mxu0 0.0
      %5093 = vmatprep.subr.mxu0 0.0
      %5094 = vmatpush1.xpose.msra.mxu0 0.0
      %5095 = vmatprep.subr.mxu0 0.0
      %5096 = vmatpush1.xpose.msra.mxu0 0.0
      %5097 = vmatprep.subr.mxu0 0.0
      %5098 = vmatpush1.xpose.msra.mxu0 0.0
      %5099 = vmatprep.subr.mxu0 0.0
      %5100 = vmatpush1.xpose.msra.mxu0 0.0
      %5101 = vmatprep.subr.mxu0 0.0
      %5102 = vmatpush1.xpose.msra.mxu0 0.0
      %5103 = vmatprep.subr.mxu0 0.0
      %5104 = vmatpush1.xpose.msra.mxu0 0.0
      %5105 = vmatprep.subr.mxu0 0.0
      %5106 = vmatpush1.xpose.msra.mxu0 0.0
      %5107 = vmatprep.subr.mxu0 0.0
      %5108 = vmatpush1.xpose.msra.mxu0 0.0
      %5109 = vmatprep.subr.mxu0 0.0
      %5110 = vmatpush1.xpose.msra.mxu0 0.0
      %5111 = vmatprep.subr.mxu0 0.0
      %5112 = vmatpush1.xpose.msra.mxu0 0.0
      %5113 = vmatprep.subr.mxu0 0.0
      %5114 = vmatpush1.xpose.msra.mxu0 0.0
      %5115 = vmatprep.subr.mxu0 0.0
      %5116 = vmatpush1.xpose.msra.mxu0 0.0
      %5117 = vmatprep.subr.mxu0 0.0
      %5118 = vmatpush1.xpose.msra.mxu0 0.0
      %5119 = vmatprep.subr.mxu0 0.0
      %5120 = vmatpush1.xpose.msra.mxu0 0.0
      %5121 = vmatprep.subr.mxu0 0.0
      %5122 = vmatpush1.xpose.msra.mxu0 0.0
      %5123 = vmatprep.subr.mxu0 0.0
      %5124 = vmatpush1.xpose.msra.mxu0 0.0
      %5125 = vmatprep.subr.mxu0 0.0
      %5126 = vmatpush1.xpose.msra.mxu0 0.0
      %5127 = vmatprep.subr.mxu0 0.0
      %5128 = vmatpush1.xpose.msra.mxu0 0.0
      %5129 = vmatprep.subr.mxu0 0.0
      %5130 = vmatpush1.xpose.msra.mxu0 0.0
      %5131 = vmatprep.subr.mxu0 0.0
      %5132 = vmatpush1.xpose.msra.mxu0 0.0
      %5133 = vmatprep.subr.mxu0 0.0
      %5134 = vmatpush1.xpose.msra.mxu0 0.0
      %5135 = vmatprep.mubr.f32.mxu0 0.0
      %v5136 = vand.u32 %v2977, 4294901760
      %5137 = vmatmul.mubr.f32.gmra.mrb[0].mxu0 %v5136
      %v5138 = vpop.f32.mrb[0].mxu0
      %v5139 = vadd.f32 %v4976, %v5138
      %v5140 = vpop.f32.mrb[0].mxu0
      %5141 = vmatprep.mubr.f32.mxu0 0.0
      %v5142 = vand.u32 %v2980, 4294901760
      %5143 = vmatmul.mubr.f32.gmra.mrb[0].mxu0 %v5142
      %v5144 = vpop.f32.mrb[0].mxu0
      %v5145 = vadd.f32 %v4982, %v5144
      %v5146 = vpop.f32.mrb[0].mxu0
      %5147 = vmatprep.mubr.f32.mxu0 0.0
      %v5148 = vand.u32 %v2983, 4294901760
      %5149 = vmatmul.mubr.f32.gmra.mrb[0].mxu0 %v5148
      %v5150 = vpop.f32.mrb[0].mxu0
      %v5151 = vadd.f32 %v4988, %v5150
      %v5152 = vpop.f32.mrb[0].mxu0
      %5153 = vmatprep.mubr.f32.mxu0 0.0
      %v5154 = vand.u32 %v2986, 4294901760
      %5155 = vmatmul.mubr.f32.gmra.mrb[0].mxu0 %v5154
      %v5156 = vpop.f32.mrb[0].mxu0
      %v5157 = vadd.f32 %v4994, %v5156
      %v5158 = vpop.f32.mrb[0].mxu0
      %5159 = vmatprep.mubr.f32.mxu0 0.0
      %v5160 = vand.u32 %v2989, 4294901760
      %5161 = vmatmul.mubr.f32.gmra.mrb[0].mxu0 %v5160
      %v5162 = vpop.f32.mrb[0].mxu0
      %v5163 = vadd.f32 %v5000, %v5162
      %v5164 = vpop.f32.mrb[0].mxu0
      %5165 = vmatprep.mubr.f32.mxu0 0.0
      %v5166 = vand.u32 %v2992, 4294901760
      %5167 = vmatmul.mubr.f32.gmra.mrb[0].mxu0 %v5166
      %v5168 = vpop.f32.mrb[0].mxu0
      %v5169 = vadd.f32 %v5006, %v5168
      %v5170 = vpop.f32.mrb[0].mxu0
      %5171 = vmatprep.mubr.f32.mxu0 0.0
      %v5172 = vand.u32 %v2995, 4294901760
      %5173 = vmatmul.mubr.f32.gmra.mrb[0].mxu0 %v5172
      %v5174 = vpop.f32.mrb[0].mxu0
      %v5175 = vadd.f32 %v5012, %v5174
      %v5176 = vpop.f32.mrb[0].mxu0
      %5177 = vmatprep.mubr.f32.mxu0 0.0
      %v5178 = vand.u32 %v2998, 4294901760
      %5179 = vmatmul.mubr.f32.gmra.mrb[0].mxu0 %v5178
      %v5180 = vpop.f32.mrb[0].mxu0
      %v5181 = vadd.f32 %v5018, %v5180
      %v5182 = vpop.f32.mrb[0].mxu0
      %5183 = vmatprep.mubr.f32.mxu0 0.0
      %v5184 = vand.u32 %v3001, 4294901760
      %5185 = vmatmul.mubr.f32.gmra.mrb[0].mxu0 %v5184
      %v5186 = vpop.f32.mrb[0].mxu0
      %v5187 = vadd.f32 %v5024, %v5186
      %v5188 = vpop.f32.mrb[0].mxu0
      %5189 = vmatprep.mubr.f32.mxu0 0.0
      %v5190 = vand.u32 %v3004, 4294901760
      %5191 = vmatmul.mubr.f32.gmra.mrb[0].mxu0 %v5190
      %v5192 = vpop.f32.mrb[0].mxu0
      %v5193 = vadd.f32 %v5030, %v5192
      %v5194 = vpop.f32.mrb[0].mxu0
      %5195 = vmatprep.mubr.f32.mxu0 0.0
      %v5196 = vand.u32 %v3007, 4294901760
      %5197 = vmatmul.mubr.f32.gmra.mrb[0].mxu0 %v5196
      %v5198 = vpop.f32.mrb[0].mxu0
      %v5199 = vadd.f32 %v5036, %v5198
      %v5200 = vpop.f32.mrb[0].mxu0
      %5201 = vmatprep.mubr.f32.mxu0 0.0
      %v5202 = vand.u32 %v3010, 4294901760
      %5203 = vmatmul.mubr.f32.gmra.mrb[0].mxu0 %v5202
      %v5204 = vpop.f32.mrb[0].mxu0
      %v5205 = vadd.f32 %v5042, %v5204
      %v5206 = vpop.f32.mrb[0].mxu0
      %5207 = vmatprep.mubr.f32.mxu0 0.0
      %v5208 = vand.u32 %v3013, 4294901760
      %5209 = vmatmul.mubr.f32.gmra.mrb[0].mxu0 %v5208
      %v5210 = vpop.f32.mrb[0].mxu0
      %v5211 = vadd.f32 %v5048, %v5210
      %v5212 = vpop.f32.mrb[0].mxu0
      %5213 = vmatprep.mubr.f32.mxu0 0.0
      %v5214 = vand.u32 %v3016, 4294901760
      %5215 = vmatmul.mubr.f32.gmra.mrb[0].mxu0 %v5214
      %v5216 = vpop.f32.mrb[0].mxu0
      %v5217 = vadd.f32 %v5054, %v5216
      %v5218 = vpop.f32.mrb[0].mxu0
      %5219 = vmatprep.mubr.f32.mxu0 0.0
      %v5220 = vand.u32 %v3019, 4294901760
      %5221 = vmatmul.mubr.f32.gmra.mrb[0].mxu0 %v5220
      %v5222 = vpop.f32.mrb[0].mxu0
      %v5223 = vadd.f32 %v5060, %v5222
      %v5224 = vpop.f32.mrb[0].mxu0
      %5225 = vmatprep.mubr.f32.mxu0 0.0
      %v5226 = vand.u32 %v3022, 4294901760
      %5227 = vmatmul.mubr.f32.gmra.mrb[0].mxu0 %v5226
      %v5228 = vpop.f32.mrb[0].mxu0
      %v5229 = vadd.f32 %v5066, %v5228
      %v5230 = vpop.f32.mrb[0].mxu0
      %5231 = vdwg.mxu0
      %v5232 = vsel %vm2575, %v4035, 0.0
      %v5233 = vsel %vm2575, %v4041, 0.0
      %v5234 = vadd.f32 %v5232, %v5233
      %v5235 = vsel %vm2575, %v4047, 0.0
      %v5236 = vadd.f32 %v5234, %v5235
      %v5237 = vsel %vm2575, %v4053, 0.0
      %v5238 = vadd.f32 %v5236, %v5237
      %v5239 = vsel %vm2575, %v4059, 0.0
      %v5240 = vadd.f32 %v5238, %v5239
      %v5241 = vsel %vm2575, %v4065, 0.0
      %v5242 = vadd.f32 %v5240, %v5241
      %v5243 = vsel %vm2575, %v4071, 0.0
      %v5244 = vadd.f32 %v5242, %v5243
      %v5245 = vsel %vm2575, %v4077, 0.0
      %v5246 = vadd.f32 %v5244, %v5245
      %v5247 = vsel %vm2575, %v4083, 0.0
      %v5248 = vadd.f32 %v5246, %v5247
      %v5249 = vsel %vm2575, %v4089, 0.0
      %v5250 = vadd.f32 %v5248, %v5249
      %v5251 = vsel %vm2575, %v4095, 0.0
      %v5252 = vadd.f32 %v5250, %v5251
      %v5253 = vsel %vm2575, %v4101, 0.0
      %v5254 = vadd.f32 %v5252, %v5253
      %v5255 = vsel %vm2575, %v4107, 0.0
      %v5256 = vadd.f32 %v5254, %v5255
      %v5257 = vsel %vm2575, %v4113, 0.0
      %v5258 = vadd.f32 %v5256, %v5257
      %v5259 = vsel %vm2575, %v4119, 0.0
      %v5260 = vadd.f32 %v5258, %v5259
      %v5261 = vsel %vm2575, %v4125, 0.0
      %v5262 = vadd.f32 %v5260, %v5261
      %v5263 = vrot.slane %v5262, 4
      %v5264 = vadd.f32 %v5262, %v5263
      %v5265 = vrot.slane %v5264, 2
      %v5266 = vadd.f32 %v5264, %v5265
      %v5267 = vrot.slane %v5266, 1
      %v5268 = vadd.f32 %v5266, %v5267
      %v5269 = vmul.f32 %v4035, %v4035
      %v5270 = vmul.f32 %v4041, %v4041
      %v5271 = vmul.f32 %v4047, %v4047
      %v5272 = vmul.f32 %v4053, %v4053
      %v5273 = vmul.f32 %v4059, %v4059
      %v5274 = vmul.f32 %v4065, %v4065
      %v5275 = vmul.f32 %v4071, %v4071
      %v5276 = vmul.f32 %v4077, %v4077
      %v5277 = vmul.f32 %v4083, %v4083
      %v5278 = vmul.f32 %v4089, %v4089
      %v5279 = vmul.f32 %v4095, %v4095
      %v5280 = vmul.f32 %v4101, %v4101
      %v5281 = vmul.f32 %v4107, %v4107
      %v5282 = vmul.f32 %v4113, %v4113
      %v5283 = vmul.f32 %v4119, %v4119
      %v5284 = vmul.f32 %v4125, %v4125
      %v5285 = vsel %vm2575, %v5269, 0.0
      %v5286 = vsel %vm2575, %v5270, 0.0
      %v5287 = vadd.f32 %v5285, %v5286
      %v5288 = vsel %vm2575, %v5271, 0.0
      %v5289 = vadd.f32 %v5287, %v5288
      %v5290 = vsel %vm2575, %v5272, 0.0
      %v5291 = vadd.f32 %v5289, %v5290
      %v5292 = vsel %vm2575, %v5273, 0.0
      %v5293 = vadd.f32 %v5291, %v5292
      %v5294 = vsel %vm2575, %v5274, 0.0
      %v5295 = vadd.f32 %v5293, %v5294
      %v5296 = vsel %vm2575, %v5275, 0.0
      %v5297 = vadd.f32 %v5295, %v5296
      %v5298 = vsel %vm2575, %v5276, 0.0
      %v5299 = vadd.f32 %v5297, %v5298
      %v5300 = vsel %vm2575, %v5277, 0.0
      %v5301 = vadd.f32 %v5299, %v5300
      %v5302 = vsel %vm2575, %v5278, 0.0
      %v5303 = vadd.f32 %v5301, %v5302
      %v5304 = vsel %vm2575, %v5279, 0.0
      %v5305 = vadd.f32 %v5303, %v5304
      %v5306 = vsel %vm2575, %v5280, 0.0
      %v5307 = vadd.f32 %v5305, %v5306
      %v5308 = vsel %vm2575, %v5281, 0.0
      %v5309 = vadd.f32 %v5307, %v5308
      %v5310 = vsel %vm2575, %v5282, 0.0
      %v5311 = vadd.f32 %v5309, %v5310
      %v5312 = vsel %vm2575, %v5283, 0.0
      %v5313 = vadd.f32 %v5311, %v5312
      %v5314 = vsel %vm2575, %v5284, 0.0
      %v5315 = vadd.f32 %v5313, %v5314
      %v5316 = vrot.slane %v5315, 4
      %v5317 = vadd.f32 %v5315, %v5316
      %v5318 = vrot.slane %v5317, 2
      %v5319 = vadd.f32 %v5317, %v5318
      %v5320 = vrot.slane %v5319, 1
      %v5321 = vadd.f32 %v5319, %v5320
      %v5322 = vmul.f32 %v5268, 0.0078125
      %v5323 = vmul.f32 %v5321, 0.0078125
      %v5324 = vmul.f32 %v5322, %v5322
      %v5325 = vsub.f32 %v5323, %v5324
      %v5326 = vmax.f32 %v5325, 0.0
      %v5327 = vadd.f32 %v5326, 1e-05
      %v5328 = vrsqrt.pop %v5327
      %v5329 = vmul.f32 %v286, %v5328
      %v5331 = vlaneseq
      %v5332 = vshrl.u32 %v5331, 7
      %v5333 = vsub.s32 0, %v5332
      %v5334 = vrot.slane %v5329, %v5333
      %v5336 = vmul.f32 %v4035, %v5334
      %v5337 = vmul.f32 %v4041, %v5334
      %v5338 = vmul.f32 %v4047, %v5334
      %v5339 = vmul.f32 %v4053, %v5334
      %v5340 = vmul.f32 %v4059, %v5334
      %v5341 = vmul.f32 %v4065, %v5334
      %v5342 = vmul.f32 %v4071, %v5334
      %v5343 = vmul.f32 %v4077, %v5334
      %v5344 = vmul.f32 %v4083, %v5334
      %v5345 = vmul.f32 %v4089, %v5334
      %v5346 = vmul.f32 %v4095, %v5334
      %v5347 = vmul.f32 %v4101, %v5334
      %v5348 = vmul.f32 %v4107, %v5334
      %v5349 = vmul.f32 %v4113, %v5334
      %v5350 = vmul.f32 %v4119, %v5334
      %v5351 = vmul.f32 %v4125, %v5334
      %v5352 = vmul.f32 %v5322, %v5329
      %v5353 = vsub.f32 %v287, %v5352
      %v5355 = vlaneseq
      %v5356 = vshrl.u32 %v5355, 7
      %v5357 = vsub.s32 0, %v5356
      %v5358 = vrot.slane %v5353, %v5357
      %v5360 = vadd.f32 %v5336, %v5358
      %v5361 = vadd.f32 %v5337, %v5358
      %v5362 = vadd.f32 %v5338, %v5358
      %v5363 = vadd.f32 %v5339, %v5358
      %v5364 = vadd.f32 %v5340, %v5358
      %v5365 = vadd.f32 %v5341, %v5358
      %v5366 = vadd.f32 %v5342, %v5358
      %v5367 = vadd.f32 %v5343, %v5358
      %v5368 = vadd.f32 %v5344, %v5358
      %v5369 = vadd.f32 %v5345, %v5358
      %v5370 = vadd.f32 %v5346, %v5358
      %v5371 = vadd.f32 %v5347, %v5358
      %v5372 = vadd.f32 %v5348, %v5358
      %v5373 = vadd.f32 %v5349, %v5358
      %v5374 = vadd.f32 %v5350, %v5358
      %v5375 = vadd.f32 %v5351, %v5358
      %v5376 = vsel %vm2575, %v5139, 0.0
      %v5377 = vsel %vm2575, %v5145, 0.0
      %v5378 = vadd.f32 %v5376, %v5377
      %v5379 = vsel %vm2575, %v5151, 0.0
      %v5380 = vadd.f32 %v5378, %v5379
      %v5381 = vsel %vm2575, %v5157, 0.0
      %v5382 = vadd.f32 %v5380, %v5381
      %v5383 = vsel %vm2575, %v5163, 0.0
      %v5384 = vadd.f32 %v5382, %v5383
      %v5385 = vsel %vm2575, %v5169, 0.0
      %v5386 = vadd.f32 %v5384, %v5385
      %v5387 = vsel %vm2575, %v5175, 0.0
      %v5388 = vadd.f32 %v5386, %v5387
      %v5389 = vsel %vm2575, %v5181, 0.0
      %v5390 = vadd.f32 %v5388, %v5389
      %v5391 = vsel %vm2575, %v5187, 0.0
      %v5392 = vadd.f32 %v5390, %v5391
      %v5393 = vsel %vm2575, %v5193, 0.0
      %v5394 = vadd.f32 %v5392, %v5393
      %v5395 = vsel %vm2575, %v5199, 0.0
      %v5396 = vadd.f32 %v5394, %v5395
      %v5397 = vsel %vm2575, %v5205, 0.0
      %v5398 = vadd.f32 %v5396, %v5397
      %v5399 = vsel %vm2575, %v5211, 0.0
      %v5400 = vadd.f32 %v5398, %v5399
      %v5401 = vsel %vm2575, %v5217, 0.0
      %v5402 = vadd.f32 %v5400, %v5401
      %v5403 = vsel %vm2575, %v5223, 0.0
      %v5404 = vadd.f32 %v5402, %v5403
      %v5405 = vsel %vm2575, %v5229, 0.0
      %v5406 = vadd.f32 %v5404, %v5405
      %v5407 = vrot.slane %v5406, 4
      %v5408 = vadd.f32 %v5406, %v5407
      %v5409 = vrot.slane %v5408, 2
      %v5410 = vadd.f32 %v5408, %v5409
      %v5411 = vrot.slane %v5410, 1
      %v5412 = vadd.f32 %v5410, %v5411
      %v5413 = vmul.f32 %v5139, %v5139
      %v5414 = vmul.f32 %v5145, %v5145
      %v5415 = vmul.f32 %v5151, %v5151
      %v5416 = vmul.f32 %v5157, %v5157
      %v5417 = vmul.f32 %v5163, %v5163
      %v5418 = vmul.f32 %v5169, %v5169
      %v5419 = vmul.f32 %v5175, %v5175
      %v5420 = vmul.f32 %v5181, %v5181
      %v5421 = vmul.f32 %v5187, %v5187
      %v5422 = vmul.f32 %v5193, %v5193
      %v5423 = vmul.f32 %v5199, %v5199
      %v5424 = vmul.f32 %v5205, %v5205
      %v5425 = vmul.f32 %v5211, %v5211
      %v5426 = vmul.f32 %v5217, %v5217
      %v5427 = vmul.f32 %v5223, %v5223
      %v5428 = vmul.f32 %v5229, %v5229
      %v5429 = vsel %vm2575, %v5413, 0.0
      %v5430 = vsel %vm2575, %v5414, 0.0
      %v5431 = vadd.f32 %v5429, %v5430
      %v5432 = vsel %vm2575, %v5415, 0.0
      %v5433 = vadd.f32 %v5431, %v5432
      %v5434 = vsel %vm2575, %v5416, 0.0
      %v5435 = vadd.f32 %v5433, %v5434
      %v5436 = vsel %vm2575, %v5417, 0.0
      %v5437 = vadd.f32 %v5435, %v5436
      %v5438 = vsel %vm2575, %v5418, 0.0
      %v5439 = vadd.f32 %v5437, %v5438
      %v5440 = vsel %vm2575, %v5419, 0.0
      %v5441 = vadd.f32 %v5439, %v5440
      %v5442 = vsel %vm2575, %v5420, 0.0
      %v5443 = vadd.f32 %v5441, %v5442
      %v5444 = vsel %vm2575, %v5421, 0.0
      %v5445 = vadd.f32 %v5443, %v5444
      %v5446 = vsel %vm2575, %v5422, 0.0
      %v5447 = vadd.f32 %v5445, %v5446
      %v5448 = vsel %vm2575, %v5423, 0.0
      %v5449 = vadd.f32 %v5447, %v5448
      %v5450 = vsel %vm2575, %v5424, 0.0
      %v5451 = vadd.f32 %v5449, %v5450
      %v5452 = vsel %vm2575, %v5425, 0.0
      %v5453 = vadd.f32 %v5451, %v5452
      %v5454 = vsel %vm2575, %v5426, 0.0
      %v5455 = vadd.f32 %v5453, %v5454
      %v5456 = vsel %vm2575, %v5427, 0.0
      %v5457 = vadd.f32 %v5455, %v5456
      %v5458 = vsel %vm2575, %v5428, 0.0
      %v5459 = vadd.f32 %v5457, %v5458
      %v5460 = vrot.slane %v5459, 4
      %v5461 = vadd.f32 %v5459, %v5460
      %v5462 = vrot.slane %v5461, 2
      %v5463 = vadd.f32 %v5461, %v5462
      %v5464 = vrot.slane %v5463, 1
      %v5465 = vadd.f32 %v5463, %v5464
      %v5466 = vmul.f32 %v5412, 0.0078125
      %v5467 = vmul.f32 %v5465, 0.0078125
      %v5468 = vmul.f32 %v5466, %v5466
      %v5469 = vsub.f32 %v5467, %v5468
      %v5470 = vmax.f32 %v5469, 0.0
      %v5471 = vadd.f32 %v5470, 1e-05
      %v5472 = vrsqrt.pop %v5471
      %v5473 = vmul.f32 %v288, %v5472
      %v5475 = vlaneseq
      %v5476 = vshrl.u32 %v5475, 7
      %v5477 = vsub.s32 0, %v5476
      %v5478 = vrot.slane %v5473, %v5477
      %v5480 = vmul.f32 %v5139, %v5478
      %v5481 = vmul.f32 %v5145, %v5478
      %v5482 = vmul.f32 %v5151, %v5478
      %v5483 = vmul.f32 %v5157, %v5478
      %v5484 = vmul.f32 %v5163, %v5478
      %v5485 = vmul.f32 %v5169, %v5478
      %v5486 = vmul.f32 %v5175, %v5478
      %v5487 = vmul.f32 %v5181, %v5478
      %v5488 = vmul.f32 %v5187, %v5478
      %v5489 = vmul.f32 %v5193, %v5478
      %v5490 = vmul.f32 %v5199, %v5478
      %v5491 = vmul.f32 %v5205, %v5478
      %v5492 = vmul.f32 %v5211, %v5478
      %v5493 = vmul.f32 %v5217, %v5478
      %v5494 = vmul.f32 %v5223, %v5478
      %v5495 = vmul.f32 %v5229, %v5478
      %v5496 = vmul.f32 %v5466, %v5473
      %v5497 = vsub.f32 %v289, %v5496
      %v5499 = vlaneseq
      %v5500 = vshrl.u32 %v5499, 7
      %v5501 = vsub.s32 0, %v5500
      %v5502 = vrot.slane %v5497, %v5501
      %v5504 = vadd.f32 %v5480, %v5502
      %v5505 = vadd.f32 %v5481, %v5502
      %v5506 = vadd.f32 %v5482, %v5502
      %v5507 = vadd.f32 %v5483, %v5502
      %v5508 = vadd.f32 %v5484, %v5502
      %v5509 = vadd.f32 %v5485, %v5502
      %v5510 = vadd.f32 %v5486, %v5502
      %v5511 = vadd.f32 %v5487, %v5502
      %v5512 = vadd.f32 %v5488, %v5502
      %v5513 = vadd.f32 %v5489, %v5502
      %v5514 = vadd.f32 %v5490, %v5502
      %v5515 = vadd.f32 %v5491, %v5502
      %v5516 = vadd.f32 %v5492, %v5502
      %v5517 = vadd.f32 %v5493, %v5502
      %v5518 = vadd.f32 %v5494, %v5502
      %v5519 = vadd.f32 %v5495, %v5502
      %v5520 = vmul.f32 %v5504, 0.5
      %v5521 = vmul.f32 %v5505, 0.5
      %v5522 = vmul.f32 %v5506, 0.5
      %v5523 = vmul.f32 %v5507, 0.5
      %v5524 = vmul.f32 %v5508, 0.5
      %v5525 = vmul.f32 %v5509, 0.5
      %v5526 = vmul.f32 %v5510, 0.5
      %v5527 = vmul.f32 %v5511, 0.5
      %v5528 = vmul.f32 %v5512, 0.5
      %v5529 = vmul.f32 %v5513, 0.5
      %v5530 = vmul.f32 %v5514, 0.5
      %v5531 = vmul.f32 %v5515, 0.5
      %v5532 = vmul.f32 %v5516, 0.5
      %v5533 = vmul.f32 %v5517, 0.5
      %v5534 = vmul.f32 %v5518, 0.5
      %v5535 = vmul.f32 %v5519, 0.5
      %v5536 = vtanh.pop %v5520
      %v5537 = vtanh.pop %v5521
      %v5538 = vtanh.pop %v5522
      %v5539 = vtanh.pop %v5523
      %v5540 = vtanh.pop %v5524
      %v5541 = vtanh.pop %v5525
      %v5542 = vtanh.pop %v5526
      %v5543 = vtanh.pop %v5527
      %v5544 = vtanh.pop %v5528
      %v5545 = vtanh.pop %v5529
      %v5546 = vtanh.pop %v5530
      %v5547 = vtanh.pop %v5531
      %v5548 = vtanh.pop %v5532
      %v5549 = vtanh.pop %v5533
      %v5550 = vtanh.pop %v5534
      %v5551 = vtanh.pop %v5535
      %v5552 = vmul.f32 %v5536, 0.5
      %v5553 = vmul.f32 %v5537, 0.5
      %v5554 = vmul.f32 %v5538, 0.5
      %v5555 = vmul.f32 %v5539, 0.5
      %v5556 = vmul.f32 %v5540, 0.5
      %v5557 = vmul.f32 %v5541, 0.5
      %v5558 = vmul.f32 %v5542, 0.5
      %v5559 = vmul.f32 %v5543, 0.5
      %v5560 = vmul.f32 %v5544, 0.5
      %v5561 = vmul.f32 %v5545, 0.5
      %v5562 = vmul.f32 %v5546, 0.5
      %v5563 = vmul.f32 %v5547, 0.5
      %v5564 = vmul.f32 %v5548, 0.5
      %v5565 = vmul.f32 %v5549, 0.5
      %v5566 = vmul.f32 %v5550, 0.5
      %v5567 = vmul.f32 %v5551, 0.5
      %v5568 = vadd.f32 %v5552, 0.5
      %v5569 = vadd.f32 %v5553, 0.5
      %v5570 = vadd.f32 %v5554, 0.5
      %v5571 = vadd.f32 %v5555, 0.5
      %v5572 = vadd.f32 %v5556, 0.5
      %v5573 = vadd.f32 %v5557, 0.5
      %v5574 = vadd.f32 %v5558, 0.5
      %v5575 = vadd.f32 %v5559, 0.5
      %v5576 = vadd.f32 %v5560, 0.5
      %v5577 = vadd.f32 %v5561, 0.5
      %v5578 = vadd.f32 %v5562, 0.5
      %v5579 = vadd.f32 %v5563, 0.5
      %v5580 = vadd.f32 %v5564, 0.5
      %v5581 = vadd.f32 %v5565, 0.5
      %v5582 = vadd.f32 %v5566, 0.5
      %v5583 = vadd.f32 %v5567, 0.5
      %v5584 = vmul.f32 %v5360, %v5568
      %v5585 = vmul.f32 %v5361, %v5569
      %v5586 = vmul.f32 %v5362, %v5570
      %v5587 = vmul.f32 %v5363, %v5571
      %v5588 = vmul.f32 %v5364, %v5572
      %v5589 = vmul.f32 %v5365, %v5573
      %v5590 = vmul.f32 %v5366, %v5574
      %v5591 = vmul.f32 %v5367, %v5575
      %v5592 = vmul.f32 %v5368, %v5576
      %v5593 = vmul.f32 %v5369, %v5577
      %v5594 = vmul.f32 %v5370, %v5578
      %v5595 = vmul.f32 %v5371, %v5579
      %v5596 = vmul.f32 %v5372, %v5580
      %v5597 = vmul.f32 %v5373, %v5581
      %v5598 = vmul.f32 %v5374, %v5582
      %v5599 = vmul.f32 %v5375, %v5583
      %5600 = vst.msk [vmem:[%s280 + $0x80] sm:$0xff] %vm2575, %v5584
      %5601 = vst.msk [vmem:[%s280 + $0x88] sm:$0xff] %vm2575, %v5585
      %5602 = vst.msk [vmem:[%s280 + $0x90] sm:$0xff] %vm2575, %v5586
      %5603 = vst.msk [vmem:[%s280 + $0x98] sm:$0xff] %vm2575, %v5587
      %5604 = vst.msk [vmem:[%s280 + $0xa0] sm:$0xff] %vm2575, %v5588
      %5605 = vst.msk [vmem:[%s280 + $0xa8] sm:$0xff] %vm2575, %v5589
      %5606 = vst.msk [vmem:[%s280 + $0xb0] sm:$0xff] %vm2575, %v5590
      %5607 = vst.msk [vmem:[%s280 + $0xb8] sm:$0xff] %vm2575, %v5591
      %5608 = vst.msk [vmem:[%s280 + $0xc0] sm:$0xff] %vm2575, %v5592
      %5609 = vst.msk [vmem:[%s280 + $0xc8] sm:$0xff] %vm2575, %v5593
      %5610 = vst.msk [vmem:[%s280 + $0xd0] sm:$0xff] %vm2575, %v5594
      %5611 = vst.msk [vmem:[%s280 + $0xd8] sm:$0xff] %vm2575, %v5595
      %5612 = vst.msk [vmem:[%s280 + $0xe0] sm:$0xff] %vm2575, %v5596
      %5613 = vst.msk [vmem:[%s280 + $0xe8] sm:$0xff] %vm2575, %v5597
      %5614 = vst.msk [vmem:[%s280 + $0xf0] sm:$0xff] %vm2575, %v5598
      %5615 = vst.msk [vmem:[%s280 + $0xf8] sm:$0xff] %vm2575, %v5599
      %s5616 = smul.u32 32, %s18
      %p5617 = scmp.lt.s32.totalorder %s5616, 63
      %s5618 = scalar_select %p5617, %s5616, 63
      %s5619 = smul.addr %s5618, 8
      %s5620 = scalar_lea.vmem %s7, %s5619
      // Predicated region
      $region49: #{tpu_custom_call.1} parent=47 // pred_check
        %p5621 = pneg %p188
      $region50: #{tpu_custom_call.1} parent=47 // pred_check_branch
        %5623 = sbr.rel (%p5621) target = $region52
      $region51: #{tpu_custom_call.1} parent=47 // pred_region
        %s5624 = smul.u32 32, %s18
      $region52: #{tpu_custom_call.1} parent=47 // pred_fallthru
        _
    $region48: #{tpu_custom_call.1} parent=5 // pred_fallthru
      _
    %p5625 = scmp.le.s32.totalorder 2, %s13
    // Predicated region
    $region53: #{tpu_custom_call.1} parent=5 // pred_check
      %p5626 = pneg %p5625
    $region54: #{tpu_custom_call.1} parent=5 // pred_check_branch
      %5628 = sbr.rel (%p5626) target = $region56
    $region55: #{tpu_custom_call.1} parent=5 // pred_region
      %s5629 = ssub.s32 %s13, 2
      // Predicated region
      $region57: #{tpu_custom_call.1} parent=55 // pred_check
        %p5630 = pneg %p194
      $region58: #{tpu_custom_call.1} parent=55 // pred_check_branch
        %5632 = sbr.rel (%p5630) target = $region60
      $region59: #{tpu_custom_call.1} parent=55 // pred_region
        %s5633 = smul.u32 32, %s19
        %p5634 = scmp.lt.s32.totalorder %s5633, 63
        %s5635 = scalar_select %p5634, %s5633, 63
        %s5636 = smul.addr %s5635, 8
        %s5637 = scalar_lea.vmem %s7, %s5636
      $region60: #{tpu_custom_call.1} parent=55 // pred_fallthru
        _
    $region56: #{tpu_custom_call.1} parent=5 // pred_fallthru
      _
  $region6: #{tpu_custom_call.1} parent=0 // loop_footer
    %s17 = sadd.s32 1, %s13
  $region7: #{tpu_custom_call.1} parent=0 // loop_footer_branch
    %12 = sbr.rel target = $region3
  $region8: #{tpu_custom_call.1} parent=0 // loop_exit
    _

</llo_original>
